<compile_context>
chip_gen: v7x
topology: tpu7x:2x2x1
jax: 0.10.0
libtpu: 0.0.40
codegen_flags: <defaults>
</compile_context>

<pallas_src>
import math
import functools

import jax
import jax.numpy as jnp
from jax.experimental import pallas as pl
from jax.experimental.pallas import tpu as pltpu


def _rhn_chunk_kernel(x_ref, w_inp_ref, b_inp_ref, w_cell_ref, b_cell_ref,
                      w_fc1_ref, b_fc1_ref, y_all_ref, y_fc_ref, s_ref,
                      *, depth, hidden, tc):
    H = hidden
    c = pl.program_id(1)                       # chunk index (sequential axis)
    n_chunks = pl.num_programs(1)
    Bs = s_ref.shape[0]
    D = x_ref.shape[2]

    @pl.when(c == 0)
    def _():
        s_ref[...] = jnp.zeros_like(s_ref)          # recurrent state := 0
        y_fc_ref[...] = jnp.zeros_like(y_fc_ref)    # insurance for resident out

    # ---- chunk-level input projection: one (Tc*Bs, D) @ (D, 2H) MXU op ------
    x_chunk = x_ref[...]                                     # (Tc, Bs, D) bf16
    xw = jnp.dot(x_chunk.reshape(tc * Bs, D), w_inp_ref[...],
                 preferred_element_type=jnp.float32)
    xw = xw + b_inp_ref[...]                                 # (Tc*Bs, 2H) f32

    # Hoist weight / bias loads out of the unrolled time loop.
    w_cells = [w_cell_ref[l] for l in range(depth)]           # (H, 2H) bf16
    b_cells = [b_cell_ref[l][None, :] for l in range(depth)]  # (1, 2H) f32
    # cell[0] bias only contributes for global t > 0 (mirrors `s is not 0`;
    # s_ref is zero at t == 0 so the matmul term already vanishes there).
    b_cell0_first = jnp.where(c > 0, b_cells[0], jnp.zeros_like(b_cells[0]))

    def gate(ws, s_prev):
        hh = jnp.tanh(ws[:, :H])
        tt = jax.nn.sigmoid(ws[:, H:])
        # TODO(synk): F.dropout(tt, p=gateDrop) skipped (inference / tdrop=False)
        return hh * tt + s_prev * (1.0 - tt)

    s = s_ref[...]                                            # (Bs, H) f32

    for j in range(tc):          # unrolled: tc is a small compile-time constant
        # layer 0: inp(x_t) (precomputed for the chunk) + cell[0](s)
        ws = (xw[j * Bs:(j + 1) * Bs, :]
              + jnp.dot(s.astype(jnp.bfloat16), w_cells[0],
                        preferred_element_type=jnp.float32))
        ws = ws + (b_cell0_first if j == 0 else b_cells[0])
        s = gate(ws, s)
        y_all_ref[:, j, 0:H] = s                 # 128-lane-aligned slice store

        for l in range(1, depth):
            ws = (jnp.dot(s.astype(jnp.bfloat16), w_cells[l],
                          preferred_element_type=jnp.float32) + b_cells[l])
            s = gate(ws, s)
            y_all_ref[:, j, l * H:(l + 1) * H] = s

    s_ref[...] = s

    @pl.when(c == n_chunks - 1)
    def _():
        # attention head: y = fc1(dropout(o)); dropout = identity at inference.
        y_fc_ref[...] = (jnp.dot(s.astype(jnp.bfloat16), w_fc1_ref[...],
                                 preferred_element_type=jnp.float32)
                         + b_fc1_ref[...])


def recurrent_highway_text(tokens, params, *, depth, time_chunk=8,
                           batch_shards=1):
    """tokens: (T, B) int32 ids. Returns (y_all (B,T,depth*H), y (B,H))."""
    embed, w_inp, b_inp, w_cell, b_cell, w_fc1, b_fc1 = params
    T, B = tokens.shape
    D = embed.shape[1]
    H = w_fc1.shape[0]

    tc = min(time_chunk, T)
    assert T % tc == 0, "sequence length must be divisible by the time chunk"
    assert B % batch_shards == 0
    Bs = B // batch_shards
    n_chunks = T // tc

    # Embedding gather is plain-JAX glue; cast MXU operands to bf16 (the kernel
    # accumulates in f32 and keeps all state/gating math in f32).
    x = jnp.take(embed, tokens, axis=0).astype(jnp.bfloat16)   # (T, B, D)
    w_inp_b = w_inp.astype(jnp.bfloat16)
    w_cell_b = w_cell.astype(jnp.bfloat16)
    w_fc1_b = w_fc1.astype(jnp.bfloat16)

    kernel = functools.partial(_rhn_chunk_kernel, depth=depth, hidden=H, tc=tc)
    y_all, y_fc = pl.pallas_call(
        kernel,
        out_shape=(jax.ShapeDtypeStruct((B, T, depth * H), jnp.float32),
                   jax.ShapeDtypeStruct((B, H), jnp.float32)),
        grid_spec=pltpu.PrefetchScalarGridSpec(
            num_scalar_prefetch=0,
            grid=(batch_shards, n_chunks),
            in_specs=[
                pl.BlockSpec((tc, Bs, D), lambda p, c: (c, p, 0)),        # x chunk
                pl.BlockSpec((D, 2 * H), lambda p, c: (0, 0)),            # inp W
                pl.BlockSpec((1, 2 * H), lambda p, c: (0, 0)),            # inp b
                pl.BlockSpec((depth, H, 2 * H), lambda p, c: (0, 0, 0)),  # cell W
                pl.BlockSpec((depth, 2 * H), lambda p, c: (0, 0)),        # cell b
                pl.BlockSpec((H, H), lambda p, c: (0, 0)),                # fc1 W
                pl.BlockSpec((1, H), lambda p, c: (0, 0)),                # fc1 b
            ],
            out_specs=[
                # final (B, T, depth*H) layout written directly (lane-dense K)
                pl.BlockSpec((Bs, tc, depth * H), lambda p, c: (p, c, 0)),
                pl.BlockSpec((Bs, H), lambda p, c: (p, 0)),
            ],
            scratch_shapes=[pltpu.VMEM((Bs, H), jnp.float32)],
        ),
        compiler_params=pltpu.CompilerParams(
            # batch-shard axis is parallel (v7x megacore); recurrence is sequential
            dimension_semantics=("parallel", "arbitrary")),
    )(x, w_inp_b, b_inp, w_cell_b, b_cell, w_fc1_b, b_fc1)

    return y_all, y_fc


def init_params(key, vocab_size, hidden_size, depth):
    """Deterministic PyTorch-style init (weights stored pre-transposed, f32)."""
    D = H = hidden_size
    ks = jax.random.split(key, 8)
    u = lambda k, shape, stdv: jax.random.uniform(
        k, shape, jnp.float32, -stdv, stdv)

    embed = jax.random.normal(ks[0], (vocab_size, D), jnp.float32)   # nn.Embedding

    stdv_inp = 1.0 / math.sqrt(D)
    w_inp = u(ks[1], (D, 2 * H), stdv_inp)           # (in, out)  == W.T
    b_inp = u(ks[2], (1, 2 * H), stdv_inp)

    stdv_cell = 1.0 / math.sqrt(H)
    w_cell = u(ks[3], (depth, H, 2 * H), stdv_cell)
    b_cell = u(ks[4], (depth, 2 * H), stdv_cell)

    stdv_fc = 1.0 / math.sqrt(H)
    w_fc1 = u(ks[5], (H, H), stdv_fc)
    b_fc1 = u(ks[6], (1, H), stdv_fc)

    return embed, w_inp, b_inp, w_cell, b_cell, w_fc1, b_fc1


def reference_forward(tokens, params, *, depth):
    """Pure-JAX f32 mirror of RecurrentHighwayText.forward (tdrop=False)."""
    embed, w_inp, b_inp, w_cell, b_cell, w_fc1, b_fc1 = params
    H = w_fc1.shape[0]
    x = jnp.take(embed, tokens, axis=0)               # (T, B, D)
    T, B, _ = x.shape
    s = None                                          # emulates python int 0
    xs = []
    o = None
    for t in range(T):
        xt = x[t]
        states = []
        for l in range(depth):
            if s is None:
                ws = jnp.zeros((B, 2 * H), jnp.float32)
            else:
                ws = s @ w_cell[l] + b_cell[l]
            if l == 0:
                ws = ws + xt @ w_inp + b_inp
            hh = jnp.tanh(ws[:, :H])
            tt = jax.nn.sigmoid(ws[:, H:])
            cc = 1.0 - tt
            s_prev = jnp.zeros((B, H), jnp.float32) if s is None else s
            s = hh * tt + s_prev * cc
            states.append(s)
        o = s
        xs.append(jnp.concatenate(states, axis=1)[:, None, :])
    y_all = jnp.concatenate(xs, axis=1)               # (B, T, depth*H)
    y = o @ w_fc1 + b_fc1
    return y_all, y


if __name__ == "__main__":
    vocab_size = 50
    hidden_size = 128
    nlayers = 2           # depth
    T, B = 16, 8
    TIME_CHUNK = 8

    key = jax.random.PRNGKey(0)
    k_tok, k_par = jax.random.split(key)
    tokens = jax.random.randint(k_tok, (T, B), 0, vocab_size, dtype=jnp.int32)
    params = init_params(k_par, vocab_size, hidden_size, nlayers)

    fwd = jax.jit(functools.partial(recurrent_highway_text, depth=nlayers,
                                    time_chunk=TIME_CHUNK, batch_shards=1))
    y_all, y = fwd(tokens, params)
    jax.block_until_ready((y_all, y))

    y_all_ref, y_ref = reference_forward(tokens, params, depth=nlayers)
    assert y_all.shape == (B, T, nlayers * hidden_size)
    assert y.shape == (B, hidden_size)
    # bf16 MXU operands (f32 accumulation) -> looser tolerance vs f32 reference.
    assert jnp.allclose(y_all, y_all_ref, atol=5e-2, rtol=5e-2), \
        float(jnp.max(jnp.abs(y_all - y_all_ref)))
    assert jnp.allclose(y, y_ref, atol=5e-2, rtol=5e-2), \
        float(jnp.max(jnp.abs(y - y_ref)))

    print("KERNEL_OK")
</pallas_src>

<mosaic_0001>
module attributes {stable_mosaic.version = 11 : i64} {
  func.func @_rhn_chunk_kernel(%arg0: i32, %arg1: i32, %arg2: memref<8x8x128xbf16, #tpu.memory_space<vmem>>, %arg3: memref<128x256xbf16, #tpu.memory_space<vmem>>, %arg4: memref<1x256xf32, #tpu.memory_space<vmem>>, %arg5: memref<2x128x256xbf16, #tpu.memory_space<vmem>>, %arg6: memref<2x256xf32, #tpu.memory_space<vmem>>, %arg7: memref<128x128xbf16, #tpu.memory_space<vmem>>, %arg8: memref<1x128xf32, #tpu.memory_space<vmem>>, %arg9: memref<8x8x256xf32, #tpu.memory_space<vmem>>, %arg10: memref<8x128xf32, #tpu.memory_space<vmem>>, %arg11: memref<8x128xf32, #tpu.memory_space<vmem>>) attributes {dimension_semantics = [#tpu.dimension_semantics<parallel>, #tpu.dimension_semantics<arbitrary>], iteration_bounds = array<i64: 1, 2>, scalar_prefetch = 0 : i64, scratch_operands = 1 : i64, tpu.core_type = #tpu.core_type<tc>, window_params = [{transform_indices = @transform_0, window_bounds = array<i64: 8, 8, 128>}, {pipeline_mode = #tpu.pipeline_mode<synchronous>, transform_indices = @transform_1, window_bounds = array<i64: 128, 256>}, {pipeline_mode = #tpu.pipeline_mode<synchronous>, transform_indices = @transform_2, window_bounds = array<i64: 1, 256>}, {pipeline_mode = #tpu.pipeline_mode<synchronous>, transform_indices = @transform_3, window_bounds = array<i64: 2, 128, 256>}, {pipeline_mode = #tpu.pipeline_mode<synchronous>, transform_indices = @transform_4, window_bounds = array<i64: 2, 256>}, {pipeline_mode = #tpu.pipeline_mode<synchronous>, transform_indices = @transform_5, window_bounds = array<i64: 128, 128>}, {pipeline_mode = #tpu.pipeline_mode<synchronous>, transform_indices = @transform_6, window_bounds = array<i64: 1, 128>}, {transform_indices = @transform_7, window_bounds = array<i64: 8, 8, 256>}, {transform_indices = @transform_8, window_bounds = array<i64: 8, 128>}]} {
    %c0_i32 = arith.constant 0 : i32
    %0 = arith.cmpi eq, %arg1, %c0_i32 : i32
    %1 = arith.extui %0 : i1 to i32
    %c0_i32_0 = arith.constant 0 : i32
    %2 = arith.cmpi ne, %1, %c0_i32_0 : i32
    scf.if %2 {
      %cst_112 = arith.constant 0.000000e+00 : f32
      %364 = vector.broadcast %cst_112 : f32 to vector<8x128xf32>
      %c0_113 = arith.constant 0 : index
      %c0_114 = arith.constant 0 : index
      %365 = vector.load %arg11[%c0_113, %c0_114] : memref<8x128xf32, #tpu.memory_space<vmem>>, vector<8x128xf32>
      tpu.vector_store %arg11[%c0_113, %c0_114], %364 {strides = array<i32>} : memref<8x128xf32, #tpu.memory_space<vmem>>, vector<8x128xf32>,
      %cst_115 = arith.constant 0.000000e+00 : f32
      %366 = vector.broadcast %cst_115 : f32 to vector<8x128xf32>
      %c0_116 = arith.constant 0 : index
      %c0_117 = arith.constant 0 : index
      %367 = vector.load %arg10[%c0_116, %c0_117] : memref<8x128xf32, #tpu.memory_space<vmem>>, vector<8x128xf32>
      tpu.vector_store %arg10[%c0_116, %c0_117], %366 {strides = array<i32>} : memref<8x128xf32, #tpu.memory_space<vmem>>, vector<8x128xf32>,
    } else {
    }
    %c0 = arith.constant 0 : index
    %c0_1 = arith.constant 0 : index
    %c0_2 = arith.constant 0 : index
    %3 = vector.load %arg2[%c0, %c0_1, %c0_2] : memref<8x8x128xbf16, #tpu.memory_space<vmem>>, vector<8x8x128xbf16>
    %4 = vector.shape_cast %3 : vector<8x8x128xbf16> to vector<64x128xbf16>
    %c0_3 = arith.constant 0 : index
    %c0_4 = arith.constant 0 : index
    %5 = vector.load %arg3[%c0_3, %c0_4] : memref<128x256xbf16, #tpu.memory_space<vmem>>, vector<128x256xbf16>
    %cst = arith.constant dense<0.000000e+00> : vector<64x256xf32>
    %6 = tpu.matmul %4, %5, %cst {dimension_numbers = #tpu.dot_dimension_numbers<[1], [0], [0], [1], [0, 0, 1, 1], [], []>} : vector<64x128xbf16>, vector<128x256xbf16>, vector<64x256xf32> -> vector<64x256xf32>
    %c0_5 = arith.constant 0 : index
    %c0_6 = arith.constant 0 : index
    %7 = vector.load %arg4[%c0_5, %c0_6] : memref<1x256xf32, #tpu.memory_space<vmem>>, vector<1x256xf32>
    %8 = vector.broadcast %7 : vector<1x256xf32> to vector<64x256xf32>
    %9 = arith.addf %6, %8 : vector<64x256xf32>
    %c0_7 = arith.constant 0 : index
    %c0_8 = arith.constant 0 : index
    %c0_9 = arith.constant 0 : index
    %10 = vector.load %arg5[%c0_7, %c0_8, %c0_9] : memref<2x128x256xbf16, #tpu.memory_space<vmem>>, vector<1x128x256xbf16>
    %11 = vector.shape_cast %10 : vector<1x128x256xbf16> to vector<128x256xbf16>
    %c1 = arith.constant 1 : index
    %c0_10 = arith.constant 0 : index
    %c0_11 = arith.constant 0 : index
    %12 = vector.load %arg5[%c1, %c0_10, %c0_11] : memref<2x128x256xbf16, #tpu.memory_space<vmem>>, vector<1x128x256xbf16>
    %13 = vector.shape_cast %12 : vector<1x128x256xbf16> to vector<128x256xbf16>
    %c0_12 = arith.constant 0 : index
    %c0_13 = arith.constant 0 : index
    %14 = vector.load %arg6[%c0_12, %c0_13] : memref<2x256xf32, #tpu.memory_space<vmem>>, vector<1x256xf32>
    %15 = vector.shape_cast %14 : vector<1x256xf32> to vector<256xf32>
    %16 = vector.shape_cast %15 : vector<256xf32> to vector<1x256xf32>
    %c1_14 = arith.constant 1 : index
    %c0_15 = arith.constant 0 : index
    %17 = vector.load %arg6[%c1_14, %c0_15] : memref<2x256xf32, #tpu.memory_space<vmem>>, vector<1x256xf32>
    %18 = vector.shape_cast %17 : vector<1x256xf32> to vector<256xf32>
    %19 = vector.shape_cast %18 : vector<256xf32> to vector<1x256xf32>
    %c0_i32_16 = arith.constant 0 : i32
    %20 = arith.cmpi sgt, %arg1, %c0_i32_16 : i32
    %cst_17 = arith.constant 0.000000e+00 : f32
    %21 = vector.broadcast %cst_17 : f32 to vector<1x256xf32>
    %22 = arith.select %20, %16, %21 : vector<1x256xf32>
    %c0_18 = arith.constant 0 : index
    %c0_19 = arith.constant 0 : index
    %23 = vector.load %arg11[%c0_18, %c0_19] : memref<8x128xf32, #tpu.memory_space<vmem>>, vector<8x128xf32>
    %24 = vector.extract_strided_slice %9 {offsets = [0, 0], sizes = [8, 256], strides = [1, 1]} : vector<64x256xf32> to vector<8x256xf32>
    %25 = arith.truncf %23 : vector<8x128xf32> to vector<8x128xbf16>
    %cst_20 = arith.constant dense<0.000000e+00> : vector<8x256xf32>
    %26 = tpu.matmul %25, %11, %cst_20 {dimension_numbers = #tpu.dot_dimension_numbers<[1], [0], [0], [1], [0, 0, 1, 1], [], []>} : vector<8x128xbf16>, vector<128x256xbf16>, vector<8x256xf32> -> vector<8x256xf32>
    %27 = arith.addf %24, %26 : vector<8x256xf32>
    %28 = vector.broadcast %22 : vector<1x256xf32> to vector<8x256xf32>
    %29 = arith.addf %27, %28 : vector<8x256xf32>
    %30 = vector.extract_strided_slice %29 {offsets = [0, 0], sizes = [8, 128], strides = [1, 1]} : vector<8x256xf32> to vector<8x128xf32>
    %31 = math.tanh %30 : vector<8x128xf32>
    %32 = vector.extract_strided_slice %29 {offsets = [0, 128], sizes = [8, 128], strides = [1, 1]} : vector<8x256xf32> to vector<8x128xf32>
    %33 = arith.negf %32 : vector<8x128xf32>
    %34 = math.exp %33 : vector<8x128xf32>
    %cst_21 = arith.constant 1.000000e+00 : f32
    %35 = vector.broadcast %cst_21 : f32 to vector<8x128xf32>
    %36 = arith.addf %35, %34 : vector<8x128xf32>
    %37 = arith.divf %35, %36 : vector<8x128xf32>
    %38 = arith.mulf %31, %37 : vector<8x128xf32>
    %cst_22 = arith.constant 1.000000e+00 : f32
    %39 = vector.broadcast %cst_22 : f32 to vector<8x128xf32>
    %40 = arith.subf %39, %37 : vector<8x128xf32>
    %41 = arith.mulf %23, %40 : vector<8x128xf32>
    %42 = arith.addf %38, %41 : vector<8x128xf32>
    %c0_23 = arith.constant 0 : index
    %c0_24 = arith.constant 0 : index
    %c0_25 = arith.constant 0 : index
    %43 = vector.load %arg9[%c0_23, %c0_24, %c0_25] : memref<8x8x256xf32, #tpu.memory_space<vmem>>, vector<8x1x128xf32>
    %44 = vector.shape_cast %43 : vector<8x1x128xf32> to vector<8x128xf32>
    %45 = vector.shape_cast %42 : vector<8x128xf32> to vector<8x1x128xf32>
    tpu.vector_store %arg9[%c0_23, %c0_24, %c0_25], %45 {strides = array<i32>} : memref<8x8x256xf32, #tpu.memory_space<vmem>>, vector<8x1x128xf32>,
    %46 = arith.truncf %42 : vector<8x128xf32> to vector<8x128xbf16>
    %cst_26 = arith.constant dense<0.000000e+00> : vector<8x256xf32>
    %47 = tpu.matmul %46, %13, %cst_26 {dimension_numbers = #tpu.dot_dimension_numbers<[1], [0], [0], [1], [0, 0, 1, 1], [], []>} : vector<8x128xbf16>, vector<128x256xbf16>, vector<8x256xf32> -> vector<8x256xf32>
    %48 = vector.broadcast %19 : vector<1x256xf32> to vector<8x256xf32>
    %49 = arith.addf %47, %48 : vector<8x256xf32>
    %50 = vector.extract_strided_slice %49 {offsets = [0, 0], sizes = [8, 128], strides = [1, 1]} : vector<8x256xf32> to vector<8x128xf32>
    %51 = math.tanh %50 : vector<8x128xf32>
    %52 = vector.extract_strided_slice %49 {offsets = [0, 128], sizes = [8, 128], strides = [1, 1]} : vector<8x256xf32> to vector<8x128xf32>
    %53 = arith.negf %52 : vector<8x128xf32>
    %54 = math.exp %53 : vector<8x128xf32>
    %cst_27 = arith.constant 1.000000e+00 : f32
    %55 = vector.broadcast %cst_27 : f32 to vector<8x128xf32>
    %56 = arith.addf %55, %54 : vector<8x128xf32>
    %57 = arith.divf %55, %56 : vector<8x128xf32>
    %58 = arith.mulf %51, %57 : vector<8x128xf32>
    %cst_28 = arith.constant 1.000000e+00 : f32
    %59 = vector.broadcast %cst_28 : f32 to vector<8x128xf32>
    %60 = arith.subf %59, %57 : vector<8x128xf32>
    %61 = arith.mulf %42, %60 : vector<8x128xf32>
    %62 = arith.addf %58, %61 : vector<8x128xf32>
    %c0_29 = arith.constant 0 : index
    %c0_30 = arith.constant 0 : index
    %c128 = arith.constant 128 : index
    %63 = vector.load %arg9[%c0_29, %c0_30, %c128] : memref<8x8x256xf32, #tpu.memory_space<vmem>>, vector<8x1x128xf32>
    %64 = vector.shape_cast %63 : vector<8x1x128xf32> to vector<8x128xf32>
    %65 = vector.shape_cast %62 : vector<8x128xf32> to vector<8x1x128xf32>
    tpu.vector_store %arg9[%c0_29, %c0_30, %c128], %65 {strides = array<i32>} : memref<8x8x256xf32, #tpu.memory_space<vmem>>, vector<8x1x128xf32>,
    %66 = vector.extract_strided_slice %9 {offsets = [8, 0], sizes = [8, 256], strides = [1, 1]} : vector<64x256xf32> to vector<8x256xf32>
    %67 = arith.truncf %62 : vector<8x128xf32> to vector<8x128xbf16>
    %cst_31 = arith.constant dense<0.000000e+00> : vector<8x256xf32>
    %68 = tpu.matmul %67, %11, %cst_31 {dimension_numbers = #tpu.dot_dimension_numbers<[1], [0], [0], [1], [0, 0, 1, 1], [], []>} : vector<8x128xbf16>, vector<128x256xbf16>, vector<8x256xf32> -> vector<8x256xf32>
    %69 = arith.addf %66, %68 : vector<8x256xf32>
    %70 = vector.broadcast %16 : vector<1x256xf32> to vector<8x256xf32>
    %71 = arith.addf %69, %70 : vector<8x256xf32>
    %72 = vector.extract_strided_slice %71 {offsets = [0, 0], sizes = [8, 128], strides = [1, 1]} : vector<8x256xf32> to vector<8x128xf32>
    %73 = math.tanh %72 : vector<8x128xf32>
    %74 = vector.extract_strided_slice %71 {offsets = [0, 128], sizes = [8, 128], strides = [1, 1]} : vector<8x256xf32> to vector<8x128xf32>
    %75 = arith.negf %74 : vector<8x128xf32>
    %76 = math.exp %75 : vector<8x128xf32>
    %cst_32 = arith.constant 1.000000e+00 : f32
    %77 = vector.broadcast %cst_32 : f32 to vector<8x128xf32>
    %78 = arith.addf %77, %76 : vector<8x128xf32>
    %79 = arith.divf %77, %78 : vector<8x128xf32>
    %80 = arith.mulf %73, %79 : vector<8x128xf32>
    %cst_33 = arith.constant 1.000000e+00 : f32
    %81 = vector.broadcast %cst_33 : f32 to vector<8x128xf32>
    %82 = arith.subf %81, %79 : vector<8x128xf32>
    %83 = arith.mulf %62, %82 : vector<8x128xf32>
    %84 = arith.addf %80, %83 : vector<8x128xf32>
    %c0_34 = arith.constant 0 : index
    %c1_35 = arith.constant 1 : index
    %c0_36 = arith.constant 0 : index
    %85 = vector.load %arg9[%c0_34, %c1_35, %c0_36] : memref<8x8x256xf32, #tpu.memory_space<vmem>>, vector<8x1x128xf32>
    %86 = vector.shape_cast %85 : vector<8x1x128xf32> to vector<8x128xf32>
    %87 = vector.shape_cast %84 : vector<8x128xf32> to vector<8x1x128xf32>
    tpu.vector_store %arg9[%c0_34, %c1_35, %c0_36], %87 {strides = array<i32>} : memref<8x8x256xf32, #tpu.memory_space<vmem>>, vector<8x1x128xf32>,
    %88 = arith.truncf %84 : vector<8x128xf32> to vector<8x128xbf16>
    %cst_37 = arith.constant dense<0.000000e+00> : vector<8x256xf32>
    %89 = tpu.matmul %88, %13, %cst_37 {dimension_numbers = #tpu.dot_dimension_numbers<[1], [0], [0], [1], [0, 0, 1, 1], [], []>} : vector<8x128xbf16>, vector<128x256xbf16>, vector<8x256xf32> -> vector<8x256xf32>
    %90 = vector.broadcast %19 : vector<1x256xf32> to vector<8x256xf32>
    %91 = arith.addf %89, %90 : vector<8x256xf32>
    %92 = vector.extract_strided_slice %91 {offsets = [0, 0], sizes = [8, 128], strides = [1, 1]} : vector<8x256xf32> to vector<8x128xf32>
    %93 = math.tanh %92 : vector<8x128xf32>
    %94 = vector.extract_strided_slice %91 {offsets = [0, 128], sizes = [8, 128], strides = [1, 1]} : vector<8x256xf32> to vector<8x128xf32>
    %95 = arith.negf %94 : vector<8x128xf32>
    %96 = math.exp %95 : vector<8x128xf32>
    %cst_38 = arith.constant 1.000000e+00 : f32
    %97 = vector.broadcast %cst_38 : f32 to vector<8x128xf32>
    %98 = arith.addf %97, %96 : vector<8x128xf32>
    %99 = arith.divf %97, %98 : vector<8x128xf32>
    %100 = arith.mulf %93, %99 : vector<8x128xf32>
    %cst_39 = arith.constant 1.000000e+00 : f32
    %101 = vector.broadcast %cst_39 : f32 to vector<8x128xf32>
    %102 = arith.subf %101, %99 : vector<8x128xf32>
    %103 = arith.mulf %84, %102 : vector<8x128xf32>
    %104 = arith.addf %100, %103 : vector<8x128xf32>
    %c0_40 = arith.constant 0 : index
    %c1_41 = arith.constant 1 : index
    %c128_42 = arith.constant 128 : index
    %105 = vector.load %arg9[%c0_40, %c1_41, %c128_42] : memref<8x8x256xf32, #tpu.memory_space<vmem>>, vector<8x1x128xf32>
    %106 = vector.shape_cast %105 : vector<8x1x128xf32> to vector<8x128xf32>
    %107 = vector.shape_cast %104 : vector<8x128xf32> to vector<8x1x128xf32>
    tpu.vector_store %arg9[%c0_40, %c1_41, %c128_42], %107 {strides = array<i32>} : memref<8x8x256xf32, #tpu.memory_space<vmem>>, vector<8x1x128xf32>,
    %108 = vector.extract_strided_slice %9 {offsets = [16, 0], sizes = [8, 256], strides = [1, 1]} : vector<64x256xf32> to vector<8x256xf32>
    %109 = arith.truncf %104 : vector<8x128xf32> to vector<8x128xbf16>
    %cst_43 = arith.constant dense<0.000000e+00> : vector<8x256xf32>
    %110 = tpu.matmul %109, %11, %cst_43 {dimension_numbers = #tpu.dot_dimension_numbers<[1], [0], [0], [1], [0, 0, 1, 1], [], []>} : vector<8x128xbf16>, vector<128x256xbf16>, vector<8x256xf32> -> vector<8x256xf32>
    %111 = arith.addf %108, %110 : vector<8x256xf32>
    %112 = vector.broadcast %16 : vector<1x256xf32> to vector<8x256xf32>
    %113 = arith.addf %111, %112 : vector<8x256xf32>
    %114 = vector.extract_strided_slice %113 {offsets = [0, 0], sizes = [8, 128], strides = [1, 1]} : vector<8x256xf32> to vector<8x128xf32>
    %115 = math.tanh %114 : vector<8x128xf32>
    %116 = vector.extract_strided_slice %113 {offsets = [0, 128], sizes = [8, 128], strides = [1, 1]} : vector<8x256xf32> to vector<8x128xf32>
    %117 = arith.negf %116 : vector<8x128xf32>
    %118 = math.exp %117 : vector<8x128xf32>
    %cst_44 = arith.constant 1.000000e+00 : f32
    %119 = vector.broadcast %cst_44 : f32 to vector<8x128xf32>
    %120 = arith.addf %119, %118 : vector<8x128xf32>
    %121 = arith.divf %119, %120 : vector<8x128xf32>
    %122 = arith.mulf %115, %121 : vector<8x128xf32>
    %cst_45 = arith.constant 1.000000e+00 : f32
    %123 = vector.broadcast %cst_45 : f32 to vector<8x128xf32>
    %124 = arith.subf %123, %121 : vector<8x128xf32>
    %125 = arith.mulf %104, %124 : vector<8x128xf32>
    %126 = arith.addf %122, %125 : vector<8x128xf32>
    %c0_46 = arith.constant 0 : index
    %c2 = arith.constant 2 : index
    %c0_47 = arith.constant 0 : index
    %127 = vector.load %arg9[%c0_46, %c2, %c0_47] : memref<8x8x256xf32, #tpu.memory_space<vmem>>, vector<8x1x128xf32>
    %128 = vector.shape_cast %127 : vector<8x1x128xf32> to vector<8x128xf32>
    %129 = vector.shape_cast %126 : vector<8x128xf32> to vector<8x1x128xf32>
    tpu.vector_store %arg9[%c0_46, %c2, %c0_47], %129 {strides = array<i32>} : memref<8x8x256xf32, #tpu.memory_space<vmem>>, vector<8x1x128xf32>,
    %130 = arith.truncf %126 : vector<8x128xf32> to vector<8x128xbf16>
    %cst_48 = arith.constant dense<0.000000e+00> : vector<8x256xf32>
    %131 = tpu.matmul %130, %13, %cst_48 {dimension_numbers = #tpu.dot_dimension_numbers<[1], [0], [0], [1], [0, 0, 1, 1], [], []>} : vector<8x128xbf16>, vector<128x256xbf16>, vector<8x256xf32> -> vector<8x256xf32>
    %132 = vector.broadcast %19 : vector<1x256xf32> to vector<8x256xf32>
    %133 = arith.addf %131, %132 : vector<8x256xf32>
    %134 = vector.extract_strided_slice %133 {offsets = [0, 0], sizes = [8, 128], strides = [1, 1]} : vector<8x256xf32> to vector<8x128xf32>
    %135 = math.tanh %134 : vector<8x128xf32>
    %136 = vector.extract_strided_slice %133 {offsets = [0, 128], sizes = [8, 128], strides = [1, 1]} : vector<8x256xf32> to vector<8x128xf32>
    %137 = arith.negf %136 : vector<8x128xf32>
    %138 = math.exp %137 : vector<8x128xf32>
    %cst_49 = arith.constant 1.000000e+00 : f32
    %139 = vector.broadcast %cst_49 : f32 to vector<8x128xf32>
    %140 = arith.addf %139, %138 : vector<8x128xf32>
    %141 = arith.divf %139, %140 : vector<8x128xf32>
    %142 = arith.mulf %135, %141 : vector<8x128xf32>
    %cst_50 = arith.constant 1.000000e+00 : f32
    %143 = vector.broadcast %cst_50 : f32 to vector<8x128xf32>
    %144 = arith.subf %143, %141 : vector<8x128xf32>
    %145 = arith.mulf %126, %144 : vector<8x128xf32>
    %146 = arith.addf %142, %145 : vector<8x128xf32>
    %c0_51 = arith.constant 0 : index
    %c2_52 = arith.constant 2 : index
    %c128_53 = arith.constant 128 : index
    %147 = vector.load %arg9[%c0_51, %c2_52, %c128_53] : memref<8x8x256xf32, #tpu.memory_space<vmem>>, vector<8x1x128xf32>
    %148 = vector.shape_cast %147 : vector<8x1x128xf32> to vector<8x128xf32>
    %149 = vector.shape_cast %146 : vector<8x128xf32> to vector<8x1x128xf32>
    tpu.vector_store %arg9[%c0_51, %c2_52, %c128_53], %149 {strides = array<i32>} : memref<8x8x256xf32, #tpu.memory_space<vmem>>, vector<8x1x128xf32>,
    %150 = vector.extract_strided_slice %9 {offsets = [24, 0], sizes = [8, 256], strides = [1, 1]} : vector<64x256xf32> to vector<8x256xf32>
    %151 = arith.truncf %146 : vector<8x128xf32> to vector<8x128xbf16>
    %cst_54 = arith.constant dense<0.000000e+00> : vector<8x256xf32>
    %152 = tpu.matmul %151, %11, %cst_54 {dimension_numbers = #tpu.dot_dimension_numbers<[1], [0], [0], [1], [0, 0, 1, 1], [], []>} : vector<8x128xbf16>, vector<128x256xbf16>, vector<8x256xf32> -> vector<8x256xf32>
    %153 = arith.addf %150, %152 : vector<8x256xf32>
    %154 = vector.broadcast %16 : vector<1x256xf32> to vector<8x256xf32>
    %155 = arith.addf %153, %154 : vector<8x256xf32>
    %156 = vector.extract_strided_slice %155 {offsets = [0, 0], sizes = [8, 128], strides = [1, 1]} : vector<8x256xf32> to vector<8x128xf32>
    %157 = math.tanh %156 : vector<8x128xf32>
    %158 = vector.extract_strided_slice %155 {offsets = [0, 128], sizes = [8, 128], strides = [1, 1]} : vector<8x256xf32> to vector<8x128xf32>
    %159 = arith.negf %158 : vector<8x128xf32>
    %160 = math.exp %159 : vector<8x128xf32>
    %cst_55 = arith.constant 1.000000e+00 : f32
    %161 = vector.broadcast %cst_55 : f32 to vector<8x128xf32>
    %162 = arith.addf %161, %160 : vector<8x128xf32>
    %163 = arith.divf %161, %162 : vector<8x128xf32>
    %164 = arith.mulf %157, %163 : vector<8x128xf32>
    %cst_56 = arith.constant 1.000000e+00 : f32
    %165 = vector.broadcast %cst_56 : f32 to vector<8x128xf32>
    %166 = arith.subf %165, %163 : vector<8x128xf32>
    %167 = arith.mulf %146, %166 : vector<8x128xf32>
    %168 = arith.addf %164, %167 : vector<8x128xf32>
    %c0_57 = arith.constant 0 : index
    %c3 = arith.constant 3 : index
    %c0_58 = arith.constant 0 : index
    %169 = vector.load %arg9[%c0_57, %c3, %c0_58] : memref<8x8x256xf32, #tpu.memory_space<vmem>>, vector<8x1x128xf32>
    %170 = vector.shape_cast %169 : vector<8x1x128xf32> to vector<8x128xf32>
    %171 = vector.shape_cast %168 : vector<8x128xf32> to vector<8x1x128xf32>
    tpu.vector_store %arg9[%c0_57, %c3, %c0_58], %171 {strides = array<i32>} : memref<8x8x256xf32, #tpu.memory_space<vmem>>, vector<8x1x128xf32>,
    %172 = arith.truncf %168 : vector<8x128xf32> to vector<8x128xbf16>
    %cst_59 = arith.constant dense<0.000000e+00> : vector<8x256xf32>
    %173 = tpu.matmul %172, %13, %cst_59 {dimension_numbers = #tpu.dot_dimension_numbers<[1], [0], [0], [1], [0, 0, 1, 1], [], []>} : vector<8x128xbf16>, vector<128x256xbf16>, vector<8x256xf32> -> vector<8x256xf32>
    %174 = vector.broadcast %19 : vector<1x256xf32> to vector<8x256xf32>
    %175 = arith.addf %173, %174 : vector<8x256xf32>
    %176 = vector.extract_strided_slice %175 {offsets = [0, 0], sizes = [8, 128], strides = [1, 1]} : vector<8x256xf32> to vector<8x128xf32>
    %177 = math.tanh %176 : vector<8x128xf32>
    %178 = vector.extract_strided_slice %175 {offsets = [0, 128], sizes = [8, 128], strides = [1, 1]} : vector<8x256xf32> to vector<8x128xf32>
    %179 = arith.negf %178 : vector<8x128xf32>
    %180 = math.exp %179 : vector<8x128xf32>
    %cst_60 = arith.constant 1.000000e+00 : f32
    %181 = vector.broadcast %cst_60 : f32 to vector<8x128xf32>
    %182 = arith.addf %181, %180 : vector<8x128xf32>
    %183 = arith.divf %181, %182 : vector<8x128xf32>
    %184 = arith.mulf %177, %183 : vector<8x128xf32>
    %cst_61 = arith.constant 1.000000e+00 : f32
    %185 = vector.broadcast %cst_61 : f32 to vector<8x128xf32>
    %186 = arith.subf %185, %183 : vector<8x128xf32>
    %187 = arith.mulf %168, %186 : vector<8x128xf32>
    %188 = arith.addf %184, %187 : vector<8x128xf32>
    %c0_62 = arith.constant 0 : index
    %c3_63 = arith.constant 3 : index
    %c128_64 = arith.constant 128 : index
    %189 = vector.load %arg9[%c0_62, %c3_63, %c128_64] : memref<8x8x256xf32, #tpu.memory_space<vmem>>, vector<8x1x128xf32>
    %190 = vector.shape_cast %189 : vector<8x1x128xf32> to vector<8x128xf32>
    %191 = vector.shape_cast %188 : vector<8x128xf32> to vector<8x1x128xf32>
    tpu.vector_store %arg9[%c0_62, %c3_63, %c128_64], %191 {strides = array<i32>} : memref<8x8x256xf32, #tpu.memory_space<vmem>>, vector<8x1x128xf32>,
    %192 = vector.extract_strided_slice %9 {offsets = [32, 0], sizes = [8, 256], strides = [1, 1]} : vector<64x256xf32> to vector<8x256xf32>
    %193 = arith.truncf %188 : vector<8x128xf32> to vector<8x128xbf16>
    %cst_65 = arith.constant dense<0.000000e+00> : vector<8x256xf32>
    %194 = tpu.matmul %193, %11, %cst_65 {dimension_numbers = #tpu.dot_dimension_numbers<[1], [0], [0], [1], [0, 0, 1, 1], [], []>} : vector<8x128xbf16>, vector<128x256xbf16>, vector<8x256xf32> -> vector<8x256xf32>
    %195 = arith.addf %192, %194 : vector<8x256xf32>
    %196 = vector.broadcast %16 : vector<1x256xf32> to vector<8x256xf32>
    %197 = arith.addf %195, %196 : vector<8x256xf32>
    %198 = vector.extract_strided_slice %197 {offsets = [0, 0], sizes = [8, 128], strides = [1, 1]} : vector<8x256xf32> to vector<8x128xf32>
    %199 = math.tanh %198 : vector<8x128xf32>
    %200 = vector.extract_strided_slice %197 {offsets = [0, 128], sizes = [8, 128], strides = [1, 1]} : vector<8x256xf32> to vector<8x128xf32>
    %201 = arith.negf %200 : vector<8x128xf32>
    %202 = math.exp %201 : vector<8x128xf32>
    %cst_66 = arith.constant 1.000000e+00 : f32
    %203 = vector.broadcast %cst_66 : f32 to vector<8x128xf32>
    %204 = arith.addf %203, %202 : vector<8x128xf32>
    %205 = arith.divf %203, %204 : vector<8x128xf32>
    %206 = arith.mulf %199, %205 : vector<8x128xf32>
    %cst_67 = arith.constant 1.000000e+00 : f32
    %207 = vector.broadcast %cst_67 : f32 to vector<8x128xf32>
    %208 = arith.subf %207, %205 : vector<8x128xf32>
    %209 = arith.mulf %188, %208 : vector<8x128xf32>
    %210 = arith.addf %206, %209 : vector<8x128xf32>
    %c0_68 = arith.constant 0 : index
    %c4 = arith.constant 4 : index
    %c0_69 = arith.constant 0 : index
    %211 = vector.load %arg9[%c0_68, %c4, %c0_69] : memref<8x8x256xf32, #tpu.memory_space<vmem>>, vector<8x1x128xf32>
    %212 = vector.shape_cast %211 : vector<8x1x128xf32> to vector<8x128xf32>
    %213 = vector.shape_cast %210 : vector<8x128xf32> to vector<8x1x128xf32>
    tpu.vector_store %arg9[%c0_68, %c4, %c0_69], %213 {strides = array<i32>} : memref<8x8x256xf32, #tpu.memory_space<vmem>>, vector<8x1x128xf32>,
    %214 = arith.truncf %210 : vector<8x128xf32> to vector<8x128xbf16>
    %cst_70 = arith.constant dense<0.000000e+00> : vector<8x256xf32>
    %215 = tpu.matmul %214, %13, %cst_70 {dimension_numbers = #tpu.dot_dimension_numbers<[1], [0], [0], [1], [0, 0, 1, 1], [], []>} : vector<8x128xbf16>, vector<128x256xbf16>, vector<8x256xf32> -> vector<8x256xf32>
    %216 = vector.broadcast %19 : vector<1x256xf32> to vector<8x256xf32>
    %217 = arith.addf %215, %216 : vector<8x256xf32>
    %218 = vector.extract_strided_slice %217 {offsets = [0, 0], sizes = [8, 128], strides = [1, 1]} : vector<8x256xf32> to vector<8x128xf32>
    %219 = math.tanh %218 : vector<8x128xf32>
    %220 = vector.extract_strided_slice %217 {offsets = [0, 128], sizes = [8, 128], strides = [1, 1]} : vector<8x256xf32> to vector<8x128xf32>
    %221 = arith.negf %220 : vector<8x128xf32>
    %222 = math.exp %221 : vector<8x128xf32>
    %cst_71 = arith.constant 1.000000e+00 : f32
    %223 = vector.broadcast %cst_71 : f32 to vector<8x128xf32>
    %224 = arith.addf %223, %222 : vector<8x128xf32>
    %225 = arith.divf %223, %224 : vector<8x128xf32>
    %226 = arith.mulf %219, %225 : vector<8x128xf32>
    %cst_72 = arith.constant 1.000000e+00 : f32
    %227 = vector.broadcast %cst_72 : f32 to vector<8x128xf32>
    %228 = arith.subf %227, %225 : vector<8x128xf32>
    %229 = arith.mulf %210, %228 : vector<8x128xf32>
    %230 = arith.addf %226, %229 : vector<8x128xf32>
    %c0_73 = arith.constant 0 : index
    %c4_74 = arith.constant 4 : index
    %c128_75 = arith.constant 128 : index
    %231 = vector.load %arg9[%c0_73, %c4_74, %c128_75] : memref<8x8x256xf32, #tpu.memory_space<vmem>>, vector<8x1x128xf32>
    %232 = vector.shape_cast %231 : vector<8x1x128xf32> to vector<8x128xf32>
    %233 = vector.shape_cast %230 : vector<8x128xf32> to vector<8x1x128xf32>
    tpu.vector_store %arg9[%c0_73, %c4_74, %c128_75], %233 {strides = array<i32>} : memref<8x8x256xf32, #tpu.memory_space<vmem>>, vector<8x1x128xf32>,
    %234 = vector.extract_strided_slice %9 {offsets = [40, 0], sizes = [8, 256], strides = [1, 1]} : vector<64x256xf32> to vector<8x256xf32>
    %235 = arith.truncf %230 : vector<8x128xf32> to vector<8x128xbf16>
    %cst_76 = arith.constant dense<0.000000e+00> : vector<8x256xf32>
    %236 = tpu.matmul %235, %11, %cst_76 {dimension_numbers = #tpu.dot_dimension_numbers<[1], [0], [0], [1], [0, 0, 1, 1], [], []>} : vector<8x128xbf16>, vector<128x256xbf16>, vector<8x256xf32> -> vector<8x256xf32>
    %237 = arith.addf %234, %236 : vector<8x256xf32>
    %238 = vector.broadcast %16 : vector<1x256xf32> to vector<8x256xf32>
    %239 = arith.addf %237, %238 : vector<8x256xf32>
    %240 = vector.extract_strided_slice %239 {offsets = [0, 0], sizes = [8, 128], strides = [1, 1]} : vector<8x256xf32> to vector<8x128xf32>
    %241 = math.tanh %240 : vector<8x128xf32>
    %242 = vector.extract_strided_slice %239 {offsets = [0, 128], sizes = [8, 128], strides = [1, 1]} : vector<8x256xf32> to vector<8x128xf32>
    %243 = arith.negf %242 : vector<8x128xf32>
    %244 = math.exp %243 : vector<8x128xf32>
    %cst_77 = arith.constant 1.000000e+00 : f32
    %245 = vector.broadcast %cst_77 : f32 to vector<8x128xf32>
    %246 = arith.addf %245, %244 : vector<8x128xf32>
    %247 = arith.divf %245, %246 : vector<8x128xf32>
    %248 = arith.mulf %241, %247 : vector<8x128xf32>
    %cst_78 = arith.constant 1.000000e+00 : f32
    %249 = vector.broadcast %cst_78 : f32 to vector<8x128xf32>
    %250 = arith.subf %249, %247 : vector<8x128xf32>
    %251 = arith.mulf %230, %250 : vector<8x128xf32>
    %252 = arith.addf %248, %251 : vector<8x128xf32>
    %c0_79 = arith.constant 0 : index
    %c5 = arith.constant 5 : index
    %c0_80 = arith.constant 0 : index
    %253 = vector.load %arg9[%c0_79, %c5, %c0_80] : memref<8x8x256xf32, #tpu.memory_space<vmem>>, vector<8x1x128xf32>
    %254 = vector.shape_cast %253 : vector<8x1x128xf32> to vector<8x128xf32>
    %255 = vector.shape_cast %252 : vector<8x128xf32> to vector<8x1x128xf32>
    tpu.vector_store %arg9[%c0_79, %c5, %c0_80], %255 {strides = array<i32>} : memref<8x8x256xf32, #tpu.memory_space<vmem>>, vector<8x1x128xf32>,
    %256 = arith.truncf %252 : vector<8x128xf32> to vector<8x128xbf16>
    %cst_81 = arith.constant dense<0.000000e+00> : vector<8x256xf32>
    %257 = tpu.matmul %256, %13, %cst_81 {dimension_numbers = #tpu.dot_dimension_numbers<[1], [0], [0], [1], [0, 0, 1, 1], [], []>} : vector<8x128xbf16>, vector<128x256xbf16>, vector<8x256xf32> -> vector<8x256xf32>
    %258 = vector.broadcast %19 : vector<1x256xf32> to vector<8x256xf32>
    %259 = arith.addf %257, %258 : vector<8x256xf32>
    %260 = vector.extract_strided_slice %259 {offsets = [0, 0], sizes = [8, 128], strides = [1, 1]} : vector<8x256xf32> to vector<8x128xf32>
    %261 = math.tanh %260 : vector<8x128xf32>
    %262 = vector.extract_strided_slice %259 {offsets = [0, 128], sizes = [8, 128], strides = [1, 1]} : vector<8x256xf32> to vector<8x128xf32>
    %263 = arith.negf %262 : vector<8x128xf32>
    %264 = math.exp %263 : vector<8x128xf32>
    %cst_82 = arith.constant 1.000000e+00 : f32
    %265 = vector.broadcast %cst_82 : f32 to vector<8x128xf32>
    %266 = arith.addf %265, %264 : vector<8x128xf32>
    %267 = arith.divf %265, %266 : vector<8x128xf32>
    %268 = arith.mulf %261, %267 : vector<8x128xf32>
    %cst_83 = arith.constant 1.000000e+00 : f32
    %269 = vector.broadcast %cst_83 : f32 to vector<8x128xf32>
    %270 = arith.subf %269, %267 : vector<8x128xf32>
    %271 = arith.mulf %252, %270 : vector<8x128xf32>
    %272 = arith.addf %268, %271 : vector<8x128xf32>
    %c0_84 = arith.constant 0 : index
    %c5_85 = arith.constant 5 : index
    %c128_86 = arith.constant 128 : index
    %273 = vector.load %arg9[%c0_84, %c5_85, %c128_86] : memref<8x8x256xf32, #tpu.memory_space<vmem>>, vector<8x1x128xf32>
    %274 = vector.shape_cast %273 : vector<8x1x128xf32> to vector<8x128xf32>
    %275 = vector.shape_cast %272 : vector<8x128xf32> to vector<8x1x128xf32>
    tpu.vector_store %arg9[%c0_84, %c5_85, %c128_86], %275 {strides = array<i32>} : memref<8x8x256xf32, #tpu.memory_space<vmem>>, vector<8x1x128xf32>,
    %276 = vector.extract_strided_slice %9 {offsets = [48, 0], sizes = [8, 256], strides = [1, 1]} : vector<64x256xf32> to vector<8x256xf32>
    %277 = arith.truncf %272 : vector<8x128xf32> to vector<8x128xbf16>
    %cst_87 = arith.constant dense<0.000000e+00> : vector<8x256xf32>
    %278 = tpu.matmul %277, %11, %cst_87 {dimension_numbers = #tpu.dot_dimension_numbers<[1], [0], [0], [1], [0, 0, 1, 1], [], []>} : vector<8x128xbf16>, vector<128x256xbf16>, vector<8x256xf32> -> vector<8x256xf32>
    %279 = arith.addf %276, %278 : vector<8x256xf32>
    %280 = vector.broadcast %16 : vector<1x256xf32> to vector<8x256xf32>
    %281 = arith.addf %279, %280 : vector<8x256xf32>
    %282 = vector.extract_strided_slice %281 {offsets = [0, 0], sizes = [8, 128], strides = [1, 1]} : vector<8x256xf32> to vector<8x128xf32>
    %283 = math.tanh %282 : vector<8x128xf32>
    %284 = vector.extract_strided_slice %281 {offsets = [0, 128], sizes = [8, 128], strides = [1, 1]} : vector<8x256xf32> to vector<8x128xf32>
    %285 = arith.negf %284 : vector<8x128xf32>
    %286 = math.exp %285 : vector<8x128xf32>
    %cst_88 = arith.constant 1.000000e+00 : f32
    %287 = vector.broadcast %cst_88 : f32 to vector<8x128xf32>
    %288 = arith.addf %287, %286 : vector<8x128xf32>
    %289 = arith.divf %287, %288 : vector<8x128xf32>
    %290 = arith.mulf %283, %289 : vector<8x128xf32>
    %cst_89 = arith.constant 1.000000e+00 : f32
    %291 = vector.broadcast %cst_89 : f32 to vector<8x128xf32>
    %292 = arith.subf %291, %289 : vector<8x128xf32>
    %293 = arith.mulf %272, %292 : vector<8x128xf32>
    %294 = arith.addf %290, %293 : vector<8x128xf32>
    %c0_90 = arith.constant 0 : index
    %c6 = arith.constant 6 : index
    %c0_91 = arith.constant 0 : index
    %295 = vector.load %arg9[%c0_90, %c6, %c0_91] : memref<8x8x256xf32, #tpu.memory_space<vmem>>, vector<8x1x128xf32>
    %296 = vector.shape_cast %295 : vector<8x1x128xf32> to vector<8x128xf32>
    %297 = vector.shape_cast %294 : vector<8x128xf32> to vector<8x1x128xf32>
    tpu.vector_store %arg9[%c0_90, %c6, %c0_91], %297 {strides = array<i32>} : memref<8x8x256xf32, #tpu.memory_space<vmem>>, vector<8x1x128xf32>,
    %298 = arith.truncf %294 : vector<8x128xf32> to vector<8x128xbf16>
    %cst_92 = arith.constant dense<0.000000e+00> : vector<8x256xf32>
    %299 = tpu.matmul %298, %13, %cst_92 {dimension_numbers = #tpu.dot_dimension_numbers<[1], [0], [0], [1], [0, 0, 1, 1], [], []>} : vector<8x128xbf16>, vector<128x256xbf16>, vector<8x256xf32> -> vector<8x256xf32>
    %300 = vector.broadcast %19 : vector<1x256xf32> to vector<8x256xf32>
    %301 = arith.addf %299, %300 : vector<8x256xf32>
    %302 = vector.extract_strided_slice %301 {offsets = [0, 0], sizes = [8, 128], strides = [1, 1]} : vector<8x256xf32> to vector<8x128xf32>
    %303 = math.tanh %302 : vector<8x128xf32>
    %304 = vector.extract_strided_slice %301 {offsets = [0, 128], sizes = [8, 128], strides = [1, 1]} : vector<8x256xf32> to vector<8x128xf32>
    %305 = arith.negf %304 : vector<8x128xf32>
    %306 = math.exp %305 : vector<8x128xf32>
    %cst_93 = arith.constant 1.000000e+00 : f32
    %307 = vector.broadcast %cst_93 : f32 to vector<8x128xf32>
    %308 = arith.addf %307, %306 : vector<8x128xf32>
    %309 = arith.divf %307, %308 : vector<8x128xf32>
    %310 = arith.mulf %303, %309 : vector<8x128xf32>
    %cst_94 = arith.constant 1.000000e+00 : f32
    %311 = vector.broadcast %cst_94 : f32 to vector<8x128xf32>
    %312 = arith.subf %311, %309 : vector<8x128xf32>
    %313 = arith.mulf %294, %312 : vector<8x128xf32>
    %314 = arith.addf %310, %313 : vector<8x128xf32>
    %c0_95 = arith.constant 0 : index
    %c6_96 = arith.constant 6 : index
    %c128_97 = arith.constant 128 : index
    %315 = vector.load %arg9[%c0_95, %c6_96, %c128_97] : memref<8x8x256xf32, #tpu.memory_space<vmem>>, vector<8x1x128xf32>
    %316 = vector.shape_cast %315 : vector<8x1x128xf32> to vector<8x128xf32>
    %317 = vector.shape_cast %314 : vector<8x128xf32> to vector<8x1x128xf32>
    tpu.vector_store %arg9[%c0_95, %c6_96, %c128_97], %317 {strides = array<i32>} : memref<8x8x256xf32, #tpu.memory_space<vmem>>, vector<8x1x128xf32>,
    %318 = vector.extract_strided_slice %9 {offsets = [56, 0], sizes = [8, 256], strides = [1, 1]} : vector<64x256xf32> to vector<8x256xf32>
    %319 = arith.truncf %314 : vector<8x128xf32> to vector<8x128xbf16>
    %cst_98 = arith.constant dense<0.000000e+00> : vector<8x256xf32>
    %320 = tpu.matmul %319, %11, %cst_98 {dimension_numbers = #tpu.dot_dimension_numbers<[1], [0], [0], [1], [0, 0, 1, 1], [], []>} : vector<8x128xbf16>, vector<128x256xbf16>, vector<8x256xf32> -> vector<8x256xf32>
    %321 = arith.addf %318, %320 : vector<8x256xf32>
    %322 = vector.broadcast %16 : vector<1x256xf32> to vector<8x256xf32>
    %323 = arith.addf %321, %322 : vector<8x256xf32>
    %324 = vector.extract_strided_slice %323 {offsets = [0, 0], sizes = [8, 128], strides = [1, 1]} : vector<8x256xf32> to vector<8x128xf32>
    %325 = math.tanh %324 : vector<8x128xf32>
    %326 = vector.extract_strided_slice %323 {offsets = [0, 128], sizes = [8, 128], strides = [1, 1]} : vector<8x256xf32> to vector<8x128xf32>
    %327 = arith.negf %326 : vector<8x128xf32>
    %328 = math.exp %327 : vector<8x128xf32>
    %cst_99 = arith.constant 1.000000e+00 : f32
    %329 = vector.broadcast %cst_99 : f32 to vector<8x128xf32>
    %330 = arith.addf %329, %328 : vector<8x128xf32>
    %331 = arith.divf %329, %330 : vector<8x128xf32>
    %332 = arith.mulf %325, %331 : vector<8x128xf32>
    %cst_100 = arith.constant 1.000000e+00 : f32
    %333 = vector.broadcast %cst_100 : f32 to vector<8x128xf32>
    %334 = arith.subf %333, %331 : vector<8x128xf32>
    %335 = arith.mulf %314, %334 : vector<8x128xf32>
    %336 = arith.addf %332, %335 : vector<8x128xf32>
    %c0_101 = arith.constant 0 : index
    %c7 = arith.constant 7 : index
    %c0_102 = arith.constant 0 : index
    %337 = vector.load %arg9[%c0_101, %c7, %c0_102] : memref<8x8x256xf32, #tpu.memory_space<vmem>>, vector<8x1x128xf32>
    %338 = vector.shape_cast %337 : vector<8x1x128xf32> to vector<8x128xf32>
    %339 = vector.shape_cast %336 : vector<8x128xf32> to vector<8x1x128xf32>
    tpu.vector_store %arg9[%c0_101, %c7, %c0_102], %339 {strides = array<i32>} : memref<8x8x256xf32, #tpu.memory_space<vmem>>, vector<8x1x128xf32>,
    %340 = arith.truncf %336 : vector<8x128xf32> to vector<8x128xbf16>
    %cst_103 = arith.constant dense<0.000000e+00> : vector<8x256xf32>
    %341 = tpu.matmul %340, %13, %cst_103 {dimension_numbers = #tpu.dot_dimension_numbers<[1], [0], [0], [1], [0, 0, 1, 1], [], []>} : vector<8x128xbf16>, vector<128x256xbf16>, vector<8x256xf32> -> vector<8x256xf32>
    %342 = vector.broadcast %19 : vector<1x256xf32> to vector<8x256xf32>
    %343 = arith.addf %341, %342 : vector<8x256xf32>
    %344 = vector.extract_strided_slice %343 {offsets = [0, 0], sizes = [8, 128], strides = [1, 1]} : vector<8x256xf32> to vector<8x128xf32>
    %345 = math.tanh %344 : vector<8x128xf32>
    %346 = vector.extract_strided_slice %343 {offsets = [0, 128], sizes = [8, 128], strides = [1, 1]} : vector<8x256xf32> to vector<8x128xf32>
    %347 = arith.negf %346 : vector<8x128xf32>
    %348 = math.exp %347 : vector<8x128xf32>
    %cst_104 = arith.constant 1.000000e+00 : f32
    %349 = vector.broadcast %cst_104 : f32 to vector<8x128xf32>
    %350 = arith.addf %349, %348 : vector<8x128xf32>
    %351 = arith.divf %349, %350 : vector<8x128xf32>
    %352 = arith.mulf %345, %351 : vector<8x128xf32>
    %cst_105 = arith.constant 1.000000e+00 : f32
    %353 = vector.broadcast %cst_105 : f32 to vector<8x128xf32>
    %354 = arith.subf %353, %351 : vector<8x128xf32>
    %355 = arith.mulf %336, %354 : vector<8x128xf32>
    %356 = arith.addf %352, %355 : vector<8x128xf32>
    %c0_106 = arith.constant 0 : index
    %c7_107 = arith.constant 7 : index
    %c128_108 = arith.constant 128 : index
    %357 = vector.load %arg9[%c0_106, %c7_107, %c128_108] : memref<8x8x256xf32, #tpu.memory_space<vmem>>, vector<8x1x128xf32>
    %358 = vector.shape_cast %357 : vector<8x1x128xf32> to vector<8x128xf32>
    %359 = vector.shape_cast %356 : vector<8x128xf32> to vector<8x1x128xf32>
    tpu.vector_store %arg9[%c0_106, %c7_107, %c128_108], %359 {strides = array<i32>} : memref<8x8x256xf32, #tpu.memory_space<vmem>>, vector<8x1x128xf32>,
    %c0_109 = arith.constant 0 : index
    %c0_110 = arith.constant 0 : index
    %360 = vector.load %arg11[%c0_109, %c0_110] : memref<8x128xf32, #tpu.memory_space<vmem>>, vector<8x128xf32>
    tpu.vector_store %arg11[%c0_109, %c0_110], %356 {strides = array<i32>} : memref<8x128xf32, #tpu.memory_space<vmem>>, vector<8x128xf32>,
    %c1_i32 = arith.constant 1 : i32
    %361 = arith.cmpi eq, %arg1, %c1_i32 : i32
    %362 = arith.extui %361 : i1 to i32
    %c0_i32_111 = arith.constant 0 : i32
    %363 = arith.cmpi ne, %362, %c0_i32_111 : i32
    scf.if %363 {
      %364 = arith.truncf %356 : vector<8x128xf32> to vector<8x128xbf16>
      %c0_112 = arith.constant 0 : index
      %c0_113 = arith.constant 0 : index
      %365 = vector.load %arg7[%c0_112, %c0_113] : memref<128x128xbf16, #tpu.memory_space<vmem>>, vector<128x128xbf16>
      %cst_114 = arith.constant dense<0.000000e+00> : vector<8x128xf32>
      %366 = tpu.matmul %364, %365, %cst_114 {dimension_numbers = #tpu.dot_dimension_numbers<[1], [0], [0], [1], [0, 0, 1, 1], [], []>} : vector<8x128xbf16>, vector<128x128xbf16>, vector<8x128xf32> -> vector<8x128xf32>
      %c0_115 = arith.constant 0 : index
      %c0_116 = arith.constant 0 : index
      %367 = vector.load %arg8[%c0_115, %c0_116] : memref<1x128xf32, #tpu.memory_space<vmem>>, vector<1x128xf32>
      %368 = vector.broadcast %367 : vector<1x128xf32> to vector<8x128xf32>
      %369 = arith.addf %366, %368 : vector<8x128xf32>
      %c0_117 = arith.constant 0 : index
      %c0_118 = arith.constant 0 : index
      %370 = vector.load %arg10[%c0_117, %c0_118] : memref<8x128xf32, #tpu.memory_space<vmem>>, vector<8x128xf32>
      tpu.vector_store %arg10[%c0_117, %c0_118], %369 {strides = array<i32>} : memref<8x128xf32, #tpu.memory_space<vmem>>, vector<8x128xf32>,
    } else {
    }
    return
  }
  func.func @transform_0(%arg0: i32, %arg1: i32) -> (i32, i32, i32) {
    %c0_i32 = arith.constant 0 : i32
    %c0_i32_0 = arith.constant 0 : i32
    return %arg1, %arg0, %c0_i32 : i32, i32, i32
  }
  func.func @transform_1(%arg0: i32, %arg1: i32) -> (i32, i32) {
    %c0_i32 = arith.constant 0 : i32
    %c0_i32_0 = arith.constant 0 : i32
    %c0_i32_1 = arith.constant 0 : i32
    return %c0_i32, %c0_i32_0 : i32, i32
  }
  func.func @transform_2(%arg0: i32, %arg1: i32) -> (i32, i32) {
    %c0_i32 = arith.constant 0 : i32
    %c0_i32_0 = arith.constant 0 : i32
    %c0_i32_1 = arith.constant 0 : i32
    return %c0_i32, %c0_i32_0 : i32, i32
  }
  func.func @transform_3(%arg0: i32, %arg1: i32) -> (i32, i32, i32) {
    %c0_i32 = arith.constant 0 : i32
    %c0_i32_0 = arith.constant 0 : i32
    %c0_i32_1 = arith.constant 0 : i32
    %c0_i32_2 = arith.constant 0 : i32
    return %c0_i32, %c0_i32_0, %c0_i32_1 : i32, i32, i32
  }
  func.func @transform_4(%arg0: i32, %arg1: i32) -> (i32, i32) {
    %c0_i32 = arith.constant 0 : i32
    %c0_i32_0 = arith.constant 0 : i32
    %c0_i32_1 = arith.constant 0 : i32
    return %c0_i32, %c0_i32_0 : i32, i32
  }
  func.func @transform_5(%arg0: i32, %arg1: i32) -> (i32, i32) {
    %c0_i32 = arith.constant 0 : i32
    %c0_i32_0 = arith.constant 0 : i32
    %c0_i32_1 = arith.constant 0 : i32
    return %c0_i32, %c0_i32_0 : i32, i32
  }
  func.func @transform_6(%arg0: i32, %arg1: i32) -> (i32, i32) {
    %c0_i32 = arith.constant 0 : i32
    %c0_i32_0 = arith.constant 0 : i32
    %c0_i32_1 = arith.constant 0 : i32
    return %c0_i32, %c0_i32_0 : i32, i32
  }
  func.func @transform_7(%arg0: i32, %arg1: i32) -> (i32, i32, i32) {
    %c0_i32 = arith.constant 0 : i32
    %c0_i32_0 = arith.constant 0 : i32
    return %arg0, %arg1, %c0_i32 : i32, i32, i32
  }
  func.func @transform_8(%arg0: i32, %arg1: i32) -> (i32, i32) {
    %c0_i32 = arith.constant 0 : i32
    %c0_i32_0 = arith.constant 0 : i32
    return %arg0, %c0_i32 : i32, i32
  }
}

</mosaic_0001>

<llo_original>
// kernel: recurrent_highway_text.1
$region0: #{recurrent_highway_text.1}
  #allocation0 [shape = 'u32[]', space=smem, size = 0x4, offset = 0x4, fixed_abs, tag = 'smem constant byte address 0x4 - core index']
  #allocation1 [shape = 'u32[144,128]{1,0:T(1,128)}', space=vmem, size = 0x12000, scoped, tag = 'internal scratch']
  #allocation2 [shape = 'f32[8,128]{1,0:T(8,128)}', space=vmem, size = 0x1000, scoped, tag = 'scratch operand']
  %s0 = inlined_call_operand.vmem [shape: bf16[16,8,128], index: 0, kind: input, shape index: {}]
  %s1 = inlined_call_operand.vmem [shape: bf16[128,256], index: 1, kind: input, shape index: {}]
  %s2 = inlined_call_operand.vmem [shape: f32[1,256], index: 2, kind: input, shape index: {}]
  %s3 = inlined_call_operand.vmem [shape: bf16[2,128,256], index: 3, kind: input, shape index: {}]
  %s4 = inlined_call_operand.vmem [shape: f32[2,256], index: 4, kind: input, shape index: {}]
  %s5 = inlined_call_operand.vmem [shape: bf16[128,128], index: 5, kind: input, shape index: {}]
  %s6 = inlined_call_operand.vmem [shape: f32[1,128], index: 6, kind: input, shape index: {}]
  %s7 = inlined_call_operand.hbm [shape: f32[8,16,256], index: 7, kind: output, shape index: {0}]
  %s8 = inlined_call_operand.hbm [shape: f32[8,128], index: 8, kind: output, shape index: {1}]
  %9 = xla_tuple %s7, %s8
  %s10 = sld [smem:[#allocation0]]
  $region77: #{recurrent_highway_text.1} parent=0
    _
  %s12 = ssub.s32 1, %s10
  %s13 = scalar_select 0, %s12, %s10
  $region1: #{recurrent_highway_text.1} parent=0
    #allocation3 [shape = 'u8[131072]{0}', space=vmem, size = 0x20000, scoped, tag = 'output window, operand 0']
    #allocation4 [shape = 's32[2]{0}', space=sflag, size = 0x8, scoped, tag = 'scoped memory for recurrent_highway_text.1']
    #allocation5 [shape = 'u8[4096]{0}', space=vmem, size = 0x1000, scoped, tag = 'output window, operand 1, single buffered']
    #allocation6 [shape = 's32[1]{0}', space=sflag, size = 0x4, scoped, tag = 'scoped memory for recurrent_highway_text.1']
    %14 = vsyncpa [#allocation4], 0
    %s15 = scalar_lea.sflag [#allocation4], 1
    %16 = vsyncpa %s15, 0
    %17 = vsyncpa [#allocation6], 0
    loop: start=0, step=1, limit=4
    $region2: #{recurrent_highway_text.1} parent=1 // loop_pre_header
      _
    $region3: #{recurrent_highway_text.1} parent=1 // loop_header
      %s19 = sphi 0, %s23
      %p20 = scmp.ge.s32.totalorder %s19, 4
      %s26 = sphi 0, %s38
      %s27 = sphi 0, %s34
      %s28 = sphi 0, %s26
      %s29 = sphi 0, %s27
      %s30 = sphi 0, %s28
      %s31 = sphi 0, %s29
      %s43 = sphi 0, %s45
      %s46 = sphi 0, %s43
      %s47 = sphi 0, %s46
      %s63 = sphi 0, %s47
      %s67 = sphi 0, %s67
      %s69 = sphi 0, %s67
      %s70 = sphi 0, %s69
      %s84 = sphi 0, %s70
      %s88 = sphi 0, %s88
      %s90 = sphi 0, %s88
      %s91 = sphi 0, %s90
      %s105 = sphi 0, %s91
      %s109 = sphi 0, %s109
      %s111 = sphi 0, %s109
      %s112 = sphi 0, %s111
      %s126 = sphi 0, %s112
      %s130 = sphi 0, %s130
      %s132 = sphi 0, %s130
      %s133 = sphi 0, %s132
      %s147 = sphi 0, %s133
      %s151 = sphi 0, %s151
      %s153 = sphi 0, %s151
      %s154 = sphi 0, %s153
      %s168 = sphi 0, %s154
      %s172 = sphi 0, %s172
      %s174 = sphi 0, %s172
      %s175 = sphi 0, %s174
      %s189 = sphi 0, %s175
      %s197 = sphi 0, %s199
      %s200 = sphi 0, %s197
      %s201 = sphi 0, %s200
      %s217 = sphi 0, %s201
      %s223 = sphi 0, %s225
      %s226 = sphi 0, %s223
      %s227 = sphi 0, %s226
      %s243 = sphi 0, %s227
    $region4: #{recurrent_highway_text.1} parent=1 // loop_header_branch
      %22 = sbr.rel (%p20) target = $region8
    $region5: #{recurrent_highway_text.1} parent=1 // loop_body
      %s24 = ssub.s32 %s19, 1
      %s25 = ssub.s32 %s19, 2
      %s32 = sadd.s32 1, %s27
      %p33 = scmp.ge.s32.totalorder %s32, 2
      %s34 = scalar_select %p33, 0, %s32
      %s35 = sadd.s32 1, %s26
      %s36 = scalar_select %p33, %s35, %s26
      %p37 = scmp.ge.s32.totalorder %s36, 1
      %s38 = scalar_select %p37, 0, %s36
      %s39 = ssub.s32 %s27, %s34
      %s40 = ssub.s32 %s26, %s38
      %s41 = sor.u32 %s39, %s40
      %p42 = scmp.eq.s32.totalorder %s41, 0
      %s44 = sadd.s32 %s43, 1
      %s45 = scalar_select %p42, %s43, %s44
      %p48 = pneg %p42
      %p49 = scmp.eq.s32.totalorder %s19, 1
      %p50 = por %p48, %p49
      %p51 = scmp.ne.s32.totalorder %s43, %s46
      %p52 = scmp.eq.s32.totalorder %s19, 0
      %p53 = por %p51, %p52
      %p54 = scmp.ne.s32.totalorder %s43, %s46
      %p55 = scmp.eq.s32.totalorder %s24, 1
      %p56 = por %p54, %p55
      %p57 = scmp.ne.s32.totalorder %s46, %s47
      %p58 = scmp.eq.s32.totalorder %s24, 0
      %p59 = por %p57, %p58
      %p60 = scmp.ne.s32.totalorder %s46, %s47
      %p61 = scmp.eq.s32.totalorder %s25, 1
      %p62 = por %p60, %p61
      %p64 = scmp.ne.s32.totalorder %s47, %s63
      %p65 = scmp.eq.s32.totalorder %s25, 0
      %p66 = por %p64, %p65
      %s68 = sadd.s32 %s67, 1
      %p71 = scmp.eq.s32.totalorder %s19, 1
      %p72 = scmp.ne.s32.totalorder %s67, %s69
      %p73 = scmp.eq.s32.totalorder %s19, 0
      %p74 = por %p72, %p73
      %p75 = scmp.ne.s32.totalorder %s67, %s69
      %p76 = scmp.eq.s32.totalorder %s24, 1
      %p77 = por %p75, %p76
      %p78 = scmp.ne.s32.totalorder %s69, %s70
      %p79 = scmp.eq.s32.totalorder %s24, 0
      %p80 = por %p78, %p79
      %p81 = scmp.ne.s32.totalorder %s69, %s70
      %p82 = scmp.eq.s32.totalorder %s25, 1
      %p83 = por %p81, %p82
      %p85 = scmp.ne.s32.totalorder %s70, %s84
      %p86 = scmp.eq.s32.totalorder %s25, 0
      %p87 = por %p85, %p86
      %s89 = sadd.s32 %s88, 1
      %p92 = scmp.eq.s32.totalorder %s19, 1
      %p93 = scmp.ne.s32.totalorder %s88, %s90
      %p94 = scmp.eq.s32.totalorder %s19, 0
      %p95 = por %p93, %p94
      %p96 = scmp.ne.s32.totalorder %s88, %s90
      %p97 = scmp.eq.s32.totalorder %s24, 1
      %p98 = por %p96, %p97
      %p99 = scmp.ne.s32.totalorder %s90, %s91
      %p100 = scmp.eq.s32.totalorder %s24, 0
      %p101 = por %p99, %p100
      %p102 = scmp.ne.s32.totalorder %s90, %s91
      %p103 = scmp.eq.s32.totalorder %s25, 1
      %p104 = por %p102, %p103
      %p106 = scmp.ne.s32.totalorder %s91, %s105
      %p107 = scmp.eq.s32.totalorder %s25, 0
      %p108 = por %p106, %p107
      %s110 = sadd.s32 %s109, 1
      %p113 = scmp.eq.s32.totalorder %s19, 1
      %p114 = scmp.ne.s32.totalorder %s109, %s111
      %p115 = scmp.eq.s32.totalorder %s19, 0
      %p116 = por %p114, %p115
      %p117 = scmp.ne.s32.totalorder %s109, %s111
      %p118 = scmp.eq.s32.totalorder %s24, 1
      %p119 = por %p117, %p118
      %p120 = scmp.ne.s32.totalorder %s111, %s112
      %p121 = scmp.eq.s32.totalorder %s24, 0
      %p122 = por %p120, %p121
      %p123 = scmp.ne.s32.totalorder %s111, %s112
      %p124 = scmp.eq.s32.totalorder %s25, 1
      %p125 = por %p123, %p124
      %p127 = scmp.ne.s32.totalorder %s112, %s126
      %p128 = scmp.eq.s32.totalorder %s25, 0
      %p129 = por %p127, %p128
      %s131 = sadd.s32 %s130, 1
      %p134 = scmp.eq.s32.totalorder %s19, 1
      %p135 = scmp.ne.s32.totalorder %s130, %s132
      %p136 = scmp.eq.s32.totalorder %s19, 0
      %p137 = por %p135, %p136
      %p138 = scmp.ne.s32.totalorder %s130, %s132
      %p139 = scmp.eq.s32.totalorder %s24, 1
      %p140 = por %p138, %p139
      %p141 = scmp.ne.s32.totalorder %s132, %s133
      %p142 = scmp.eq.s32.totalorder %s24, 0
      %p143 = por %p141, %p142
      %p144 = scmp.ne.s32.totalorder %s132, %s133
      %p145 = scmp.eq.s32.totalorder %s25, 1
      %p146 = por %p144, %p145
      %p148 = scmp.ne.s32.totalorder %s133, %s147
      %p149 = scmp.eq.s32.totalorder %s25, 0
      %p150 = por %p148, %p149
      %s152 = sadd.s32 %s151, 1
      %p155 = scmp.eq.s32.totalorder %s19, 1
      %p156 = scmp.ne.s32.totalorder %s151, %s153
      %p157 = scmp.eq.s32.totalorder %s19, 0
      %p158 = por %p156, %p157
      %p159 = scmp.ne.s32.totalorder %s151, %s153
      %p160 = scmp.eq.s32.totalorder %s24, 1
      %p161 = por %p159, %p160
      %p162 = scmp.ne.s32.totalorder %s153, %s154
      %p163 = scmp.eq.s32.totalorder %s24, 0
      %p164 = por %p162, %p163
      %p165 = scmp.ne.s32.totalorder %s153, %s154
      %p166 = scmp.eq.s32.totalorder %s25, 1
      %p167 = por %p165, %p166
      %p169 = scmp.ne.s32.totalorder %s154, %s168
      %p170 = scmp.eq.s32.totalorder %s25, 0
      %p171 = por %p169, %p170
      %s173 = sadd.s32 %s172, 1
      %p176 = scmp.eq.s32.totalorder %s19, 1
      %p177 = scmp.ne.s32.totalorder %s172, %s174
      %p178 = scmp.eq.s32.totalorder %s19, 0
      %p179 = por %p177, %p178
      %p180 = scmp.ne.s32.totalorder %s172, %s174
      %p181 = scmp.eq.s32.totalorder %s24, 1
      %p182 = por %p180, %p181
      %p183 = scmp.ne.s32.totalorder %s174, %s175
      %p184 = scmp.eq.s32.totalorder %s24, 0
      %p185 = por %p183, %p184
      %p186 = scmp.ne.s32.totalorder %s174, %s175
      %p187 = scmp.eq.s32.totalorder %s25, 1
      %p188 = por %p186, %p187
      %p190 = scmp.ne.s32.totalorder %s175, %s189
      %p191 = scmp.eq.s32.totalorder %s25, 0
      %p192 = por %p190, %p191
      %s193 = ssub.s32 %s26, %s38
      %s194 = ssub.s32 %s27, %s34
      %s195 = sor.u32 %s193, %s194
      %p196 = scmp.eq.s32.totalorder %s195, 0
      %s198 = sadd.s32 %s197, 1
      %s199 = scalar_select %p196, %s197, %s198
      %p202 = pneg %p196
      %p203 = scmp.eq.s32.totalorder %s19, 1
      %p204 = por %p202, %p203
      %p205 = scmp.ne.s32.totalorder %s197, %s200
      %p206 = scmp.eq.s32.totalorder %s19, 0
      %p207 = por %p205, %p206
      %p208 = scmp.ne.s32.totalorder %s197, %s200
      %p209 = scmp.eq.s32.totalorder %s24, 1
      %p210 = por %p208, %p209
      %p211 = scmp.ne.s32.totalorder %s200, %s201
      %p212 = scmp.eq.s32.totalorder %s24, 0
      %p213 = por %p211, %p212
      %p214 = scmp.ne.s32.totalorder %s200, %s201
      %p215 = scmp.eq.s32.totalorder %s25, 1
      %p216 = por %p214, %p215
      %p218 = scmp.ne.s32.totalorder %s201, %s217
      %p219 = scmp.eq.s32.totalorder %s25, 0
      %p220 = por %p218, %p219
      %s221 = ssub.s32 %s26, %s38
      %p222 = scmp.eq.s32.totalorder %s221, 0
      %s224 = sadd.s32 %s223, 1
      %s225 = scalar_select %p222, %s223, %s224
      %p228 = pneg %p222
      %p229 = scmp.eq.s32.totalorder %s19, 1
      %p230 = por %p228, %p229
      %p231 = scmp.ne.s32.totalorder %s223, %s226
      %p232 = scmp.eq.s32.totalorder %s19, 0
      %p233 = por %p231, %p232
      %p234 = scmp.ne.s32.totalorder %s223, %s226
      %p235 = scmp.eq.s32.totalorder %s24, 1
      %p236 = por %p234, %p235
      %p237 = scmp.ne.s32.totalorder %s226, %s227
      %p238 = scmp.eq.s32.totalorder %s24, 0
      %p239 = por %p237, %p238
      %p240 = scmp.ne.s32.totalorder %s226, %s227
      %p241 = scmp.eq.s32.totalorder %s25, 1
      %p242 = por %p240, %p241
      %p244 = scmp.ne.s32.totalorder %s227, %s243
      %p245 = scmp.eq.s32.totalorder %s25, 0
      %p246 = por %p244, %p245
      %p247 = scmp.le.s32.totalorder 1, %s19
      %p248 = scmp.lt.s32.totalorder %s19, 3
      %p249 = pnand %p247, %p248
      %p250 = pneg %p249
      // Predicated region
      $region9: #{recurrent_highway_text.1} parent=5 // pred_check
        _
      $region10: #{recurrent_highway_text.1} parent=5 // pred_check_branch
        %252 = sbr.rel (%p249) target = $region12
      $region11: #{recurrent_highway_text.1} parent=5 // pred_region
        %s253 = ssub.s32 %s19, 1
        // Predicated region
        $region13: #{recurrent_highway_text.1} parent=11 // pred_check
          %p254 = pneg %p80
        $region14: #{recurrent_highway_text.1} parent=11 // pred_check_branch
          %256 = sbr.rel (%p254) target = $region16
        $region15: #{recurrent_highway_text.1} parent=11 // pred_region
          _
        $region16: #{recurrent_highway_text.1} parent=11 // pred_fallthru
          _
        // Predicated region
        $region17: #{recurrent_highway_text.1} parent=11 // pred_check
          %p257 = pneg %p101
        $region18: #{recurrent_highway_text.1} parent=11 // pred_check_branch
          %259 = sbr.rel (%p257) target = $region20
        $region19: #{recurrent_highway_text.1} parent=11 // pred_region
          _
        $region20: #{recurrent_highway_text.1} parent=11 // pred_fallthru
          _
        // Predicated region
        $region21: #{recurrent_highway_text.1} parent=11 // pred_check
          %p260 = pneg %p122
        $region22: #{recurrent_highway_text.1} parent=11 // pred_check_branch
          %262 = sbr.rel (%p260) target = $region24
        $region23: #{recurrent_highway_text.1} parent=11 // pred_region
          _
        $region24: #{recurrent_highway_text.1} parent=11 // pred_fallthru
          _
        // Predicated region
        $region25: #{recurrent_highway_text.1} parent=11 // pred_check
          %p263 = pneg %p143
        $region26: #{recurrent_highway_text.1} parent=11 // pred_check_branch
          %265 = sbr.rel (%p263) target = $region28
        $region27: #{recurrent_highway_text.1} parent=11 // pred_region
          _
        $region28: #{recurrent_highway_text.1} parent=11 // pred_fallthru
          _
        // Predicated region
        $region29: #{recurrent_highway_text.1} parent=11 // pred_check
          %p266 = pneg %p164
        $region30: #{recurrent_highway_text.1} parent=11 // pred_check_branch
          %268 = sbr.rel (%p266) target = $region32
        $region31: #{recurrent_highway_text.1} parent=11 // pred_region
          _
        $region32: #{recurrent_highway_text.1} parent=11 // pred_fallthru
          _
        // Predicated region
        $region33: #{recurrent_highway_text.1} parent=11 // pred_check
          %p269 = pneg %p185
        $region34: #{recurrent_highway_text.1} parent=11 // pred_check_branch
          %271 = sbr.rel (%p269) target = $region36
        $region35: #{recurrent_highway_text.1} parent=11 // pred_region
          _
        $region36: #{recurrent_highway_text.1} parent=11 // pred_fallthru
          _
      $region12: #{recurrent_highway_text.1} parent=5 // pred_fallthru
        _
      %p272 = scmp.lt.s32.totalorder %s19, 2
      // Predicated region
      $region37: #{recurrent_highway_text.1} parent=5 // pred_check
        %p273 = pneg %p272
      $region38: #{recurrent_highway_text.1} parent=5 // pred_check_branch
        %275 = sbr.rel (%p273) target = $region40
      $region39: #{recurrent_highway_text.1} parent=5 // pred_region
        // Predicated region
        $region41: #{recurrent_highway_text.1} parent=39 // pred_check
          %p276 = pneg %p53
        $region42: #{recurrent_highway_text.1} parent=39 // pred_check_branch
          %278 = sbr.rel (%p276) target = $region44
        $region43: #{recurrent_highway_text.1} parent=39 // pred_region
          %s279 = smul.u32 8, %s27
          %p280 = scmp.lt.s32.totalorder %s279, 15
          %s281 = scalar_select %p280, %s279, 15
          %p282 = scmp.lt.s32.totalorder %s26, 0
          %s283 = scalar_select %p282, %s26, 0
          %s284 = sadd.s32 %s283, %s281
          %s285 = smul.addr %s284, 4
          %s286 = scalar_lea.vmem %s0, %s285
          %s287 = smul.u32 8, %s27
        $region44: #{recurrent_highway_text.1} parent=39 // pred_fallthru
          _
      $region40: #{recurrent_highway_text.1} parent=5 // pred_fallthru
        _
      %p288 = scmp.le.s32.totalorder 1, %s19
      %p289 = scmp.lt.s32.totalorder %s19, 3
      %p290 = pnand %p288, %p289
      %p291 = pneg %p290
      // Predicated region
      $region45: #{recurrent_highway_text.1} parent=5 // pred_check
        _
      $region46: #{recurrent_highway_text.1} parent=5 // pred_check_branch
        %293 = sbr.rel (%p290) target = $region48
      $region47: #{recurrent_highway_text.1} parent=5 // pred_region
        %s294 = ssub.s32 %s19, 1
        %s295 = smul.u32 8, %s29
        %p296 = scmp.lt.s32.totalorder %s295, 15
        %s297 = scalar_select %p296, %s295, 15
        %p298 = scmp.lt.s32.totalorder %s28, 0
        %s299 = scalar_select %p298, %s28, 0
        %s300 = sadd.s32 %s299, %s297
        %s301 = smul.addr %s300, 4
        %s302 = scalar_lea.vmem %s0, %s301
        %p303 = pneg %p59
        %p304 = pneg %p56
        %p305 = pneg %p80
        %p306 = pneg %p77
        %p307 = pneg %p101
        %p308 = pneg %p98
        %p309 = pneg %p122
        %p310 = pneg %p119
        %p311 = pneg %p143
        %p312 = pneg %p140
        %p313 = pneg %p164
        %p314 = pneg %p161
        %p315 = pneg %p185
        %p316 = pneg %p182
        %p317 = pneg %p213
        %p318 = pneg %p210
        %s319 = sand.u32 %s200, 1
        %s320 = scalar_lea.sflag [#allocation4], %s319
        %s321 = sand.u32 %s200, 1
        %s322 = smul.addr %s321, 128
        %s323 = scalar_lea.vmem [#allocation3], %s322
        %p324 = pneg %p239
        %p325 = pneg %p236
        %s326 = smul.u32 8, %s29
        %p327 = scmp.lt.s32.totalorder %s326, 15
        %s328 = scalar_select %p327, %s326, 15
        %p329 = scmp.lt.s32.totalorder %s28, 0
        %s330 = scalar_select %p329, %s28, 0
        %s331 = sadd.s32 %s330, %s328
        %s332 = smul.addr %s331, 4
        %s333 = scalar_lea.vmem %s0, %s332
        %s334 = smul.u32 8, %s29
        %s335 = smul.u32 8, %s28
        %p337 = scmp.eq.s32.totalorder %s29, 0
        // Predicated region
        $region49: #{recurrent_highway_text.1} parent=47 // pred_check
          %p338 = pneg %p337
        $region50: #{recurrent_highway_text.1} parent=47 // pred_check_branch
          %340 = sbr.rel (%p338) target = $region52
        $region51: #{recurrent_highway_text.1} parent=47 // pred_region
          %341 = vst [vmem:[#allocation2] sm:$0xff] 0.0
          %342 = vst [vmem:[#allocation5] sm:$0xff] 0.0
        $region52: #{recurrent_highway_text.1} parent=47 // pred_fallthru
          _
        %v343 = vld [vmem:[%s333] sm:$0xf]
        %v344 = vld [vmem:[%s333 + $0x4] sm:$0xf]
        %v345 = vld [vmem:[%s333 + $0x8] sm:$0xf]
        %v346 = vld [vmem:[%s333 + $0xc] sm:$0xf]
        %v347 = vld [vmem:[%s333 + $0x10] sm:$0xf]
        %v348 = vld [vmem:[%s333 + $0x14] sm:$0xf]
        %v349 = vld [vmem:[%s333 + $0x18] sm:$0xf]
        %v350 = vld [vmem:[%s333 + $0x1c] sm:$0xf]
        %v351 = vld [vmem:[%s1] sm:$0xff]
        %v352 = vld [vmem:[%s1 + $0x8] sm:$0xff]
        %v353 = vld [vmem:[%s1 + $0x10] sm:$0xff]
        %v354 = vld [vmem:[%s1 + $0x18] sm:$0xff]
        %v355 = vld [vmem:[%s1 + $0x20] sm:$0xff]
        %v356 = vld [vmem:[%s1 + $0x28] sm:$0xff]
        %v357 = vld [vmem:[%s1 + $0x30] sm:$0xff]
        %v358 = vld [vmem:[%s1 + $0x38] sm:$0xff]
        %v359 = vld [vmem:[%s1 + $0x40] sm:$0xff]
        %v360 = vld [vmem:[%s1 + $0x48] sm:$0xff]
        %v361 = vld [vmem:[%s1 + $0x50] sm:$0xff]
        %v362 = vld [vmem:[%s1 + $0x58] sm:$0xff]
        %v363 = vld [vmem:[%s1 + $0x60] sm:$0xff]
        %v364 = vld [vmem:[%s1 + $0x68] sm:$0xff]
        %v365 = vld [vmem:[%s1 + $0x70] sm:$0xff]
        %v366 = vld [vmem:[%s1 + $0x78] sm:$0xff]
        %v367 = vld [vmem:[%s2] sm:$0x3]
        %v369 = vlaneseq
        %v370 = vshrl.u32 %v369, 7
        %v371 = vsub.s32 0, %v370
        %v372 = vrot.slane %v367, %v371
        %v373 = vlaneseq
        %v374 = vshrl.u32 %v373, 7
        %v375 = vsub.s32 1, %v374
        %v376 = vrot.slane %v367, %v375
        %v387 = vunpack.c.l.b16 %v343
        %v388 = vunpack.c.l.b16 %v344
        %v389 = vunpack.c.l.b16 %v345
        %v390 = vunpack.c.l.b16 %v346
        %v391 = vunpack.c.l.b16 %v347
        %v392 = vunpack.c.l.b16 %v348
        %v393 = vunpack.c.l.b16 %v349
        %v394 = vunpack.c.l.b16 %v350
        %v395 = vpack.c.b16 %v388, %v387
        %v396 = vpack.c.b16 %v390, %v389
        %v397 = vpack.c.b16 %v392, %v391
        %v398 = vpack.c.b16 %v394, %v393
        %v419 = vunpack.c.l.b16 %v351
        %v420 = vunpack.c.h.b16 %v351
        %v421 = vunpack.c.l.b16 %v352
        %v422 = vunpack.c.h.b16 %v352
        %v423 = vunpack.c.l.b16 %v353
        %v424 = vunpack.c.h.b16 %v353
        %v425 = vunpack.c.l.b16 %v354
        %v426 = vunpack.c.h.b16 %v354
        %v427 = vunpack.c.l.b16 %v355
        %v428 = vunpack.c.h.b16 %v355
        %v429 = vunpack.c.l.b16 %v356
        %v430 = vunpack.c.h.b16 %v356
        %v431 = vunpack.c.l.b16 %v357
        %v432 = vunpack.c.h.b16 %v357
        %v433 = vunpack.c.l.b16 %v358
        %v434 = vunpack.c.h.b16 %v358
        %v435 = vunpack.c.l.b16 %v359
        %v436 = vunpack.c.h.b16 %v359
        %v437 = vunpack.c.l.b16 %v360
        %v438 = vunpack.c.h.b16 %v360
        %v439 = vunpack.c.l.b16 %v361
        %v440 = vunpack.c.h.b16 %v361
        %v441 = vunpack.c.l.b16 %v362
        %v442 = vunpack.c.h.b16 %v362
        %v443 = vunpack.c.l.b16 %v363
        %v444 = vunpack.c.h.b16 %v363
        %v445 = vunpack.c.l.b16 %v364
        %v446 = vunpack.c.h.b16 %v364
        %v447 = vunpack.c.l.b16 %v365
        %v448 = vunpack.c.h.b16 %v365
        %v449 = vunpack.c.l.b16 %v366
        %v450 = vunpack.c.h.b16 %v366
        %v451 = vpack.c.b16 %v421, %v419
        %v452 = vpack.c.b16 %v422, %v420
        %v453 = vpack.c.b16 %v425, %v423
        %v454 = vpack.c.b16 %v426, %v424
        %v455 = vpack.c.b16 %v429, %v427
        %v456 = vpack.c.b16 %v430, %v428
        %v457 = vpack.c.b16 %v433, %v431
        %v458 = vpack.c.b16 %v434, %v432
        %v459 = vpack.c.b16 %v437, %v435
        %v460 = vpack.c.b16 %v438, %v436
        %v461 = vpack.c.b16 %v441, %v439
        %v462 = vpack.c.b16 %v442, %v440
        %v463 = vpack.c.b16 %v445, %v443
        %v464 = vpack.c.b16 %v446, %v444
        %v465 = vpack.c.b16 %v449, %v447
        %v466 = vpack.c.b16 %v450, %v448
        %483 = vmatprep.subr.bf16.mxu0 %v452
        %484 = vmatpush1.bf16.msra.mxu0 %v451
        %485 = vmatprep.subr.bf16.mxu0 %v454
        %486 = vmatpush1.bf16.msra.mxu0 %v453
        %487 = vmatprep.subr.bf16.mxu0 %v456
        %488 = vmatpush1.bf16.msra.mxu0 %v455
        %489 = vmatprep.subr.bf16.mxu0 %v458
        %490 = vmatpush1.bf16.msra.mxu0 %v457
        %491 = vmatprep.subr.bf16.mxu0 %v460
        %492 = vmatpush1.bf16.msra.mxu0 %v459
        %493 = vmatprep.subr.bf16.mxu0 %v462
        %494 = vmatpush1.bf16.msra.mxu0 %v461
        %495 = vmatprep.subr.bf16.mxu0 %v464
        %496 = vmatpush1.bf16.msra.mxu0 %v463
        %497 = vmatprep.subr.bf16.mxu0 %v466
        %498 = vmatpush1.bf16.msra.mxu0 %v465
        %499 = vmatprep.subr.bf16.mxu0 0
        %500 = vmatpush1.bf16.msra.mxu0 0
        %501 = vmatprep.subr.bf16.mxu0 0
        %502 = vmatpush1.bf16.msra.mxu0 0
        %503 = vmatprep.subr.bf16.mxu0 0
        %504 = vmatpush1.bf16.msra.mxu0 0
        %505 = vmatprep.subr.bf16.mxu0 0
        %506 = vmatpush1.bf16.msra.mxu0 0
        %507 = vmatprep.subr.bf16.mxu0 0
        %508 = vmatpush1.bf16.msra.mxu0 0
        %509 = vmatprep.subr.bf16.mxu0 0
        %510 = vmatpush1.bf16.msra.mxu0 0
        %511 = vmatprep.subr.bf16.mxu0 0
        %512 = vmatpush1.bf16.msra.mxu0 0
        %513 = vmatprep.subr.bf16.mxu0 0
        %514 = vmatpush1.bf16.msra.mxu0 0
        %515 = vmatprep.mubr.bf16.mxu0 0
        %516 = vmatmul.mubr.bf16.gmra.mrb[0].mxu0 %v395
        %v517 = vpop.f32.mrb[0].mxu0
        %v518 = vadd.f32 %v372, %v517
        %v519 = vpop.f32.mrb[0].mxu0
        %v520 = vadd.f32 %v376, %v519
        %v521 = vpop.f32.mrb[0].mxu0
        %v522 = vadd.f32 %v372, %v521
        %v523 = vpop.f32.mrb[0].mxu0
        %v524 = vadd.f32 %v376, %v523
        %525 = vmatprep.mubr.bf16.mxu0 0
        %526 = vmatmul.mubr.bf16.gmra.mrb[0].mxu0 %v396
        %v527 = vpop.f32.mrb[0].mxu0
        %v528 = vadd.f32 %v372, %v527
        %v529 = vpop.f32.mrb[0].mxu0
        %v530 = vadd.f32 %v376, %v529
        %v531 = vpop.f32.mrb[0].mxu0
        %v532 = vadd.f32 %v372, %v531
        %v533 = vpop.f32.mrb[0].mxu0
        %v534 = vadd.f32 %v376, %v533
        %535 = vmatprep.mubr.bf16.mxu0 0
        %536 = vmatmul.mubr.bf16.gmra.mrb[0].mxu0 %v397
        %v537 = vpop.f32.mrb[0].mxu0
        %v538 = vadd.f32 %v372, %v537
        %v539 = vpop.f32.mrb[0].mxu0
        %v540 = vadd.f32 %v376, %v539
        %v541 = vpop.f32.mrb[0].mxu0
        %v542 = vadd.f32 %v372, %v541
        %v543 = vpop.f32.mrb[0].mxu0
        %v544 = vadd.f32 %v376, %v543
        %545 = vmatprep.mubr.bf16.mxu0 0
        %546 = vmatmul.mubr.bf16.gmra.mrb[0].mxu0 %v398
        %v547 = vpop.f32.mrb[0].mxu0
        %v548 = vadd.f32 %v372, %v547
        %v549 = vpop.f32.mrb[0].mxu0
        %v550 = vadd.f32 %v376, %v549
        %v551 = vpop.f32.mrb[0].mxu0
        %v552 = vadd.f32 %v372, %v551
        %v553 = vpop.f32.mrb[0].mxu0
        %v554 = vadd.f32 %v376, %v553
        %555 = vdwg.mxu0
        %v556 = vld [vmem:[%s3] sm:$0xff]
        %v557 = vld [vmem:[%s3 + $0x8] sm:$0xff]
        %v558 = vld [vmem:[%s3 + $0x10] sm:$0xff]
        %v559 = vld [vmem:[%s3 + $0x18] sm:$0xff]
        %v560 = vld [vmem:[%s3 + $0x20] sm:$0xff]
        %v561 = vld [vmem:[%s3 + $0x28] sm:$0xff]
        %v562 = vld [vmem:[%s3 + $0x30] sm:$0xff]
        %v563 = vld [vmem:[%s3 + $0x38] sm:$0xff]
        %v564 = vld [vmem:[%s3 + $0x40] sm:$0xff]
        %v565 = vld [vmem:[%s3 + $0x48] sm:$0xff]
        %v566 = vld [vmem:[%s3 + $0x50] sm:$0xff]
        %v567 = vld [vmem:[%s3 + $0x58] sm:$0xff]
        %v568 = vld [vmem:[%s3 + $0x60] sm:$0xff]
        %v569 = vld [vmem:[%s3 + $0x68] sm:$0xff]
        %v570 = vld [vmem:[%s3 + $0x70] sm:$0xff]
        %v571 = vld [vmem:[%s3 + $0x78] sm:$0xff]
        %s572 = scalar_lea.vmem %s3, 128
        %v573 = vld [vmem:[%s572] sm:$0xff]
        %v574 = vld [vmem:[%s572 + $0x8] sm:$0xff]
        %v575 = vld [vmem:[%s572 + $0x10] sm:$0xff]
        %v576 = vld [vmem:[%s572 + $0x18] sm:$0xff]
        %v577 = vld [vmem:[%s572 + $0x20] sm:$0xff]
        %v578 = vld [vmem:[%s572 + $0x28] sm:$0xff]
        %v579 = vld [vmem:[%s572 + $0x30] sm:$0xff]
        %v580 = vld [vmem:[%s572 + $0x38] sm:$0xff]
        %v581 = vld [vmem:[%s572 + $0x40] sm:$0xff]
        %v582 = vld [vmem:[%s572 + $0x48] sm:$0xff]
        %v583 = vld [vmem:[%s572 + $0x50] sm:$0xff]
        %v584 = vld [vmem:[%s572 + $0x58] sm:$0xff]
        %v585 = vld [vmem:[%s572 + $0x60] sm:$0xff]
        %v586 = vld [vmem:[%s572 + $0x68] sm:$0xff]
        %v587 = vld [vmem:[%s572 + $0x70] sm:$0xff]
        %v588 = vld [vmem:[%s572 + $0x78] sm:$0xff]
        %v589 = vld [vmem:[%s4] ss:$2 sm:$0x3]
        %s590 = scalar_lea.vmem %s4, 1
        %v591 = vld [vmem:[%s590] ss:$2 sm:$0x3]
        %p592 = scmp.gt.s32.totalorder %s29, 0
        %s593 = scalar_select %p592, 1, 0
        %v594 = vstv %s593
        %vm595 = vcmp.eq.s32.totalorder %v594, 1
        %v596 = vsel %vm595, %v589, 0.0
        %v597 = vld [vmem:[#allocation2] sm:$0xff]
        %v598 = vpack.c.bf16 %v597, %v597
        %v615 = vunpack.c.l.b16 %v556
        %v616 = vunpack.c.h.b16 %v556
        %v617 = vunpack.c.l.b16 %v557
        %v618 = vunpack.c.h.b16 %v557
        %v619 = vunpack.c.l.b16 %v558
        %v620 = vunpack.c.h.b16 %v558
        %v621 = vunpack.c.l.b16 %v559
        %v622 = vunpack.c.h.b16 %v559
        %v623 = vunpack.c.l.b16 %v560
        %v624 = vunpack.c.h.b16 %v560
        %v625 = vunpack.c.l.b16 %v561
        %v626 = vunpack.c.h.b16 %v561
        %v627 = vunpack.c.l.b16 %v562
        %v628 = vunpack.c.h.b16 %v562
        %v629 = vunpack.c.l.b16 %v563
        %v630 = vunpack.c.h.b16 %v563
        %v631 = vunpack.c.l.b16 %v564
        %v632 = vunpack.c.h.b16 %v564
        %v633 = vunpack.c.l.b16 %v565
        %v634 = vunpack.c.h.b16 %v565
        %v635 = vunpack.c.l.b16 %v566
        %v636 = vunpack.c.h.b16 %v566
        %v637 = vunpack.c.l.b16 %v567
        %v638 = vunpack.c.h.b16 %v567
        %v639 = vunpack.c.l.b16 %v568
        %v640 = vunpack.c.h.b16 %v568
        %v641 = vunpack.c.l.b16 %v569
        %v642 = vunpack.c.h.b16 %v569
        %v643 = vunpack.c.l.b16 %v570
        %v644 = vunpack.c.h.b16 %v570
        %v645 = vunpack.c.l.b16 %v571
        %v646 = vunpack.c.h.b16 %v571
        %v647 = vpack.c.b16 %v617, %v615
        %v648 = vpack.c.b16 %v618, %v616
        %v649 = vpack.c.b16 %v621, %v619
        %v650 = vpack.c.b16 %v622, %v620
        %v651 = vpack.c.b16 %v625, %v623
        %v652 = vpack.c.b16 %v626, %v624
        %v653 = vpack.c.b16 %v629, %v627
        %v654 = vpack.c.b16 %v630, %v628
        %v655 = vpack.c.b16 %v633, %v631
        %v656 = vpack.c.b16 %v634, %v632
        %v657 = vpack.c.b16 %v637, %v635
        %v658 = vpack.c.b16 %v638, %v636
        %v659 = vpack.c.b16 %v641, %v639
        %v660 = vpack.c.b16 %v642, %v640
        %v661 = vpack.c.b16 %v645, %v643
        %v662 = vpack.c.b16 %v646, %v644
        %679 = vmatprep.subr.bf16.mxu0 %v648
        %680 = vmatpush1.bf16.msra.mxu0 %v647
        %681 = vmatprep.subr.bf16.mxu0 %v650
        %682 = vmatpush1.bf16.msra.mxu0 %v649
        %683 = vmatprep.subr.bf16.mxu0 %v652
        %684 = vmatpush1.bf16.msra.mxu0 %v651
        %685 = vmatprep.subr.bf16.mxu0 %v654
        %686 = vmatpush1.bf16.msra.mxu0 %v653
        %687 = vmatprep.subr.bf16.mxu0 %v656
        %688 = vmatpush1.bf16.msra.mxu0 %v655
        %689 = vmatprep.subr.bf16.mxu0 %v658
        %690 = vmatpush1.bf16.msra.mxu0 %v657
        %691 = vmatprep.subr.bf16.mxu0 %v660
        %692 = vmatpush1.bf16.msra.mxu0 %v659
        %693 = vmatprep.subr.bf16.mxu0 %v662
        %694 = vmatpush1.bf16.msra.mxu0 %v661
        %695 = vmatprep.subr.bf16.mxu0 0
        %696 = vmatpush1.bf16.msra.mxu0 0
        %697 = vmatprep.subr.bf16.mxu0 0
        %698 = vmatpush1.bf16.msra.mxu0 0
        %699 = vmatprep.subr.bf16.mxu0 0
        %700 = vmatpush1.bf16.msra.mxu0 0
        %701 = vmatprep.subr.bf16.mxu0 0
        %702 = vmatpush1.bf16.msra.mxu0 0
        %703 = vmatprep.subr.bf16.mxu0 0
        %704 = vmatpush1.bf16.msra.mxu0 0
        %705 = vmatprep.subr.bf16.mxu0 0
        %706 = vmatpush1.bf16.msra.mxu0 0
        %707 = vmatprep.subr.bf16.mxu0 0
        %708 = vmatpush1.bf16.msra.mxu0 0
        %709 = vmatprep.subr.bf16.mxu0 0
        %710 = vmatpush1.bf16.msra.mxu0 0
        %711 = vmatprep.mubr.bf16.mxu0 0
        %712 = vmatmul.mubr.bf16.gmra.mrb[0].mxu0 %v598
        %v713 = vpop.f32.mrb[0].mxu0
        %v714 = vadd.f32 0.0, %v713
        %v715 = vpop.f32.mrb[0].mxu0
        %v716 = vadd.f32 0.0, %v715
        %v717 = vpop.f32.mrb[0].mxu0
        %v718 = vpop.f32.mrb[0].mxu0
        %719 = vdwg.mxu0
        %v720 = vadd.f32 %v518, %v714
        %v721 = vadd.f32 %v520, %v716
        %v723 = vlaneseq
        %v724 = vshrl.u32 %v723, 7
        %v725 = vsub.s32 0, %v724
        %v726 = vrot.slane %v596, %v725
        %v727 = vlaneseq
        %v728 = vshrl.u32 %v727, 7
        %v729 = vsub.s32 1, %v728
        %v730 = vrot.slane %v596, %v729
        %v733 = vadd.f32 %v720, %v726
        %v734 = vadd.f32 %v721, %v730
        %v735 = vtanh.pop %v733
        %v736 = vxor.u32 %v734, 2147483648
        %v737 = vmul.f32 %v736, 1.442695
        %v738 = vpow.pop %v737
        %v739 = vadd.f32 %v738, 1.0
        %v740 = vrcp.pop %v739
        %v741 = vmul.f32 1.0, %v740
        %v742 = vmul.f32 %v735, %v741
        %v743 = vsub.f32 1.0, %v741
        %v744 = vmul.f32 %v597, %v743
        %v745 = vadd.f32 %v742, %v744
        %v747 = vcombine.high %v745, %v745
        %v749 = vunpack.c.l.s4 1966171168
        %v750 = vunpack.c.0.s8 %v749
        %v751 = vlaneseq
        %v752 = vshrl.u32 %v751, 7
        %v753 = vsub.s32 %v750, %v752
        %v754 = vrot.slane %v745, %v753
        %v756 = vunpack.c.l.s4 1966171168
        %v757 = vunpack.c.0.s8 %v756
        %v758 = vlaneseq
        %v759 = vshrl.u32 %v758, 7
        %v760 = vsub.s32 %v757, %v759
        %v761 = vrot.slane %v747, %v760
        %v762 = vcombine.high %v754, %v754
        %v763 = vcombine.high %v761, %v761
        %v765 = vunpack.c.l.s4 1966171168
        %v766 = vunpack.c.0.s8 %v765
        %v767 = vlaneseq
        %v768 = vshrl.u32 %v767, 7
        %v769 = vsub.s32 %v766, %v768
        %v770 = vrot.slane %v754, %v769
        %v772 = vunpack.c.l.s4 1966171168
        %v773 = vunpack.c.0.s8 %v772
        %v774 = vlaneseq
        %v775 = vshrl.u32 %v774, 7
        %v776 = vsub.s32 %v773, %v775
        %v777 = vrot.slane %v761, %v776
        %v779 = vunpack.c.l.s4 1966171168
        %v780 = vunpack.c.0.s8 %v779
        %v781 = vlaneseq
        %v782 = vshrl.u32 %v781, 7
        %v783 = vsub.s32 %v780, %v782
        %v784 = vrot.slane %v762, %v783
        %v786 = vunpack.c.l.s4 1966171168
        %v787 = vunpack.c.0.s8 %v786
        %v788 = vlaneseq
        %v789 = vshrl.u32 %v788, 7
        %v790 = vsub.s32 %v787, %v789
        %v791 = vrot.slane %v763, %v790
        %v792 = vcombine.high %v770, %v770
        %v793 = vcombine.high %v777, %v777
        %v794 = vcombine.high %v784, %v784
        %v795 = vcombine.high %v791, %v791
        %804 = vst [vmem:[%s323] sm:$0x1] %v770
        %805 = vst [vmem:[%s323 + $0x10] sm:$0x1] %v784
        %806 = vst [vmem:[%s323 + $0x20] sm:$0x1] %v792
        %807 = vst [vmem:[%s323 + $0x30] sm:$0x1] %v794
        %808 = vst [vmem:[%s323 + $0x40] sm:$0x1] %v777
        %809 = vst [vmem:[%s323 + $0x50] sm:$0x1] %v791
        %810 = vst [vmem:[%s323 + $0x60] sm:$0x1] %v793
        %811 = vst [vmem:[%s323 + $0x70] sm:$0x1] %v795
        %v812 = vpack.c.bf16 %v745, %v745
        %v814 = vlaneseq
        %v815 = vshrl.u32 %v814, 7
        %v816 = vsub.s32 0, %v815
        %v817 = vrot.slane %v591, %v816
        %v818 = vlaneseq
        %v819 = vshrl.u32 %v818, 7
        %v820 = vsub.s32 1, %v819
        %v821 = vrot.slane %v591, %v820
        %v840 = vunpack.c.l.b16 %v573
        %v841 = vunpack.c.h.b16 %v573
        %v842 = vunpack.c.l.b16 %v574
        %v843 = vunpack.c.h.b16 %v574
        %v844 = vunpack.c.l.b16 %v575
        %v845 = vunpack.c.h.b16 %v575
        %v846 = vunpack.c.l.b16 %v576
        %v847 = vunpack.c.h.b16 %v576
        %v848 = vunpack.c.l.b16 %v577
        %v849 = vunpack.c.h.b16 %v577
        %v850 = vunpack.c.l.b16 %v578
        %v851 = vunpack.c.h.b16 %v578
        %v852 = vunpack.c.l.b16 %v579
        %v853 = vunpack.c.h.b16 %v579
        %v854 = vunpack.c.l.b16 %v580
        %v855 = vunpack.c.h.b16 %v580
        %v856 = vunpack.c.l.b16 %v581
        %v857 = vunpack.c.h.b16 %v581
        %v858 = vunpack.c.l.b16 %v582
        %v859 = vunpack.c.h.b16 %v582
        %v860 = vunpack.c.l.b16 %v583
        %v861 = vunpack.c.h.b16 %v583
        %v862 = vunpack.c.l.b16 %v584
        %v863 = vunpack.c.h.b16 %v584
        %v864 = vunpack.c.l.b16 %v585
        %v865 = vunpack.c.h.b16 %v585
        %v866 = vunpack.c.l.b16 %v586
        %v867 = vunpack.c.h.b16 %v586
        %v868 = vunpack.c.l.b16 %v587
        %v869 = vunpack.c.h.b16 %v587
        %v870 = vunpack.c.l.b16 %v588
        %v871 = vunpack.c.h.b16 %v588
        %v872 = vpack.c.b16 %v842, %v840
        %v873 = vpack.c.b16 %v843, %v841
        %v874 = vpack.c.b16 %v846, %v844
        %v875 = vpack.c.b16 %v847, %v845
        %v876 = vpack.c.b16 %v850, %v848
        %v877 = vpack.c.b16 %v851, %v849
        %v878 = vpack.c.b16 %v854, %v852
        %v879 = vpack.c.b16 %v855, %v853
        %v880 = vpack.c.b16 %v858, %v856
        %v881 = vpack.c.b16 %v859, %v857
        %v882 = vpack.c.b16 %v862, %v860
        %v883 = vpack.c.b16 %v863, %v861
        %v884 = vpack.c.b16 %v866, %v864
        %v885 = vpack.c.b16 %v867, %v865
        %v886 = vpack.c.b16 %v870, %v868
        %v887 = vpack.c.b16 %v871, %v869
        %904 = vmatprep.subr.bf16.mxu0 %v873
        %905 = vmatpush1.bf16.msra.mxu0 %v872
        %906 = vmatprep.subr.bf16.mxu0 %v875
        %907 = vmatpush1.bf16.msra.mxu0 %v874
        %908 = vmatprep.subr.bf16.mxu0 %v877
        %909 = vmatpush1.bf16.msra.mxu0 %v876
        %910 = vmatprep.subr.bf16.mxu0 %v879
        %911 = vmatpush1.bf16.msra.mxu0 %v878
        %912 = vmatprep.subr.bf16.mxu0 %v881
        %913 = vmatpush1.bf16.msra.mxu0 %v880
        %914 = vmatprep.subr.bf16.mxu0 %v883
        %915 = vmatpush1.bf16.msra.mxu0 %v882
        %916 = vmatprep.subr.bf16.mxu0 %v885
        %917 = vmatpush1.bf16.msra.mxu0 %v884
        %918 = vmatprep.subr.bf16.mxu0 %v887
        %919 = vmatpush1.bf16.msra.mxu0 %v886
        %920 = vmatprep.subr.bf16.mxu0 0
        %921 = vmatpush1.bf16.msra.mxu0 0
        %922 = vmatprep.subr.bf16.mxu0 0
        %923 = vmatpush1.bf16.msra.mxu0 0
        %924 = vmatprep.subr.bf16.mxu0 0
        %925 = vmatpush1.bf16.msra.mxu0 0
        %926 = vmatprep.subr.bf16.mxu0 0
        %927 = vmatpush1.bf16.msra.mxu0 0
        %928 = vmatprep.subr.bf16.mxu0 0
        %929 = vmatpush1.bf16.msra.mxu0 0
        %930 = vmatprep.subr.bf16.mxu0 0
        %931 = vmatpush1.bf16.msra.mxu0 0
        %932 = vmatprep.subr.bf16.mxu0 0
        %933 = vmatpush1.bf16.msra.mxu0 0
        %934 = vmatprep.subr.bf16.mxu0 0
        %935 = vmatpush1.bf16.msra.mxu0 0
        %936 = vmatprep.mubr.bf16.mxu0 0
        %937 = vmatmul.mubr.bf16.gmra.mrb[0].mxu0 %v812
        %v938 = vpop.f32.mrb[0].mxu0
        %v939 = vadd.f32 %v817, %v938
        %v940 = vpop.f32.mrb[0].mxu0
        %v941 = vadd.f32 %v821, %v940
        %v942 = vpop.f32.mrb[0].mxu0
        %v943 = vpop.f32.mrb[0].mxu0
        %944 = vdwg.mxu0
        %v945 = vtanh.pop %v939
        %v946 = vxor.u32 %v941, 2147483648
        %v947 = vmul.f32 %v946, 1.442695
        %v948 = vpow.pop %v947
        %v949 = vadd.f32 %v948, 1.0
        %v950 = vrcp.pop %v949
        %v951 = vmul.f32 1.0, %v950
        %v952 = vmul.f32 %v945, %v951
        %v953 = vsub.f32 1.0, %v951
        %v954 = vmul.f32 %v745, %v953
        %v955 = vadd.f32 %v952, %v954
        %v957 = vcombine.high %v955, %v955
        %v959 = vunpack.c.l.s4 1966171168
        %v960 = vunpack.c.0.s8 %v959
        %v961 = vlaneseq
        %v962 = vshrl.u32 %v961, 7
        %v963 = vsub.s32 %v960, %v962
        %v964 = vrot.slane %v955, %v963
        %v966 = vunpack.c.l.s4 1966171168
        %v967 = vunpack.c.0.s8 %v966
        %v968 = vlaneseq
        %v969 = vshrl.u32 %v968, 7
        %v970 = vsub.s32 %v967, %v969
        %v971 = vrot.slane %v957, %v970
        %v972 = vcombine.high %v964, %v964
        %v973 = vcombine.high %v971, %v971
        %v975 = vunpack.c.l.s4 1966171168
        %v976 = vunpack.c.0.s8 %v975
        %v977 = vlaneseq
        %v978 = vshrl.u32 %v977, 7
        %v979 = vsub.s32 %v976, %v978
        %v980 = vrot.slane %v964, %v979
        %v982 = vunpack.c.l.s4 1966171168
        %v983 = vunpack.c.0.s8 %v982
        %v984 = vlaneseq
        %v985 = vshrl.u32 %v984, 7
        %v986 = vsub.s32 %v983, %v985
        %v987 = vrot.slane %v971, %v986
        %v989 = vunpack.c.l.s4 1966171168
        %v990 = vunpack.c.0.s8 %v989
        %v991 = vlaneseq
        %v992 = vshrl.u32 %v991, 7
        %v993 = vsub.s32 %v990, %v992
        %v994 = vrot.slane %v972, %v993
        %v996 = vunpack.c.l.s4 1966171168
        %v997 = vunpack.c.0.s8 %v996
        %v998 = vlaneseq
        %v999 = vshrl.u32 %v998, 7
        %v1000 = vsub.s32 %v997, %v999
        %v1001 = vrot.slane %v973, %v1000
        %v1002 = vcombine.high %v980, %v980
        %v1003 = vcombine.high %v987, %v987
        %v1004 = vcombine.high %v994, %v994
        %v1005 = vcombine.high %v1001, %v1001
        %1014 = vst [vmem:[%s323 + $0x8] sm:$0x1] %v980
        %1015 = vst [vmem:[%s323 + $0x18] sm:$0x1] %v994
        %1016 = vst [vmem:[%s323 + $0x28] sm:$0x1] %v1002
        %1017 = vst [vmem:[%s323 + $0x38] sm:$0x1] %v1004
        %1018 = vst [vmem:[%s323 + $0x48] sm:$0x1] %v987
        %1019 = vst [vmem:[%s323 + $0x58] sm:$0x1] %v1001
        %1020 = vst [vmem:[%s323 + $0x68] sm:$0x1] %v1003
        %1021 = vst [vmem:[%s323 + $0x78] sm:$0x1] %v1005
        %v1022 = vpack.c.bf16 %v955, %v955
        %1023 = vmatprep.subr.bf16.mxu0 %v648
        %1024 = vmatpush1.bf16.msra.mxu0 %v647
        %1025 = vmatprep.subr.bf16.mxu0 %v650
        %1026 = vmatpush1.bf16.msra.mxu0 %v649
        %1027 = vmatprep.subr.bf16.mxu0 %v652
        %1028 = vmatpush1.bf16.msra.mxu0 %v651
        %1029 = vmatprep.subr.bf16.mxu0 %v654
        %1030 = vmatpush1.bf16.msra.mxu0 %v653
        %1031 = vmatprep.subr.bf16.mxu0 %v656
        %1032 = vmatpush1.bf16.msra.mxu0 %v655
        %1033 = vmatprep.subr.bf16.mxu0 %v658
        %1034 = vmatpush1.bf16.msra.mxu0 %v657
        %1035 = vmatprep.subr.bf16.mxu0 %v660
        %1036 = vmatpush1.bf16.msra.mxu0 %v659
        %1037 = vmatprep.subr.bf16.mxu0 %v662
        %1038 = vmatpush1.bf16.msra.mxu0 %v661
        %1039 = vmatprep.subr.bf16.mxu0 0
        %1040 = vmatpush1.bf16.msra.mxu0 0
        %1041 = vmatprep.subr.bf16.mxu0 0
        %1042 = vmatpush1.bf16.msra.mxu0 0
        %1043 = vmatprep.subr.bf16.mxu0 0
        %1044 = vmatpush1.bf16.msra.mxu0 0
        %1045 = vmatprep.subr.bf16.mxu0 0
        %1046 = vmatpush1.bf16.msra.mxu0 0
        %1047 = vmatprep.subr.bf16.mxu0 0
        %1048 = vmatpush1.bf16.msra.mxu0 0
        %1049 = vmatprep.subr.bf16.mxu0 0
        %1050 = vmatpush1.bf16.msra.mxu0 0
        %1051 = vmatprep.subr.bf16.mxu0 0
        %1052 = vmatpush1.bf16.msra.mxu0 0
        %1053 = vmatprep.subr.bf16.mxu0 0
        %1054 = vmatpush1.bf16.msra.mxu0 0
        %1055 = vmatprep.mubr.bf16.mxu0 0
        %1056 = vmatmul.mubr.bf16.gmra.mrb[0].mxu0 %v1022
        %v1057 = vpop.f32.mrb[0].mxu0
        %v1058 = vadd.f32 0.0, %v1057
        %v1059 = vpop.f32.mrb[0].mxu0
        %v1060 = vadd.f32 0.0, %v1059
        %v1061 = vpop.f32.mrb[0].mxu0
        %v1062 = vpop.f32.mrb[0].mxu0
        %1063 = vdwg.mxu0
        %v1064 = vadd.f32 %v522, %v1058
        %v1065 = vadd.f32 %v524, %v1060
        %v1067 = vlaneseq
        %v1068 = vshrl.u32 %v1067, 7
        %v1069 = vsub.s32 0, %v1068
        %v1070 = vrot.slane %v589, %v1069
        %v1071 = vlaneseq
        %v1072 = vshrl.u32 %v1071, 7
        %v1073 = vsub.s32 1, %v1072
        %v1074 = vrot.slane %v589, %v1073
        %v1077 = vadd.f32 %v1064, %v1070
        %v1078 = vadd.f32 %v1065, %v1074
        %v1079 = vtanh.pop %v1077
        %v1080 = vxor.u32 %v1078, 2147483648
        %v1081 = vmul.f32 %v1080, 1.442695
        %v1082 = vpow.pop %v1081
        %v1083 = vadd.f32 %v1082, 1.0
        %v1084 = vrcp.pop %v1083
        %v1085 = vmul.f32 1.0, %v1084
        %v1086 = vmul.f32 %v1079, %v1085
        %v1087 = vsub.f32 1.0, %v1085
        %v1088 = vmul.f32 %v955, %v1087
        %v1089 = vadd.f32 %v1086, %v1088
        %v1091 = vcombine.high %v1089, %v1089
        %v1093 = vunpack.c.l.s4 1966171168
        %v1094 = vunpack.c.0.s8 %v1093
        %v1095 = vlaneseq
        %v1096 = vshrl.u32 %v1095, 7
        %v1097 = vsub.s32 %v1094, %v1096
        %v1098 = vrot.slane %v1089, %v1097
        %v1100 = vunpack.c.l.s4 1966171168
        %v1101 = vunpack.c.0.s8 %v1100
        %v1102 = vlaneseq
        %v1103 = vshrl.u32 %v1102, 7
        %v1104 = vsub.s32 %v1101, %v1103
        %v1105 = vrot.slane %v1091, %v1104
        %v1106 = vcombine.high %v1098, %v1098
        %v1107 = vcombine.high %v1105, %v1105
        %v1109 = vunpack.c.l.s4 1966171168
        %v1110 = vunpack.c.0.s8 %v1109
        %v1111 = vlaneseq
        %v1112 = vshrl.u32 %v1111, 7
        %v1113 = vsub.s32 %v1110, %v1112
        %v1114 = vrot.slane %v1098, %v1113
        %v1116 = vunpack.c.l.s4 1966171168
        %v1117 = vunpack.c.0.s8 %v1116
        %v1118 = vlaneseq
        %v1119 = vshrl.u32 %v1118, 7
        %v1120 = vsub.s32 %v1117, %v1119
        %v1121 = vrot.slane %v1105, %v1120
        %v1123 = vunpack.c.l.s4 1966171168
        %v1124 = vunpack.c.0.s8 %v1123
        %v1125 = vlaneseq
        %v1126 = vshrl.u32 %v1125, 7
        %v1127 = vsub.s32 %v1124, %v1126
        %v1128 = vrot.slane %v1106, %v1127
        %v1130 = vunpack.c.l.s4 1966171168
        %v1131 = vunpack.c.0.s8 %v1130
        %v1132 = vlaneseq
        %v1133 = vshrl.u32 %v1132, 7
        %v1134 = vsub.s32 %v1131, %v1133
        %v1135 = vrot.slane %v1107, %v1134
        %v1136 = vcombine.high %v1114, %v1114
        %v1137 = vcombine.high %v1121, %v1121
        %v1138 = vcombine.high %v1128, %v1128
        %v1139 = vcombine.high %v1135, %v1135
        %1148 = vst [vmem:[%s323 + $0x1] sm:$0x1] %v1114
        %1149 = vst [vmem:[%s323 + $0x11] sm:$0x1] %v1128
        %1150 = vst [vmem:[%s323 + $0x21] sm:$0x1] %v1136
        %1151 = vst [vmem:[%s323 + $0x31] sm:$0x1] %v1138
        %1152 = vst [vmem:[%s323 + $0x41] sm:$0x1] %v1121
        %1153 = vst [vmem:[%s323 + $0x51] sm:$0x1] %v1135
        %1154 = vst [vmem:[%s323 + $0x61] sm:$0x1] %v1137
        %1155 = vst [vmem:[%s323 + $0x71] sm:$0x1] %v1139
        %v1156 = vpack.c.bf16 %v1089, %v1089
        %1157 = vmatprep.subr.bf16.mxu0 %v873
        %1158 = vmatpush1.bf16.msra.mxu0 %v872
        %1159 = vmatprep.subr.bf16.mxu0 %v875
        %1160 = vmatpush1.bf16.msra.mxu0 %v874
        %1161 = vmatprep.subr.bf16.mxu0 %v877
        %1162 = vmatpush1.bf16.msra.mxu0 %v876
        %1163 = vmatprep.subr.bf16.mxu0 %v879
        %1164 = vmatpush1.bf16.msra.mxu0 %v878
        %1165 = vmatprep.subr.bf16.mxu0 %v881
        %1166 = vmatpush1.bf16.msra.mxu0 %v880
        %1167 = vmatprep.subr.bf16.mxu0 %v883
        %1168 = vmatpush1.bf16.msra.mxu0 %v882
        %1169 = vmatprep.subr.bf16.mxu0 %v885
        %1170 = vmatpush1.bf16.msra.mxu0 %v884
        %1171 = vmatprep.subr.bf16.mxu0 %v887
        %1172 = vmatpush1.bf16.msra.mxu0 %v886
        %1173 = vmatprep.subr.bf16.mxu0 0
        %1174 = vmatpush1.bf16.msra.mxu0 0
        %1175 = vmatprep.subr.bf16.mxu0 0
        %1176 = vmatpush1.bf16.msra.mxu0 0
        %1177 = vmatprep.subr.bf16.mxu0 0
        %1178 = vmatpush1.bf16.msra.mxu0 0
        %1179 = vmatprep.subr.bf16.mxu0 0
        %1180 = vmatpush1.bf16.msra.mxu0 0
        %1181 = vmatprep.subr.bf16.mxu0 0
        %1182 = vmatpush1.bf16.msra.mxu0 0
        %1183 = vmatprep.subr.bf16.mxu0 0
        %1184 = vmatpush1.bf16.msra.mxu0 0
        %1185 = vmatprep.subr.bf16.mxu0 0
        %1186 = vmatpush1.bf16.msra.mxu0 0
        %1187 = vmatprep.subr.bf16.mxu0 0
        %1188 = vmatpush1.bf16.msra.mxu0 0
        %1189 = vmatprep.mubr.bf16.mxu0 0
        %1190 = vmatmul.mubr.bf16.gmra.mrb[0].mxu0 %v1156
        %v1191 = vpop.f32.mrb[0].mxu0
        %v1192 = vadd.f32 %v817, %v1191
        %v1193 = vpop.f32.mrb[0].mxu0
        %v1194 = vadd.f32 %v821, %v1193
        %v1195 = vpop.f32.mrb[0].mxu0
        %v1196 = vpop.f32.mrb[0].mxu0
        %1197 = vdwg.mxu0
        %v1198 = vtanh.pop %v1192
        %v1199 = vxor.u32 %v1194, 2147483648
        %v1200 = vmul.f32 %v1199, 1.442695
        %v1201 = vpow.pop %v1200
        %v1202 = vadd.f32 %v1201, 1.0
        %v1203 = vrcp.pop %v1202
        %v1204 = vmul.f32 1.0, %v1203
        %v1205 = vmul.f32 %v1198, %v1204
        %v1206 = vsub.f32 1.0, %v1204
        %v1207 = vmul.f32 %v1089, %v1206
        %v1208 = vadd.f32 %v1205, %v1207
        %v1210 = vcombine.high %v1208, %v1208
        %v1212 = vunpack.c.l.s4 1966171168
        %v1213 = vunpack.c.0.s8 %v1212
        %v1214 = vlaneseq
        %v1215 = vshrl.u32 %v1214, 7
        %v1216 = vsub.s32 %v1213, %v1215
        %v1217 = vrot.slane %v1208, %v1216
        %v1219 = vunpack.c.l.s4 1966171168
        %v1220 = vunpack.c.0.s8 %v1219
        %v1221 = vlaneseq
        %v1222 = vshrl.u32 %v1221, 7
        %v1223 = vsub.s32 %v1220, %v1222
        %v1224 = vrot.slane %v1210, %v1223
        %v1225 = vcombine.high %v1217, %v1217
        %v1226 = vcombine.high %v1224, %v1224
        %v1228 = vunpack.c.l.s4 1966171168
        %v1229 = vunpack.c.0.s8 %v1228
        %v1230 = vlaneseq
        %v1231 = vshrl.u32 %v1230, 7
        %v1232 = vsub.s32 %v1229, %v1231
        %v1233 = vrot.slane %v1217, %v1232
        %v1235 = vunpack.c.l.s4 1966171168
        %v1236 = vunpack.c.0.s8 %v1235
        %v1237 = vlaneseq
        %v1238 = vshrl.u32 %v1237, 7
        %v1239 = vsub.s32 %v1236, %v1238
        %v1240 = vrot.slane %v1224, %v1239
        %v1242 = vunpack.c.l.s4 1966171168
        %v1243 = vunpack.c.0.s8 %v1242
        %v1244 = vlaneseq
        %v1245 = vshrl.u32 %v1244, 7
        %v1246 = vsub.s32 %v1243, %v1245
        %v1247 = vrot.slane %v1225, %v1246
        %v1249 = vunpack.c.l.s4 1966171168
        %v1250 = vunpack.c.0.s8 %v1249
        %v1251 = vlaneseq
        %v1252 = vshrl.u32 %v1251, 7
        %v1253 = vsub.s32 %v1250, %v1252
        %v1254 = vrot.slane %v1226, %v1253
        %v1255 = vcombine.high %v1233, %v1233
        %v1256 = vcombine.high %v1240, %v1240
        %v1257 = vcombine.high %v1247, %v1247
        %v1258 = vcombine.high %v1254, %v1254
        %1267 = vst [vmem:[%s323 + $0x9] sm:$0x1] %v1233
        %1268 = vst [vmem:[%s323 + $0x19] sm:$0x1] %v1247
        %1269 = vst [vmem:[%s323 + $0x29] sm:$0x1] %v1255
        %1270 = vst [vmem:[%s323 + $0x39] sm:$0x1] %v1257
        %1271 = vst [vmem:[%s323 + $0x49] sm:$0x1] %v1240
        %1272 = vst [vmem:[%s323 + $0x59] sm:$0x1] %v1254
        %1273 = vst [vmem:[%s323 + $0x69] sm:$0x1] %v1256
        %1274 = vst [vmem:[%s323 + $0x79] sm:$0x1] %v1258
        %v1275 = vpack.c.bf16 %v1208, %v1208
        %1276 = vmatprep.subr.bf16.mxu0 %v648
        %1277 = vmatpush1.bf16.msra.mxu0 %v647
        %1278 = vmatprep.subr.bf16.mxu0 %v650
        %1279 = vmatpush1.bf16.msra.mxu0 %v649
        %1280 = vmatprep.subr.bf16.mxu0 %v652
        %1281 = vmatpush1.bf16.msra.mxu0 %v651
        %1282 = vmatprep.subr.bf16.mxu0 %v654
        %1283 = vmatpush1.bf16.msra.mxu0 %v653
        %1284 = vmatprep.subr.bf16.mxu0 %v656
        %1285 = vmatpush1.bf16.msra.mxu0 %v655
        %1286 = vmatprep.subr.bf16.mxu0 %v658
        %1287 = vmatpush1.bf16.msra.mxu0 %v657
        %1288 = vmatprep.subr.bf16.mxu0 %v660
        %1289 = vmatpush1.bf16.msra.mxu0 %v659
        %1290 = vmatprep.subr.bf16.mxu0 %v662
        %1291 = vmatpush1.bf16.msra.mxu0 %v661
        %1292 = vmatprep.subr.bf16.mxu0 0
        %1293 = vmatpush1.bf16.msra.mxu0 0
        %1294 = vmatprep.subr.bf16.mxu0 0
        %1295 = vmatpush1.bf16.msra.mxu0 0
        %1296 = vmatprep.subr.bf16.mxu0 0
        %1297 = vmatpush1.bf16.msra.mxu0 0
        %1298 = vmatprep.subr.bf16.mxu0 0
        %1299 = vmatpush1.bf16.msra.mxu0 0
        %1300 = vmatprep.subr.bf16.mxu0 0
        %1301 = vmatpush1.bf16.msra.mxu0 0
        %1302 = vmatprep.subr.bf16.mxu0 0
        %1303 = vmatpush1.bf16.msra.mxu0 0
        %1304 = vmatprep.subr.bf16.mxu0 0
        %1305 = vmatpush1.bf16.msra.mxu0 0
        %1306 = vmatprep.subr.bf16.mxu0 0
        %1307 = vmatpush1.bf16.msra.mxu0 0
        %1308 = vmatprep.mubr.bf16.mxu0 0
        %1309 = vmatmul.mubr.bf16.gmra.mrb[0].mxu0 %v1275
        %v1310 = vpop.f32.mrb[0].mxu0
        %v1311 = vadd.f32 0.0, %v1310
        %v1312 = vpop.f32.mrb[0].mxu0
        %v1313 = vadd.f32 0.0, %v1312
        %v1314 = vpop.f32.mrb[0].mxu0
        %v1315 = vpop.f32.mrb[0].mxu0
        %1316 = vdwg.mxu0
        %v1317 = vadd.f32 %v528, %v1311
        %v1318 = vadd.f32 %v530, %v1313
        %v1319 = vadd.f32 %v1317, %v1070
        %v1320 = vadd.f32 %v1318, %v1074
        %v1321 = vtanh.pop %v1319
        %v1322 = vxor.u32 %v1320, 2147483648
        %v1323 = vmul.f32 %v1322, 1.442695
        %v1324 = vpow.pop %v1323
        %v1325 = vadd.f32 %v1324, 1.0
        %v1326 = vrcp.pop %v1325
        %v1327 = vmul.f32 1.0, %v1326
        %v1328 = vmul.f32 %v1321, %v1327
        %v1329 = vsub.f32 1.0, %v1327
        %v1330 = vmul.f32 %v1208, %v1329
        %v1331 = vadd.f32 %v1328, %v1330
        %v1333 = vcombine.high %v1331, %v1331
        %v1335 = vunpack.c.l.s4 1966171168
        %v1336 = vunpack.c.0.s8 %v1335
        %v1337 = vlaneseq
        %v1338 = vshrl.u32 %v1337, 7
        %v1339 = vsub.s32 %v1336, %v1338
        %v1340 = vrot.slane %v1331, %v1339
        %v1342 = vunpack.c.l.s4 1966171168
        %v1343 = vunpack.c.0.s8 %v1342
        %v1344 = vlaneseq
        %v1345 = vshrl.u32 %v1344, 7
        %v1346 = vsub.s32 %v1343, %v1345
        %v1347 = vrot.slane %v1333, %v1346
        %v1348 = vcombine.high %v1340, %v1340
        %v1349 = vcombine.high %v1347, %v1347
        %v1351 = vunpack.c.l.s4 1966171168
        %v1352 = vunpack.c.0.s8 %v1351
        %v1353 = vlaneseq
        %v1354 = vshrl.u32 %v1353, 7
        %v1355 = vsub.s32 %v1352, %v1354
        %v1356 = vrot.slane %v1340, %v1355
        %v1358 = vunpack.c.l.s4 1966171168
        %v1359 = vunpack.c.0.s8 %v1358
        %v1360 = vlaneseq
        %v1361 = vshrl.u32 %v1360, 7
        %v1362 = vsub.s32 %v1359, %v1361
        %v1363 = vrot.slane %v1347, %v1362
        %v1365 = vunpack.c.l.s4 1966171168
        %v1366 = vunpack.c.0.s8 %v1365
        %v1367 = vlaneseq
        %v1368 = vshrl.u32 %v1367, 7
        %v1369 = vsub.s32 %v1366, %v1368
        %v1370 = vrot.slane %v1348, %v1369
        %v1372 = vunpack.c.l.s4 1966171168
        %v1373 = vunpack.c.0.s8 %v1372
        %v1374 = vlaneseq
        %v1375 = vshrl.u32 %v1374, 7
        %v1376 = vsub.s32 %v1373, %v1375
        %v1377 = vrot.slane %v1349, %v1376
        %v1378 = vcombine.high %v1356, %v1356
        %v1379 = vcombine.high %v1363, %v1363
        %v1380 = vcombine.high %v1370, %v1370
        %v1381 = vcombine.high %v1377, %v1377
        %1390 = vst [vmem:[%s323 + $0x2] sm:$0x1] %v1356
        %1391 = vst [vmem:[%s323 + $0x12] sm:$0x1] %v1370
        %1392 = vst [vmem:[%s323 + $0x22] sm:$0x1] %v1378
        %1393 = vst [vmem:[%s323 + $0x32] sm:$0x1] %v1380
        %1394 = vst [vmem:[%s323 + $0x42] sm:$0x1] %v1363
        %1395 = vst [vmem:[%s323 + $0x52] sm:$0x1] %v1377
        %1396 = vst [vmem:[%s323 + $0x62] sm:$0x1] %v1379
        %1397 = vst [vmem:[%s323 + $0x72] sm:$0x1] %v1381
        %v1398 = vpack.c.bf16 %v1331, %v1331
        %1399 = vmatprep.subr.bf16.mxu0 %v873
        %1400 = vmatpush1.bf16.msra.mxu0 %v872
        %1401 = vmatprep.subr.bf16.mxu0 %v875
        %1402 = vmatpush1.bf16.msra.mxu0 %v874
        %1403 = vmatprep.subr.bf16.mxu0 %v877
        %1404 = vmatpush1.bf16.msra.mxu0 %v876
        %1405 = vmatprep.subr.bf16.mxu0 %v879
        %1406 = vmatpush1.bf16.msra.mxu0 %v878
        %1407 = vmatprep.subr.bf16.mxu0 %v881
        %1408 = vmatpush1.bf16.msra.mxu0 %v880
        %1409 = vmatprep.subr.bf16.mxu0 %v883
        %1410 = vmatpush1.bf16.msra.mxu0 %v882
        %1411 = vmatprep.subr.bf16.mxu0 %v885
        %1412 = vmatpush1.bf16.msra.mxu0 %v884
        %1413 = vmatprep.subr.bf16.mxu0 %v887
        %1414 = vmatpush1.bf16.msra.mxu0 %v886
        %1415 = vmatprep.subr.bf16.mxu0 0
        %1416 = vmatpush1.bf16.msra.mxu0 0
        %1417 = vmatprep.subr.bf16.mxu0 0
        %1418 = vmatpush1.bf16.msra.mxu0 0
        %1419 = vmatprep.subr.bf16.mxu0 0
        %1420 = vmatpush1.bf16.msra.mxu0 0
        %1421 = vmatprep.subr.bf16.mxu0 0
        %1422 = vmatpush1.bf16.msra.mxu0 0
        %1423 = vmatprep.subr.bf16.mxu0 0
        %1424 = vmatpush1.bf16.msra.mxu0 0
        %1425 = vmatprep.subr.bf16.mxu0 0
        %1426 = vmatpush1.bf16.msra.mxu0 0
        %1427 = vmatprep.subr.bf16.mxu0 0
        %1428 = vmatpush1.bf16.msra.mxu0 0
        %1429 = vmatprep.subr.bf16.mxu0 0
        %1430 = vmatpush1.bf16.msra.mxu0 0
        %1431 = vmatprep.mubr.bf16.mxu0 0
        %1432 = vmatmul.mubr.bf16.gmra.mrb[0].mxu0 %v1398
        %v1433 = vpop.f32.mrb[0].mxu0
        %v1434 = vadd.f32 %v817, %v1433
        %v1435 = vpop.f32.mrb[0].mxu0
        %v1436 = vadd.f32 %v821, %v1435
        %v1437 = vpop.f32.mrb[0].mxu0
        %v1438 = vpop.f32.mrb[0].mxu0
        %1439 = vdwg.mxu0
        %v1440 = vtanh.pop %v1434
        %v1441 = vxor.u32 %v1436, 2147483648
        %v1442 = vmul.f32 %v1441, 1.442695
        %v1443 = vpow.pop %v1442
        %v1444 = vadd.f32 %v1443, 1.0
        %v1445 = vrcp.pop %v1444
        %v1446 = vmul.f32 1.0, %v1445
        %v1447 = vmul.f32 %v1440, %v1446
        %v1448 = vsub.f32 1.0, %v1446
        %v1449 = vmul.f32 %v1331, %v1448
        %v1450 = vadd.f32 %v1447, %v1449
        %v1452 = vcombine.high %v1450, %v1450
        %v1454 = vunpack.c.l.s4 1966171168
        %v1455 = vunpack.c.0.s8 %v1454
        %v1456 = vlaneseq
        %v1457 = vshrl.u32 %v1456, 7
        %v1458 = vsub.s32 %v1455, %v1457
        %v1459 = vrot.slane %v1450, %v1458
        %v1461 = vunpack.c.l.s4 1966171168
        %v1462 = vunpack.c.0.s8 %v1461
        %v1463 = vlaneseq
        %v1464 = vshrl.u32 %v1463, 7
        %v1465 = vsub.s32 %v1462, %v1464
        %v1466 = vrot.slane %v1452, %v1465
        %v1467 = vcombine.high %v1459, %v1459
        %v1468 = vcombine.high %v1466, %v1466
        %v1470 = vunpack.c.l.s4 1966171168
        %v1471 = vunpack.c.0.s8 %v1470
        %v1472 = vlaneseq
        %v1473 = vshrl.u32 %v1472, 7
        %v1474 = vsub.s32 %v1471, %v1473
        %v1475 = vrot.slane %v1459, %v1474
        %v1477 = vunpack.c.l.s4 1966171168
        %v1478 = vunpack.c.0.s8 %v1477
        %v1479 = vlaneseq
        %v1480 = vshrl.u32 %v1479, 7
        %v1481 = vsub.s32 %v1478, %v1480
        %v1482 = vrot.slane %v1466, %v1481
        %v1484 = vunpack.c.l.s4 1966171168
        %v1485 = vunpack.c.0.s8 %v1484
        %v1486 = vlaneseq
        %v1487 = vshrl.u32 %v1486, 7
        %v1488 = vsub.s32 %v1485, %v1487
        %v1489 = vrot.slane %v1467, %v1488
        %v1491 = vunpack.c.l.s4 1966171168
        %v1492 = vunpack.c.0.s8 %v1491
        %v1493 = vlaneseq
        %v1494 = vshrl.u32 %v1493, 7
        %v1495 = vsub.s32 %v1492, %v1494
        %v1496 = vrot.slane %v1468, %v1495
        %v1497 = vcombine.high %v1475, %v1475
        %v1498 = vcombine.high %v1482, %v1482
        %v1499 = vcombine.high %v1489, %v1489
        %v1500 = vcombine.high %v1496, %v1496
        %1509 = vst [vmem:[%s323 + $0xa] sm:$0x1] %v1475
        %1510 = vst [vmem:[%s323 + $0x1a] sm:$0x1] %v1489
        %1511 = vst [vmem:[%s323 + $0x2a] sm:$0x1] %v1497
        %1512 = vst [vmem:[%s323 + $0x3a] sm:$0x1] %v1499
        %1513 = vst [vmem:[%s323 + $0x4a] sm:$0x1] %v1482
        %1514 = vst [vmem:[%s323 + $0x5a] sm:$0x1] %v1496
        %1515 = vst [vmem:[%s323 + $0x6a] sm:$0x1] %v1498
        %1516 = vst [vmem:[%s323 + $0x7a] sm:$0x1] %v1500
        %v1517 = vpack.c.bf16 %v1450, %v1450
        %1518 = vmatprep.subr.bf16.mxu0 %v648
        %1519 = vmatpush1.bf16.msra.mxu0 %v647
        %1520 = vmatprep.subr.bf16.mxu0 %v650
        %1521 = vmatpush1.bf16.msra.mxu0 %v649
        %1522 = vmatprep.subr.bf16.mxu0 %v652
        %1523 = vmatpush1.bf16.msra.mxu0 %v651
        %1524 = vmatprep.subr.bf16.mxu0 %v654
        %1525 = vmatpush1.bf16.msra.mxu0 %v653
        %1526 = vmatprep.subr.bf16.mxu0 %v656
        %1527 = vmatpush1.bf16.msra.mxu0 %v655
        %1528 = vmatprep.subr.bf16.mxu0 %v658
        %1529 = vmatpush1.bf16.msra.mxu0 %v657
        %1530 = vmatprep.subr.bf16.mxu0 %v660
        %1531 = vmatpush1.bf16.msra.mxu0 %v659
        %1532 = vmatprep.subr.bf16.mxu0 %v662
        %1533 = vmatpush1.bf16.msra.mxu0 %v661
        %1534 = vmatprep.subr.bf16.mxu0 0
        %1535 = vmatpush1.bf16.msra.mxu0 0
        %1536 = vmatprep.subr.bf16.mxu0 0
        %1537 = vmatpush1.bf16.msra.mxu0 0
        %1538 = vmatprep.subr.bf16.mxu0 0
        %1539 = vmatpush1.bf16.msra.mxu0 0
        %1540 = vmatprep.subr.bf16.mxu0 0
        %1541 = vmatpush1.bf16.msra.mxu0 0
        %1542 = vmatprep.subr.bf16.mxu0 0
        %1543 = vmatpush1.bf16.msra.mxu0 0
        %1544 = vmatprep.subr.bf16.mxu0 0
        %1545 = vmatpush1.bf16.msra.mxu0 0
        %1546 = vmatprep.subr.bf16.mxu0 0
        %1547 = vmatpush1.bf16.msra.mxu0 0
        %1548 = vmatprep.subr.bf16.mxu0 0
        %1549 = vmatpush1.bf16.msra.mxu0 0
        %1550 = vmatprep.mubr.bf16.mxu0 0
        %1551 = vmatmul.mubr.bf16.gmra.mrb[0].mxu0 %v1517
        %v1552 = vpop.f32.mrb[0].mxu0
        %v1553 = vadd.f32 0.0, %v1552
        %v1554 = vpop.f32.mrb[0].mxu0
        %v1555 = vadd.f32 0.0, %v1554
        %v1556 = vpop.f32.mrb[0].mxu0
        %v1557 = vpop.f32.mrb[0].mxu0
        %1558 = vdwg.mxu0
        %v1559 = vadd.f32 %v532, %v1553
        %v1560 = vadd.f32 %v534, %v1555
        %v1561 = vadd.f32 %v1559, %v1070
        %v1562 = vadd.f32 %v1560, %v1074
        %v1563 = vtanh.pop %v1561
        %v1564 = vxor.u32 %v1562, 2147483648
        %v1565 = vmul.f32 %v1564, 1.442695
        %v1566 = vpow.pop %v1565
        %v1567 = vadd.f32 %v1566, 1.0
        %v1568 = vrcp.pop %v1567
        %v1569 = vmul.f32 1.0, %v1568
        %v1570 = vmul.f32 %v1563, %v1569
        %v1571 = vsub.f32 1.0, %v1569
        %v1572 = vmul.f32 %v1450, %v1571
        %v1573 = vadd.f32 %v1570, %v1572
        %v1575 = vcombine.high %v1573, %v1573
        %v1577 = vunpack.c.l.s4 1966171168
        %v1578 = vunpack.c.0.s8 %v1577
        %v1579 = vlaneseq
        %v1580 = vshrl.u32 %v1579, 7
        %v1581 = vsub.s32 %v1578, %v1580
        %v1582 = vrot.slane %v1573, %v1581
        %v1584 = vunpack.c.l.s4 1966171168
        %v1585 = vunpack.c.0.s8 %v1584
        %v1586 = vlaneseq
        %v1587 = vshrl.u32 %v1586, 7
        %v1588 = vsub.s32 %v1585, %v1587
        %v1589 = vrot.slane %v1575, %v1588
        %v1590 = vcombine.high %v1582, %v1582
        %v1591 = vcombine.high %v1589, %v1589
        %v1593 = vunpack.c.l.s4 1966171168
        %v1594 = vunpack.c.0.s8 %v1593
        %v1595 = vlaneseq
        %v1596 = vshrl.u32 %v1595, 7
        %v1597 = vsub.s32 %v1594, %v1596
        %v1598 = vrot.slane %v1582, %v1597
        %v1600 = vunpack.c.l.s4 1966171168
        %v1601 = vunpack.c.0.s8 %v1600
        %v1602 = vlaneseq
        %v1603 = vshrl.u32 %v1602, 7
        %v1604 = vsub.s32 %v1601, %v1603
        %v1605 = vrot.slane %v1589, %v1604
        %v1607 = vunpack.c.l.s4 1966171168
        %v1608 = vunpack.c.0.s8 %v1607
        %v1609 = vlaneseq
        %v1610 = vshrl.u32 %v1609, 7
        %v1611 = vsub.s32 %v1608, %v1610
        %v1612 = vrot.slane %v1590, %v1611
        %v1614 = vunpack.c.l.s4 1966171168
        %v1615 = vunpack.c.0.s8 %v1614
        %v1616 = vlaneseq
        %v1617 = vshrl.u32 %v1616, 7
        %v1618 = vsub.s32 %v1615, %v1617
        %v1619 = vrot.slane %v1591, %v1618
        %v1620 = vcombine.high %v1598, %v1598
        %v1621 = vcombine.high %v1605, %v1605
        %v1622 = vcombine.high %v1612, %v1612
        %v1623 = vcombine.high %v1619, %v1619
        %1632 = vst [vmem:[%s323 + $0x3] sm:$0x1] %v1598
        %1633 = vst [vmem:[%s323 + $0x13] sm:$0x1] %v1612
        %1634 = vst [vmem:[%s323 + $0x23] sm:$0x1] %v1620
        %1635 = vst [vmem:[%s323 + $0x33] sm:$0x1] %v1622
        %1636 = vst [vmem:[%s323 + $0x43] sm:$0x1] %v1605
        %1637 = vst [vmem:[%s323 + $0x53] sm:$0x1] %v1619
        %1638 = vst [vmem:[%s323 + $0x63] sm:$0x1] %v1621
        %1639 = vst [vmem:[%s323 + $0x73] sm:$0x1] %v1623
        %v1640 = vpack.c.bf16 %v1573, %v1573
        %1641 = vmatprep.subr.bf16.mxu0 %v873
        %1642 = vmatpush1.bf16.msra.mxu0 %v872
        %1643 = vmatprep.subr.bf16.mxu0 %v875
        %1644 = vmatpush1.bf16.msra.mxu0 %v874
        %1645 = vmatprep.subr.bf16.mxu0 %v877
        %1646 = vmatpush1.bf16.msra.mxu0 %v876
        %1647 = vmatprep.subr.bf16.mxu0 %v879
        %1648 = vmatpush1.bf16.msra.mxu0 %v878
        %1649 = vmatprep.subr.bf16.mxu0 %v881
        %1650 = vmatpush1.bf16.msra.mxu0 %v880
        %1651 = vmatprep.subr.bf16.mxu0 %v883
        %1652 = vmatpush1.bf16.msra.mxu0 %v882
        %1653 = vmatprep.subr.bf16.mxu0 %v885
        %1654 = vmatpush1.bf16.msra.mxu0 %v884
        %1655 = vmatprep.subr.bf16.mxu0 %v887
        %1656 = vmatpush1.bf16.msra.mxu0 %v886
        %1657 = vmatprep.subr.bf16.mxu0 0
        %1658 = vmatpush1.bf16.msra.mxu0 0
        %1659 = vmatprep.subr.bf16.mxu0 0
        %1660 = vmatpush1.bf16.msra.mxu0 0
        %1661 = vmatprep.subr.bf16.mxu0 0
        %1662 = vmatpush1.bf16.msra.mxu0 0
        %1663 = vmatprep.subr.bf16.mxu0 0
        %1664 = vmatpush1.bf16.msra.mxu0 0
        %1665 = vmatprep.subr.bf16.mxu0 0
        %1666 = vmatpush1.bf16.msra.mxu0 0
        %1667 = vmatprep.subr.bf16.mxu0 0
        %1668 = vmatpush1.bf16.msra.mxu0 0
        %1669 = vmatprep.subr.bf16.mxu0 0
        %1670 = vmatpush1.bf16.msra.mxu0 0
        %1671 = vmatprep.subr.bf16.mxu0 0
        %1672 = vmatpush1.bf16.msra.mxu0 0
        %1673 = vmatprep.mubr.bf16.mxu0 0
        %1674 = vmatmul.mubr.bf16.gmra.mrb[0].mxu0 %v1640
        %v1675 = vpop.f32.mrb[0].mxu0
        %v1676 = vadd.f32 %v817, %v1675
        %v1677 = vpop.f32.mrb[0].mxu0
        %v1678 = vadd.f32 %v821, %v1677
        %v1679 = vpop.f32.mrb[0].mxu0
        %v1680 = vpop.f32.mrb[0].mxu0
        %1681 = vdwg.mxu0
        %v1682 = vtanh.pop %v1676
        %v1683 = vxor.u32 %v1678, 2147483648
        %v1684 = vmul.f32 %v1683, 1.442695
        %v1685 = vpow.pop %v1684
        %v1686 = vadd.f32 %v1685, 1.0
        %v1687 = vrcp.pop %v1686
        %v1688 = vmul.f32 1.0, %v1687
        %v1689 = vmul.f32 %v1682, %v1688
        %v1690 = vsub.f32 1.0, %v1688
        %v1691 = vmul.f32 %v1573, %v1690
        %v1692 = vadd.f32 %v1689, %v1691
        %v1694 = vcombine.high %v1692, %v1692
        %v1696 = vunpack.c.l.s4 1966171168
        %v1697 = vunpack.c.0.s8 %v1696
        %v1698 = vlaneseq
        %v1699 = vshrl.u32 %v1698, 7
        %v1700 = vsub.s32 %v1697, %v1699
        %v1701 = vrot.slane %v1692, %v1700
        %v1703 = vunpack.c.l.s4 1966171168
        %v1704 = vunpack.c.0.s8 %v1703
        %v1705 = vlaneseq
        %v1706 = vshrl.u32 %v1705, 7
        %v1707 = vsub.s32 %v1704, %v1706
        %v1708 = vrot.slane %v1694, %v1707
        %v1709 = vcombine.high %v1701, %v1701
        %v1710 = vcombine.high %v1708, %v1708
        %v1712 = vunpack.c.l.s4 1966171168
        %v1713 = vunpack.c.0.s8 %v1712
        %v1714 = vlaneseq
        %v1715 = vshrl.u32 %v1714, 7
        %v1716 = vsub.s32 %v1713, %v1715
        %v1717 = vrot.slane %v1701, %v1716
        %v1719 = vunpack.c.l.s4 1966171168
        %v1720 = vunpack.c.0.s8 %v1719
        %v1721 = vlaneseq
        %v1722 = vshrl.u32 %v1721, 7
        %v1723 = vsub.s32 %v1720, %v1722
        %v1724 = vrot.slane %v1708, %v1723
        %v1726 = vunpack.c.l.s4 1966171168
        %v1727 = vunpack.c.0.s8 %v1726
        %v1728 = vlaneseq
        %v1729 = vshrl.u32 %v1728, 7
        %v1730 = vsub.s32 %v1727, %v1729
        %v1731 = vrot.slane %v1709, %v1730
        %v1733 = vunpack.c.l.s4 1966171168
        %v1734 = vunpack.c.0.s8 %v1733
        %v1735 = vlaneseq
        %v1736 = vshrl.u32 %v1735, 7
        %v1737 = vsub.s32 %v1734, %v1736
        %v1738 = vrot.slane %v1710, %v1737
        %v1739 = vcombine.high %v1717, %v1717
        %v1740 = vcombine.high %v1724, %v1724
        %v1741 = vcombine.high %v1731, %v1731
        %v1742 = vcombine.high %v1738, %v1738
        %1751 = vst [vmem:[%s323 + $0xb] sm:$0x1] %v1717
        %1752 = vst [vmem:[%s323 + $0x1b] sm:$0x1] %v1731
        %1753 = vst [vmem:[%s323 + $0x2b] sm:$0x1] %v1739
        %1754 = vst [vmem:[%s323 + $0x3b] sm:$0x1] %v1741
        %1755 = vst [vmem:[%s323 + $0x4b] sm:$0x1] %v1724
        %1756 = vst [vmem:[%s323 + $0x5b] sm:$0x1] %v1738
        %1757 = vst [vmem:[%s323 + $0x6b] sm:$0x1] %v1740
        %1758 = vst [vmem:[%s323 + $0x7b] sm:$0x1] %v1742
        %v1759 = vpack.c.bf16 %v1692, %v1692
        %1760 = vmatprep.subr.bf16.mxu0 %v648
        %1761 = vmatpush1.bf16.msra.mxu0 %v647
        %1762 = vmatprep.subr.bf16.mxu0 %v650
        %1763 = vmatpush1.bf16.msra.mxu0 %v649
        %1764 = vmatprep.subr.bf16.mxu0 %v652
        %1765 = vmatpush1.bf16.msra.mxu0 %v651
        %1766 = vmatprep.subr.bf16.mxu0 %v654
        %1767 = vmatpush1.bf16.msra.mxu0 %v653
        %1768 = vmatprep.subr.bf16.mxu0 %v656
        %1769 = vmatpush1.bf16.msra.mxu0 %v655
        %1770 = vmatprep.subr.bf16.mxu0 %v658
        %1771 = vmatpush1.bf16.msra.mxu0 %v657
        %1772 = vmatprep.subr.bf16.mxu0 %v660
        %1773 = vmatpush1.bf16.msra.mxu0 %v659
        %1774 = vmatprep.subr.bf16.mxu0 %v662
        %1775 = vmatpush1.bf16.msra.mxu0 %v661
        %1776 = vmatprep.subr.bf16.mxu0 0
        %1777 = vmatpush1.bf16.msra.mxu0 0
        %1778 = vmatprep.subr.bf16.mxu0 0
        %1779 = vmatpush1.bf16.msra.mxu0 0
        %1780 = vmatprep.subr.bf16.mxu0 0
        %1781 = vmatpush1.bf16.msra.mxu0 0
        %1782 = vmatprep.subr.bf16.mxu0 0
        %1783 = vmatpush1.bf16.msra.mxu0 0
        %1784 = vmatprep.subr.bf16.mxu0 0
        %1785 = vmatpush1.bf16.msra.mxu0 0
        %1786 = vmatprep.subr.bf16.mxu0 0
        %1787 = vmatpush1.bf16.msra.mxu0 0
        %1788 = vmatprep.subr.bf16.mxu0 0
        %1789 = vmatpush1.bf16.msra.mxu0 0
        %1790 = vmatprep.subr.bf16.mxu0 0
        %1791 = vmatpush1.bf16.msra.mxu0 0
        %1792 = vmatprep.mubr.bf16.mxu0 0
        %1793 = vmatmul.mubr.bf16.gmra.mrb[0].mxu0 %v1759
        %v1794 = vpop.f32.mrb[0].mxu0
        %v1795 = vadd.f32 0.0, %v1794
        %v1796 = vpop.f32.mrb[0].mxu0
        %v1797 = vadd.f32 0.0, %v1796
        %v1798 = vpop.f32.mrb[0].mxu0
        %v1799 = vpop.f32.mrb[0].mxu0
        %1800 = vdwg.mxu0
        %v1801 = vadd.f32 %v538, %v1795
        %v1802 = vadd.f32 %v540, %v1797
        %v1803 = vadd.f32 %v1801, %v1070
        %v1804 = vadd.f32 %v1802, %v1074
        %v1805 = vtanh.pop %v1803
        %v1806 = vxor.u32 %v1804, 2147483648
        %v1807 = vmul.f32 %v1806, 1.442695
        %v1808 = vpow.pop %v1807
        %v1809 = vadd.f32 %v1808, 1.0
        %v1810 = vrcp.pop %v1809
        %v1811 = vmul.f32 1.0, %v1810
        %v1812 = vmul.f32 %v1805, %v1811
        %v1813 = vsub.f32 1.0, %v1811
        %v1814 = vmul.f32 %v1692, %v1813
        %v1815 = vadd.f32 %v1812, %v1814
        %v1817 = vcombine.high %v1815, %v1815
        %v1819 = vunpack.c.l.s4 1966171168
        %v1820 = vunpack.c.0.s8 %v1819
        %v1821 = vlaneseq
        %v1822 = vshrl.u32 %v1821, 7
        %v1823 = vsub.s32 %v1820, %v1822
        %v1824 = vrot.slane %v1815, %v1823
        %v1826 = vunpack.c.l.s4 1966171168
        %v1827 = vunpack.c.0.s8 %v1826
        %v1828 = vlaneseq
        %v1829 = vshrl.u32 %v1828, 7
        %v1830 = vsub.s32 %v1827, %v1829
        %v1831 = vrot.slane %v1817, %v1830
        %v1832 = vcombine.high %v1824, %v1824
        %v1833 = vcombine.high %v1831, %v1831
        %v1835 = vunpack.c.l.s4 1966171168
        %v1836 = vunpack.c.0.s8 %v1835
        %v1837 = vlaneseq
        %v1838 = vshrl.u32 %v1837, 7
        %v1839 = vsub.s32 %v1836, %v1838
        %v1840 = vrot.slane %v1824, %v1839
        %v1842 = vunpack.c.l.s4 1966171168
        %v1843 = vunpack.c.0.s8 %v1842
        %v1844 = vlaneseq
        %v1845 = vshrl.u32 %v1844, 7
        %v1846 = vsub.s32 %v1843, %v1845
        %v1847 = vrot.slane %v1831, %v1846
        %v1849 = vunpack.c.l.s4 1966171168
        %v1850 = vunpack.c.0.s8 %v1849
        %v1851 = vlaneseq
        %v1852 = vshrl.u32 %v1851, 7
        %v1853 = vsub.s32 %v1850, %v1852
        %v1854 = vrot.slane %v1832, %v1853
        %v1856 = vunpack.c.l.s4 1966171168
        %v1857 = vunpack.c.0.s8 %v1856
        %v1858 = vlaneseq
        %v1859 = vshrl.u32 %v1858, 7
        %v1860 = vsub.s32 %v1857, %v1859
        %v1861 = vrot.slane %v1833, %v1860
        %v1862 = vcombine.high %v1840, %v1840
        %v1863 = vcombine.high %v1847, %v1847
        %v1864 = vcombine.high %v1854, %v1854
        %v1865 = vcombine.high %v1861, %v1861
        %1874 = vst [vmem:[%s323 + $0x4] sm:$0x1] %v1840
        %1875 = vst [vmem:[%s323 + $0x14] sm:$0x1] %v1854
        %1876 = vst [vmem:[%s323 + $0x24] sm:$0x1] %v1862
        %1877 = vst [vmem:[%s323 + $0x34] sm:$0x1] %v1864
        %1878 = vst [vmem:[%s323 + $0x44] sm:$0x1] %v1847
        %1879 = vst [vmem:[%s323 + $0x54] sm:$0x1] %v1861
        %1880 = vst [vmem:[%s323 + $0x64] sm:$0x1] %v1863
        %1881 = vst [vmem:[%s323 + $0x74] sm:$0x1] %v1865
        %v1882 = vpack.c.bf16 %v1815, %v1815
        %1883 = vmatprep.subr.bf16.mxu0 %v873
        %1884 = vmatpush1.bf16.msra.mxu0 %v872
        %1885 = vmatprep.subr.bf16.mxu0 %v875
        %1886 = vmatpush1.bf16.msra.mxu0 %v874
        %1887 = vmatprep.subr.bf16.mxu0 %v877
        %1888 = vmatpush1.bf16.msra.mxu0 %v876
        %1889 = vmatprep.subr.bf16.mxu0 %v879
        %1890 = vmatpush1.bf16.msra.mxu0 %v878
        %1891 = vmatprep.subr.bf16.mxu0 %v881
        %1892 = vmatpush1.bf16.msra.mxu0 %v880
        %1893 = vmatprep.subr.bf16.mxu0 %v883
        %1894 = vmatpush1.bf16.msra.mxu0 %v882
        %1895 = vmatprep.subr.bf16.mxu0 %v885
        %1896 = vmatpush1.bf16.msra.mxu0 %v884
        %1897 = vmatprep.subr.bf16.mxu0 %v887
        %1898 = vmatpush1.bf16.msra.mxu0 %v886
        %1899 = vmatprep.subr.bf16.mxu0 0
        %1900 = vmatpush1.bf16.msra.mxu0 0
        %1901 = vmatprep.subr.bf16.mxu0 0
        %1902 = vmatpush1.bf16.msra.mxu0 0
        %1903 = vmatprep.subr.bf16.mxu0 0
        %1904 = vmatpush1.bf16.msra.mxu0 0
        %1905 = vmatprep.subr.bf16.mxu0 0
        %1906 = vmatpush1.bf16.msra.mxu0 0
        %1907 = vmatprep.subr.bf16.mxu0 0
        %1908 = vmatpush1.bf16.msra.mxu0 0
        %1909 = vmatprep.subr.bf16.mxu0 0
        %1910 = vmatpush1.bf16.msra.mxu0 0
        %1911 = vmatprep.subr.bf16.mxu0 0
        %1912 = vmatpush1.bf16.msra.mxu0 0
        %1913 = vmatprep.subr.bf16.mxu0 0
        %1914 = vmatpush1.bf16.msra.mxu0 0
        %1915 = vmatprep.mubr.bf16.mxu0 0
        %1916 = vmatmul.mubr.bf16.gmra.mrb[0].mxu0 %v1882
        %v1917 = vpop.f32.mrb[0].mxu0
        %v1918 = vadd.f32 %v817, %v1917
        %v1919 = vpop.f32.mrb[0].mxu0
        %v1920 = vadd.f32 %v821, %v1919
        %v1921 = vpop.f32.mrb[0].mxu0
        %v1922 = vpop.f32.mrb[0].mxu0
        %1923 = vdwg.mxu0
        %v1924 = vtanh.pop %v1918
        %v1925 = vxor.u32 %v1920, 2147483648
        %v1926 = vmul.f32 %v1925, 1.442695
        %v1927 = vpow.pop %v1926
        %v1928 = vadd.f32 %v1927, 1.0
        %v1929 = vrcp.pop %v1928
        %v1930 = vmul.f32 1.0, %v1929
        %v1931 = vmul.f32 %v1924, %v1930
        %v1932 = vsub.f32 1.0, %v1930
        %v1933 = vmul.f32 %v1815, %v1932
        %v1934 = vadd.f32 %v1931, %v1933
        %v1936 = vcombine.high %v1934, %v1934
        %v1938 = vunpack.c.l.s4 1966171168
        %v1939 = vunpack.c.0.s8 %v1938
        %v1940 = vlaneseq
        %v1941 = vshrl.u32 %v1940, 7
        %v1942 = vsub.s32 %v1939, %v1941
        %v1943 = vrot.slane %v1934, %v1942
        %v1945 = vunpack.c.l.s4 1966171168
        %v1946 = vunpack.c.0.s8 %v1945
        %v1947 = vlaneseq
        %v1948 = vshrl.u32 %v1947, 7
        %v1949 = vsub.s32 %v1946, %v1948
        %v1950 = vrot.slane %v1936, %v1949
        %v1951 = vcombine.high %v1943, %v1943
        %v1952 = vcombine.high %v1950, %v1950
        %v1954 = vunpack.c.l.s4 1966171168
        %v1955 = vunpack.c.0.s8 %v1954
        %v1956 = vlaneseq
        %v1957 = vshrl.u32 %v1956, 7
        %v1958 = vsub.s32 %v1955, %v1957
        %v1959 = vrot.slane %v1943, %v1958
        %v1961 = vunpack.c.l.s4 1966171168
        %v1962 = vunpack.c.0.s8 %v1961
        %v1963 = vlaneseq
        %v1964 = vshrl.u32 %v1963, 7
        %v1965 = vsub.s32 %v1962, %v1964
        %v1966 = vrot.slane %v1950, %v1965
        %v1968 = vunpack.c.l.s4 1966171168
        %v1969 = vunpack.c.0.s8 %v1968
        %v1970 = vlaneseq
        %v1971 = vshrl.u32 %v1970, 7
        %v1972 = vsub.s32 %v1969, %v1971
        %v1973 = vrot.slane %v1951, %v1972
        %v1975 = vunpack.c.l.s4 1966171168
        %v1976 = vunpack.c.0.s8 %v1975
        %v1977 = vlaneseq
        %v1978 = vshrl.u32 %v1977, 7
        %v1979 = vsub.s32 %v1976, %v1978
        %v1980 = vrot.slane %v1952, %v1979
        %v1981 = vcombine.high %v1959, %v1959
        %v1982 = vcombine.high %v1966, %v1966
        %v1983 = vcombine.high %v1973, %v1973
        %v1984 = vcombine.high %v1980, %v1980
        %1993 = vst [vmem:[%s323 + $0xc] sm:$0x1] %v1959
        %1994 = vst [vmem:[%s323 + $0x1c] sm:$0x1] %v1973
        %1995 = vst [vmem:[%s323 + $0x2c] sm:$0x1] %v1981
        %1996 = vst [vmem:[%s323 + $0x3c] sm:$0x1] %v1983
        %1997 = vst [vmem:[%s323 + $0x4c] sm:$0x1] %v1966
        %1998 = vst [vmem:[%s323 + $0x5c] sm:$0x1] %v1980
        %1999 = vst [vmem:[%s323 + $0x6c] sm:$0x1] %v1982
        %2000 = vst [vmem:[%s323 + $0x7c] sm:$0x1] %v1984
        %v2001 = vpack.c.bf16 %v1934, %v1934
        %2002 = vmatprep.subr.bf16.mxu0 %v648
        %2003 = vmatpush1.bf16.msra.mxu0 %v647
        %2004 = vmatprep.subr.bf16.mxu0 %v650
        %2005 = vmatpush1.bf16.msra.mxu0 %v649
        %2006 = vmatprep.subr.bf16.mxu0 %v652
        %2007 = vmatpush1.bf16.msra.mxu0 %v651
        %2008 = vmatprep.subr.bf16.mxu0 %v654
        %2009 = vmatpush1.bf16.msra.mxu0 %v653
        %2010 = vmatprep.subr.bf16.mxu0 %v656
        %2011 = vmatpush1.bf16.msra.mxu0 %v655
        %2012 = vmatprep.subr.bf16.mxu0 %v658
        %2013 = vmatpush1.bf16.msra.mxu0 %v657
        %2014 = vmatprep.subr.bf16.mxu0 %v660
        %2015 = vmatpush1.bf16.msra.mxu0 %v659
        %2016 = vmatprep.subr.bf16.mxu0 %v662
        %2017 = vmatpush1.bf16.msra.mxu0 %v661
        %2018 = vmatprep.subr.bf16.mxu0 0
        %2019 = vmatpush1.bf16.msra.mxu0 0
        %2020 = vmatprep.subr.bf16.mxu0 0
        %2021 = vmatpush1.bf16.msra.mxu0 0
        %2022 = vmatprep.subr.bf16.mxu0 0
        %2023 = vmatpush1.bf16.msra.mxu0 0
        %2024 = vmatprep.subr.bf16.mxu0 0
        %2025 = vmatpush1.bf16.msra.mxu0 0
        %2026 = vmatprep.subr.bf16.mxu0 0
        %2027 = vmatpush1.bf16.msra.mxu0 0
        %2028 = vmatprep.subr.bf16.mxu0 0
        %2029 = vmatpush1.bf16.msra.mxu0 0
        %2030 = vmatprep.subr.bf16.mxu0 0
        %2031 = vmatpush1.bf16.msra.mxu0 0
        %2032 = vmatprep.subr.bf16.mxu0 0
        %2033 = vmatpush1.bf16.msra.mxu0 0
        %2034 = vmatprep.mubr.bf16.mxu0 0
        %2035 = vmatmul.mubr.bf16.gmra.mrb[0].mxu0 %v2001
        %v2036 = vpop.f32.mrb[0].mxu0
        %v2037 = vadd.f32 0.0, %v2036
        %v2038 = vpop.f32.mrb[0].mxu0
        %v2039 = vadd.f32 0.0, %v2038
        %v2040 = vpop.f32.mrb[0].mxu0
        %v2041 = vpop.f32.mrb[0].mxu0
        %2042 = vdwg.mxu0
        %v2043 = vadd.f32 %v542, %v2037
        %v2044 = vadd.f32 %v544, %v2039
        %v2045 = vadd.f32 %v2043, %v1070
        %v2046 = vadd.f32 %v2044, %v1074
        %v2047 = vtanh.pop %v2045
        %v2048 = vxor.u32 %v2046, 2147483648
        %v2049 = vmul.f32 %v2048, 1.442695
        %v2050 = vpow.pop %v2049
        %v2051 = vadd.f32 %v2050, 1.0
        %v2052 = vrcp.pop %v2051
        %v2053 = vmul.f32 1.0, %v2052
        %v2054 = vmul.f32 %v2047, %v2053
        %v2055 = vsub.f32 1.0, %v2053
        %v2056 = vmul.f32 %v1934, %v2055
        %v2057 = vadd.f32 %v2054, %v2056
        %v2059 = vcombine.high %v2057, %v2057
        %v2061 = vunpack.c.l.s4 1966171168
        %v2062 = vunpack.c.0.s8 %v2061
        %v2063 = vlaneseq
        %v2064 = vshrl.u32 %v2063, 7
        %v2065 = vsub.s32 %v2062, %v2064
        %v2066 = vrot.slane %v2057, %v2065
        %v2068 = vunpack.c.l.s4 1966171168
        %v2069 = vunpack.c.0.s8 %v2068
        %v2070 = vlaneseq
        %v2071 = vshrl.u32 %v2070, 7
        %v2072 = vsub.s32 %v2069, %v2071
        %v2073 = vrot.slane %v2059, %v2072
        %v2074 = vcombine.high %v2066, %v2066
        %v2075 = vcombine.high %v2073, %v2073
        %v2077 = vunpack.c.l.s4 1966171168
        %v2078 = vunpack.c.0.s8 %v2077
        %v2079 = vlaneseq
        %v2080 = vshrl.u32 %v2079, 7
        %v2081 = vsub.s32 %v2078, %v2080
        %v2082 = vrot.slane %v2066, %v2081
        %v2084 = vunpack.c.l.s4 1966171168
        %v2085 = vunpack.c.0.s8 %v2084
        %v2086 = vlaneseq
        %v2087 = vshrl.u32 %v2086, 7
        %v2088 = vsub.s32 %v2085, %v2087
        %v2089 = vrot.slane %v2073, %v2088
        %v2091 = vunpack.c.l.s4 1966171168
        %v2092 = vunpack.c.0.s8 %v2091
        %v2093 = vlaneseq
        %v2094 = vshrl.u32 %v2093, 7
        %v2095 = vsub.s32 %v2092, %v2094
        %v2096 = vrot.slane %v2074, %v2095
        %v2098 = vunpack.c.l.s4 1966171168
        %v2099 = vunpack.c.0.s8 %v2098
        %v2100 = vlaneseq
        %v2101 = vshrl.u32 %v2100, 7
        %v2102 = vsub.s32 %v2099, %v2101
        %v2103 = vrot.slane %v2075, %v2102
        %v2104 = vcombine.high %v2082, %v2082
        %v2105 = vcombine.high %v2089, %v2089
        %v2106 = vcombine.high %v2096, %v2096
        %v2107 = vcombine.high %v2103, %v2103
        %2116 = vst [vmem:[%s323 + $0x5] sm:$0x1] %v2082
        %2117 = vst [vmem:[%s323 + $0x15] sm:$0x1] %v2096
        %2118 = vst [vmem:[%s323 + $0x25] sm:$0x1] %v2104
        %2119 = vst [vmem:[%s323 + $0x35] sm:$0x1] %v2106
        %2120 = vst [vmem:[%s323 + $0x45] sm:$0x1] %v2089
        %2121 = vst [vmem:[%s323 + $0x55] sm:$0x1] %v2103
        %2122 = vst [vmem:[%s323 + $0x65] sm:$0x1] %v2105
        %2123 = vst [vmem:[%s323 + $0x75] sm:$0x1] %v2107
        %v2124 = vpack.c.bf16 %v2057, %v2057
        %2125 = vmatprep.subr.bf16.mxu0 %v873
        %2126 = vmatpush1.bf16.msra.mxu0 %v872
        %2127 = vmatprep.subr.bf16.mxu0 %v875
        %2128 = vmatpush1.bf16.msra.mxu0 %v874
        %2129 = vmatprep.subr.bf16.mxu0 %v877
        %2130 = vmatpush1.bf16.msra.mxu0 %v876
        %2131 = vmatprep.subr.bf16.mxu0 %v879
        %2132 = vmatpush1.bf16.msra.mxu0 %v878
        %2133 = vmatprep.subr.bf16.mxu0 %v881
        %2134 = vmatpush1.bf16.msra.mxu0 %v880
        %2135 = vmatprep.subr.bf16.mxu0 %v883
        %2136 = vmatpush1.bf16.msra.mxu0 %v882
        %2137 = vmatprep.subr.bf16.mxu0 %v885
        %2138 = vmatpush1.bf16.msra.mxu0 %v884
        %2139 = vmatprep.subr.bf16.mxu0 %v887
        %2140 = vmatpush1.bf16.msra.mxu0 %v886
        %2141 = vmatprep.subr.bf16.mxu0 0
        %2142 = vmatpush1.bf16.msra.mxu0 0
        %2143 = vmatprep.subr.bf16.mxu0 0
        %2144 = vmatpush1.bf16.msra.mxu0 0
        %2145 = vmatprep.subr.bf16.mxu0 0
        %2146 = vmatpush1.bf16.msra.mxu0 0
        %2147 = vmatprep.subr.bf16.mxu0 0
        %2148 = vmatpush1.bf16.msra.mxu0 0
        %2149 = vmatprep.subr.bf16.mxu0 0
        %2150 = vmatpush1.bf16.msra.mxu0 0
        %2151 = vmatprep.subr.bf16.mxu0 0
        %2152 = vmatpush1.bf16.msra.mxu0 0
        %2153 = vmatprep.subr.bf16.mxu0 0
        %2154 = vmatpush1.bf16.msra.mxu0 0
        %2155 = vmatprep.subr.bf16.mxu0 0
        %2156 = vmatpush1.bf16.msra.mxu0 0
        %2157 = vmatprep.mubr.bf16.mxu0 0
        %2158 = vmatmul.mubr.bf16.gmra.mrb[0].mxu0 %v2124
        %v2159 = vpop.f32.mrb[0].mxu0
        %v2160 = vadd.f32 %v817, %v2159
        %v2161 = vpop.f32.mrb[0].mxu0
        %v2162 = vadd.f32 %v821, %v2161
        %v2163 = vpop.f32.mrb[0].mxu0
        %v2164 = vpop.f32.mrb[0].mxu0
        %2165 = vdwg.mxu0
        %v2166 = vtanh.pop %v2160
        %v2167 = vxor.u32 %v2162, 2147483648
        %v2168 = vmul.f32 %v2167, 1.442695
        %v2169 = vpow.pop %v2168
        %v2170 = vadd.f32 %v2169, 1.0
        %v2171 = vrcp.pop %v2170
        %v2172 = vmul.f32 1.0, %v2171
        %v2173 = vmul.f32 %v2166, %v2172
        %v2174 = vsub.f32 1.0, %v2172
        %v2175 = vmul.f32 %v2057, %v2174
        %v2176 = vadd.f32 %v2173, %v2175
        %v2178 = vcombine.high %v2176, %v2176
        %v2180 = vunpack.c.l.s4 1966171168
        %v2181 = vunpack.c.0.s8 %v2180
        %v2182 = vlaneseq
        %v2183 = vshrl.u32 %v2182, 7
        %v2184 = vsub.s32 %v2181, %v2183
        %v2185 = vrot.slane %v2176, %v2184
        %v2187 = vunpack.c.l.s4 1966171168
        %v2188 = vunpack.c.0.s8 %v2187
        %v2189 = vlaneseq
        %v2190 = vshrl.u32 %v2189, 7
        %v2191 = vsub.s32 %v2188, %v2190
        %v2192 = vrot.slane %v2178, %v2191
        %v2193 = vcombine.high %v2185, %v2185
        %v2194 = vcombine.high %v2192, %v2192
        %v2196 = vunpack.c.l.s4 1966171168
        %v2197 = vunpack.c.0.s8 %v2196
        %v2198 = vlaneseq
        %v2199 = vshrl.u32 %v2198, 7
        %v2200 = vsub.s32 %v2197, %v2199
        %v2201 = vrot.slane %v2185, %v2200
        %v2203 = vunpack.c.l.s4 1966171168
        %v2204 = vunpack.c.0.s8 %v2203
        %v2205 = vlaneseq
        %v2206 = vshrl.u32 %v2205, 7
        %v2207 = vsub.s32 %v2204, %v2206
        %v2208 = vrot.slane %v2192, %v2207
        %v2210 = vunpack.c.l.s4 1966171168
        %v2211 = vunpack.c.0.s8 %v2210
        %v2212 = vlaneseq
        %v2213 = vshrl.u32 %v2212, 7
        %v2214 = vsub.s32 %v2211, %v2213
        %v2215 = vrot.slane %v2193, %v2214
        %v2217 = vunpack.c.l.s4 1966171168
        %v2218 = vunpack.c.0.s8 %v2217
        %v2219 = vlaneseq
        %v2220 = vshrl.u32 %v2219, 7
        %v2221 = vsub.s32 %v2218, %v2220
        %v2222 = vrot.slane %v2194, %v2221
        %v2223 = vcombine.high %v2201, %v2201
        %v2224 = vcombine.high %v2208, %v2208
        %v2225 = vcombine.high %v2215, %v2215
        %v2226 = vcombine.high %v2222, %v2222
        %2235 = vst [vmem:[%s323 + $0xd] sm:$0x1] %v2201
        %2236 = vst [vmem:[%s323 + $0x1d] sm:$0x1] %v2215
        %2237 = vst [vmem:[%s323 + $0x2d] sm:$0x1] %v2223
        %2238 = vst [vmem:[%s323 + $0x3d] sm:$0x1] %v2225
        %2239 = vst [vmem:[%s323 + $0x4d] sm:$0x1] %v2208
        %2240 = vst [vmem:[%s323 + $0x5d] sm:$0x1] %v2222
        %2241 = vst [vmem:[%s323 + $0x6d] sm:$0x1] %v2224
        %2242 = vst [vmem:[%s323 + $0x7d] sm:$0x1] %v2226
        %v2243 = vpack.c.bf16 %v2176, %v2176
        %2244 = vmatprep.subr.bf16.mxu0 %v648
        %2245 = vmatpush1.bf16.msra.mxu0 %v647
        %2246 = vmatprep.subr.bf16.mxu0 %v650
        %2247 = vmatpush1.bf16.msra.mxu0 %v649
        %2248 = vmatprep.subr.bf16.mxu0 %v652
        %2249 = vmatpush1.bf16.msra.mxu0 %v651
        %2250 = vmatprep.subr.bf16.mxu0 %v654
        %2251 = vmatpush1.bf16.msra.mxu0 %v653
        %2252 = vmatprep.subr.bf16.mxu0 %v656
        %2253 = vmatpush1.bf16.msra.mxu0 %v655
        %2254 = vmatprep.subr.bf16.mxu0 %v658
        %2255 = vmatpush1.bf16.msra.mxu0 %v657
        %2256 = vmatprep.subr.bf16.mxu0 %v660
        %2257 = vmatpush1.bf16.msra.mxu0 %v659
        %2258 = vmatprep.subr.bf16.mxu0 %v662
        %2259 = vmatpush1.bf16.msra.mxu0 %v661
        %2260 = vmatprep.subr.bf16.mxu0 0
        %2261 = vmatpush1.bf16.msra.mxu0 0
        %2262 = vmatprep.subr.bf16.mxu0 0
        %2263 = vmatpush1.bf16.msra.mxu0 0
        %2264 = vmatprep.subr.bf16.mxu0 0
        %2265 = vmatpush1.bf16.msra.mxu0 0
        %2266 = vmatprep.subr.bf16.mxu0 0
        %2267 = vmatpush1.bf16.msra.mxu0 0
        %2268 = vmatprep.subr.bf16.mxu0 0
        %2269 = vmatpush1.bf16.msra.mxu0 0
        %2270 = vmatprep.subr.bf16.mxu0 0
        %2271 = vmatpush1.bf16.msra.mxu0 0
        %2272 = vmatprep.subr.bf16.mxu0 0
        %2273 = vmatpush1.bf16.msra.mxu0 0
        %2274 = vmatprep.subr.bf16.mxu0 0
        %2275 = vmatpush1.bf16.msra.mxu0 0
        %2276 = vmatprep.mubr.bf16.mxu0 0
        %2277 = vmatmul.mubr.bf16.gmra.mrb[0].mxu0 %v2243
        %v2278 = vpop.f32.mrb[0].mxu0
        %v2279 = vadd.f32 0.0, %v2278
        %v2280 = vpop.f32.mrb[0].mxu0
        %v2281 = vadd.f32 0.0, %v2280
        %v2282 = vpop.f32.mrb[0].mxu0
        %v2283 = vpop.f32.mrb[0].mxu0
        %2284 = vdwg.mxu0
        %v2285 = vadd.f32 %v548, %v2279
        %v2286 = vadd.f32 %v550, %v2281
        %v2287 = vadd.f32 %v2285, %v1070
        %v2288 = vadd.f32 %v2286, %v1074
        %v2289 = vtanh.pop %v2287
        %v2290 = vxor.u32 %v2288, 2147483648
        %v2291 = vmul.f32 %v2290, 1.442695
        %v2292 = vpow.pop %v2291
        %v2293 = vadd.f32 %v2292, 1.0
        %v2294 = vrcp.pop %v2293
        %v2295 = vmul.f32 1.0, %v2294
        %v2296 = vmul.f32 %v2289, %v2295
        %v2297 = vsub.f32 1.0, %v2295
        %v2298 = vmul.f32 %v2176, %v2297
        %v2299 = vadd.f32 %v2296, %v2298
        %v2301 = vcombine.high %v2299, %v2299
        %v2303 = vunpack.c.l.s4 1966171168
        %v2304 = vunpack.c.0.s8 %v2303
        %v2305 = vlaneseq
        %v2306 = vshrl.u32 %v2305, 7
        %v2307 = vsub.s32 %v2304, %v2306
        %v2308 = vrot.slane %v2299, %v2307
        %v2310 = vunpack.c.l.s4 1966171168
        %v2311 = vunpack.c.0.s8 %v2310
        %v2312 = vlaneseq
        %v2313 = vshrl.u32 %v2312, 7
        %v2314 = vsub.s32 %v2311, %v2313
        %v2315 = vrot.slane %v2301, %v2314
        %v2316 = vcombine.high %v2308, %v2308
        %v2317 = vcombine.high %v2315, %v2315
        %v2319 = vunpack.c.l.s4 1966171168
        %v2320 = vunpack.c.0.s8 %v2319
        %v2321 = vlaneseq
        %v2322 = vshrl.u32 %v2321, 7
        %v2323 = vsub.s32 %v2320, %v2322
        %v2324 = vrot.slane %v2308, %v2323
        %v2326 = vunpack.c.l.s4 1966171168
        %v2327 = vunpack.c.0.s8 %v2326
        %v2328 = vlaneseq
        %v2329 = vshrl.u32 %v2328, 7
        %v2330 = vsub.s32 %v2327, %v2329
        %v2331 = vrot.slane %v2315, %v2330
        %v2333 = vunpack.c.l.s4 1966171168
        %v2334 = vunpack.c.0.s8 %v2333
        %v2335 = vlaneseq
        %v2336 = vshrl.u32 %v2335, 7
        %v2337 = vsub.s32 %v2334, %v2336
        %v2338 = vrot.slane %v2316, %v2337
        %v2340 = vunpack.c.l.s4 1966171168
        %v2341 = vunpack.c.0.s8 %v2340
        %v2342 = vlaneseq
        %v2343 = vshrl.u32 %v2342, 7
        %v2344 = vsub.s32 %v2341, %v2343
        %v2345 = vrot.slane %v2317, %v2344
        %v2346 = vcombine.high %v2324, %v2324
        %v2347 = vcombine.high %v2331, %v2331
        %v2348 = vcombine.high %v2338, %v2338
        %v2349 = vcombine.high %v2345, %v2345
        %2358 = vst [vmem:[%s323 + $0x6] sm:$0x1] %v2324
        %2359 = vst [vmem:[%s323 + $0x16] sm:$0x1] %v2338
        %2360 = vst [vmem:[%s323 + $0x26] sm:$0x1] %v2346
        %2361 = vst [vmem:[%s323 + $0x36] sm:$0x1] %v2348
        %2362 = vst [vmem:[%s323 + $0x46] sm:$0x1] %v2331
        %2363 = vst [vmem:[%s323 + $0x56] sm:$0x1] %v2345
        %2364 = vst [vmem:[%s323 + $0x66] sm:$0x1] %v2347
        %2365 = vst [vmem:[%s323 + $0x76] sm:$0x1] %v2349
        %v2366 = vpack.c.bf16 %v2299, %v2299
        %2367 = vmatprep.subr.bf16.mxu0 %v873
        %2368 = vmatpush1.bf16.msra.mxu0 %v872
        %2369 = vmatprep.subr.bf16.mxu0 %v875
        %2370 = vmatpush1.bf16.msra.mxu0 %v874
        %2371 = vmatprep.subr.bf16.mxu0 %v877
        %2372 = vmatpush1.bf16.msra.mxu0 %v876
        %2373 = vmatprep.subr.bf16.mxu0 %v879
        %2374 = vmatpush1.bf16.msra.mxu0 %v878
        %2375 = vmatprep.subr.bf16.mxu0 %v881
        %2376 = vmatpush1.bf16.msra.mxu0 %v880
        %2377 = vmatprep.subr.bf16.mxu0 %v883
        %2378 = vmatpush1.bf16.msra.mxu0 %v882
        %2379 = vmatprep.subr.bf16.mxu0 %v885
        %2380 = vmatpush1.bf16.msra.mxu0 %v884
        %2381 = vmatprep.subr.bf16.mxu0 %v887
        %2382 = vmatpush1.bf16.msra.mxu0 %v886
        %2383 = vmatprep.subr.bf16.mxu0 0
        %2384 = vmatpush1.bf16.msra.mxu0 0
        %2385 = vmatprep.subr.bf16.mxu0 0
        %2386 = vmatpush1.bf16.msra.mxu0 0
        %2387 = vmatprep.subr.bf16.mxu0 0
        %2388 = vmatpush1.bf16.msra.mxu0 0
        %2389 = vmatprep.subr.bf16.mxu0 0
        %2390 = vmatpush1.bf16.msra.mxu0 0
        %2391 = vmatprep.subr.bf16.mxu0 0
        %2392 = vmatpush1.bf16.msra.mxu0 0
        %2393 = vmatprep.subr.bf16.mxu0 0
        %2394 = vmatpush1.bf16.msra.mxu0 0
        %2395 = vmatprep.subr.bf16.mxu0 0
        %2396 = vmatpush1.bf16.msra.mxu0 0
        %2397 = vmatprep.subr.bf16.mxu0 0
        %2398 = vmatpush1.bf16.msra.mxu0 0
        %2399 = vmatprep.mubr.bf16.mxu0 0
        %2400 = vmatmul.mubr.bf16.gmra.mrb[0].mxu0 %v2366
        %v2401 = vpop.f32.mrb[0].mxu0
        %v2402 = vadd.f32 %v817, %v2401
        %v2403 = vpop.f32.mrb[0].mxu0
        %v2404 = vadd.f32 %v821, %v2403
        %v2405 = vpop.f32.mrb[0].mxu0
        %v2406 = vpop.f32.mrb[0].mxu0
        %2407 = vdwg.mxu0
        %v2408 = vtanh.pop %v2402
        %v2409 = vxor.u32 %v2404, 2147483648
        %v2410 = vmul.f32 %v2409, 1.442695
        %v2411 = vpow.pop %v2410
        %v2412 = vadd.f32 %v2411, 1.0
        %v2413 = vrcp.pop %v2412
        %v2414 = vmul.f32 1.0, %v2413
        %v2415 = vmul.f32 %v2408, %v2414
        %v2416 = vsub.f32 1.0, %v2414
        %v2417 = vmul.f32 %v2299, %v2416
        %v2418 = vadd.f32 %v2415, %v2417
        %v2420 = vcombine.high %v2418, %v2418
        %v2422 = vunpack.c.l.s4 1966171168
        %v2423 = vunpack.c.0.s8 %v2422
        %v2424 = vlaneseq
        %v2425 = vshrl.u32 %v2424, 7
        %v2426 = vsub.s32 %v2423, %v2425
        %v2427 = vrot.slane %v2418, %v2426
        %v2429 = vunpack.c.l.s4 1966171168
        %v2430 = vunpack.c.0.s8 %v2429
        %v2431 = vlaneseq
        %v2432 = vshrl.u32 %v2431, 7
        %v2433 = vsub.s32 %v2430, %v2432
        %v2434 = vrot.slane %v2420, %v2433
        %v2435 = vcombine.high %v2427, %v2427
        %v2436 = vcombine.high %v2434, %v2434
        %v2438 = vunpack.c.l.s4 1966171168
        %v2439 = vunpack.c.0.s8 %v2438
        %v2440 = vlaneseq
        %v2441 = vshrl.u32 %v2440, 7
        %v2442 = vsub.s32 %v2439, %v2441
        %v2443 = vrot.slane %v2427, %v2442
        %v2445 = vunpack.c.l.s4 1966171168
        %v2446 = vunpack.c.0.s8 %v2445
        %v2447 = vlaneseq
        %v2448 = vshrl.u32 %v2447, 7
        %v2449 = vsub.s32 %v2446, %v2448
        %v2450 = vrot.slane %v2434, %v2449
        %v2452 = vunpack.c.l.s4 1966171168
        %v2453 = vunpack.c.0.s8 %v2452
        %v2454 = vlaneseq
        %v2455 = vshrl.u32 %v2454, 7
        %v2456 = vsub.s32 %v2453, %v2455
        %v2457 = vrot.slane %v2435, %v2456
        %v2459 = vunpack.c.l.s4 1966171168
        %v2460 = vunpack.c.0.s8 %v2459
        %v2461 = vlaneseq
        %v2462 = vshrl.u32 %v2461, 7
        %v2463 = vsub.s32 %v2460, %v2462
        %v2464 = vrot.slane %v2436, %v2463
        %v2465 = vcombine.high %v2443, %v2443
        %v2466 = vcombine.high %v2450, %v2450
        %v2467 = vcombine.high %v2457, %v2457
        %v2468 = vcombine.high %v2464, %v2464
        %2477 = vst [vmem:[%s323 + $0xe] sm:$0x1] %v2443
        %2478 = vst [vmem:[%s323 + $0x1e] sm:$0x1] %v2457
        %2479 = vst [vmem:[%s323 + $0x2e] sm:$0x1] %v2465
        %2480 = vst [vmem:[%s323 + $0x3e] sm:$0x1] %v2467
        %2481 = vst [vmem:[%s323 + $0x4e] sm:$0x1] %v2450
        %2482 = vst [vmem:[%s323 + $0x5e] sm:$0x1] %v2464
        %2483 = vst [vmem:[%s323 + $0x6e] sm:$0x1] %v2466
        %2484 = vst [vmem:[%s323 + $0x7e] sm:$0x1] %v2468
        %v2485 = vpack.c.bf16 %v2418, %v2418
        %2486 = vmatprep.subr.bf16.mxu0 %v648
        %2487 = vmatpush1.bf16.msra.mxu0 %v647
        %2488 = vmatprep.subr.bf16.mxu0 %v650
        %2489 = vmatpush1.bf16.msra.mxu0 %v649
        %2490 = vmatprep.subr.bf16.mxu0 %v652
        %2491 = vmatpush1.bf16.msra.mxu0 %v651
        %2492 = vmatprep.subr.bf16.mxu0 %v654
        %2493 = vmatpush1.bf16.msra.mxu0 %v653
        %2494 = vmatprep.subr.bf16.mxu0 %v656
        %2495 = vmatpush1.bf16.msra.mxu0 %v655
        %2496 = vmatprep.subr.bf16.mxu0 %v658
        %2497 = vmatpush1.bf16.msra.mxu0 %v657
        %2498 = vmatprep.subr.bf16.mxu0 %v660
        %2499 = vmatpush1.bf16.msra.mxu0 %v659
        %2500 = vmatprep.subr.bf16.mxu0 %v662
        %2501 = vmatpush1.bf16.msra.mxu0 %v661
        %2502 = vmatprep.subr.bf16.mxu0 0
        %2503 = vmatpush1.bf16.msra.mxu0 0
        %2504 = vmatprep.subr.bf16.mxu0 0
        %2505 = vmatpush1.bf16.msra.mxu0 0
        %2506 = vmatprep.subr.bf16.mxu0 0
        %2507 = vmatpush1.bf16.msra.mxu0 0
        %2508 = vmatprep.subr.bf16.mxu0 0
        %2509 = vmatpush1.bf16.msra.mxu0 0
        %2510 = vmatprep.subr.bf16.mxu0 0
        %2511 = vmatpush1.bf16.msra.mxu0 0
        %2512 = vmatprep.subr.bf16.mxu0 0
        %2513 = vmatpush1.bf16.msra.mxu0 0
        %2514 = vmatprep.subr.bf16.mxu0 0
        %2515 = vmatpush1.bf16.msra.mxu0 0
        %2516 = vmatprep.subr.bf16.mxu0 0
        %2517 = vmatpush1.bf16.msra.mxu0 0
        %2518 = vmatprep.mubr.bf16.mxu0 0
        %2519 = vmatmul.mubr.bf16.gmra.mrb[0].mxu0 %v2485
        %v2520 = vpop.f32.mrb[0].mxu0
        %v2521 = vadd.f32 0.0, %v2520
        %v2522 = vpop.f32.mrb[0].mxu0
        %v2523 = vadd.f32 0.0, %v2522
        %v2524 = vpop.f32.mrb[0].mxu0
        %v2525 = vpop.f32.mrb[0].mxu0
        %2526 = vdwg.mxu0
        %v2527 = vadd.f32 %v552, %v2521
        %v2528 = vadd.f32 %v554, %v2523
        %v2529 = vadd.f32 %v2527, %v1070
        %v2530 = vadd.f32 %v2528, %v1074
        %v2531 = vtanh.pop %v2529
        %v2532 = vxor.u32 %v2530, 2147483648
        %v2533 = vmul.f32 %v2532, 1.442695
        %v2534 = vpow.pop %v2533
        %v2535 = vadd.f32 %v2534, 1.0
        %v2536 = vrcp.pop %v2535
        %v2537 = vmul.f32 1.0, %v2536
        %v2538 = vmul.f32 %v2531, %v2537
        %v2539 = vsub.f32 1.0, %v2537
        %v2540 = vmul.f32 %v2418, %v2539
        %v2541 = vadd.f32 %v2538, %v2540
        %v2543 = vcombine.high %v2541, %v2541
        %v2545 = vunpack.c.l.s4 1966171168
        %v2546 = vunpack.c.0.s8 %v2545
        %v2547 = vlaneseq
        %v2548 = vshrl.u32 %v2547, 7
        %v2549 = vsub.s32 %v2546, %v2548
        %v2550 = vrot.slane %v2541, %v2549
        %v2552 = vunpack.c.l.s4 1966171168
        %v2553 = vunpack.c.0.s8 %v2552
        %v2554 = vlaneseq
        %v2555 = vshrl.u32 %v2554, 7
        %v2556 = vsub.s32 %v2553, %v2555
        %v2557 = vrot.slane %v2543, %v2556
        %v2558 = vcombine.high %v2550, %v2550
        %v2559 = vcombine.high %v2557, %v2557
        %v2561 = vunpack.c.l.s4 1966171168
        %v2562 = vunpack.c.0.s8 %v2561
        %v2563 = vlaneseq
        %v2564 = vshrl.u32 %v2563, 7
        %v2565 = vsub.s32 %v2562, %v2564
        %v2566 = vrot.slane %v2550, %v2565
        %v2568 = vunpack.c.l.s4 1966171168
        %v2569 = vunpack.c.0.s8 %v2568
        %v2570 = vlaneseq
        %v2571 = vshrl.u32 %v2570, 7
        %v2572 = vsub.s32 %v2569, %v2571
        %v2573 = vrot.slane %v2557, %v2572
        %v2575 = vunpack.c.l.s4 1966171168
        %v2576 = vunpack.c.0.s8 %v2575
        %v2577 = vlaneseq
        %v2578 = vshrl.u32 %v2577, 7
        %v2579 = vsub.s32 %v2576, %v2578
        %v2580 = vrot.slane %v2558, %v2579
        %v2582 = vunpack.c.l.s4 1966171168
        %v2583 = vunpack.c.0.s8 %v2582
        %v2584 = vlaneseq
        %v2585 = vshrl.u32 %v2584, 7
        %v2586 = vsub.s32 %v2583, %v2585
        %v2587 = vrot.slane %v2559, %v2586
        %v2588 = vcombine.high %v2566, %v2566
        %v2589 = vcombine.high %v2573, %v2573
        %v2590 = vcombine.high %v2580, %v2580
        %v2591 = vcombine.high %v2587, %v2587
        %2600 = vst [vmem:[%s323 + $0x7] sm:$0x1] %v2566
        %2601 = vst [vmem:[%s323 + $0x17] sm:$0x1] %v2580
        %2602 = vst [vmem:[%s323 + $0x27] sm:$0x1] %v2588
        %2603 = vst [vmem:[%s323 + $0x37] sm:$0x1] %v2590
        %2604 = vst [vmem:[%s323 + $0x47] sm:$0x1] %v2573
        %2605 = vst [vmem:[%s323 + $0x57] sm:$0x1] %v2587
        %2606 = vst [vmem:[%s323 + $0x67] sm:$0x1] %v2589
        %2607 = vst [vmem:[%s323 + $0x77] sm:$0x1] %v2591
        %v2608 = vpack.c.bf16 %v2541, %v2541
        %2609 = vmatprep.subr.bf16.mxu0 %v873
        %2610 = vmatpush1.bf16.msra.mxu0 %v872
        %2611 = vmatprep.subr.bf16.mxu0 %v875
        %2612 = vmatpush1.bf16.msra.mxu0 %v874
        %2613 = vmatprep.subr.bf16.mxu0 %v877
        %2614 = vmatpush1.bf16.msra.mxu0 %v876
        %2615 = vmatprep.subr.bf16.mxu0 %v879
        %2616 = vmatpush1.bf16.msra.mxu0 %v878
        %2617 = vmatprep.subr.bf16.mxu0 %v881
        %2618 = vmatpush1.bf16.msra.mxu0 %v880
        %2619 = vmatprep.subr.bf16.mxu0 %v883
        %2620 = vmatpush1.bf16.msra.mxu0 %v882
        %2621 = vmatprep.subr.bf16.mxu0 %v885
        %2622 = vmatpush1.bf16.msra.mxu0 %v884
        %2623 = vmatprep.subr.bf16.mxu0 %v887
        %2624 = vmatpush1.bf16.msra.mxu0 %v886
        %2625 = vmatprep.subr.bf16.mxu0 0
        %2626 = vmatpush1.bf16.msra.mxu0 0
        %2627 = vmatprep.subr.bf16.mxu0 0
        %2628 = vmatpush1.bf16.msra.mxu0 0
        %2629 = vmatprep.subr.bf16.mxu0 0
        %2630 = vmatpush1.bf16.msra.mxu0 0
        %2631 = vmatprep.subr.bf16.mxu0 0
        %2632 = vmatpush1.bf16.msra.mxu0 0
        %2633 = vmatprep.subr.bf16.mxu0 0
        %2634 = vmatpush1.bf16.msra.mxu0 0
        %2635 = vmatprep.subr.bf16.mxu0 0
        %2636 = vmatpush1.bf16.msra.mxu0 0
        %2637 = vmatprep.subr.bf16.mxu0 0
        %2638 = vmatpush1.bf16.msra.mxu0 0
        %2639 = vmatprep.subr.bf16.mxu0 0
        %2640 = vmatpush1.bf16.msra.mxu0 0
        %2641 = vmatprep.mubr.bf16.mxu0 0
        %2642 = vmatmul.mubr.bf16.gmra.mrb[0].mxu0 %v2608
        %v2643 = vpop.f32.mrb[0].mxu0
        %v2644 = vadd.f32 %v817, %v2643
        %v2645 = vpop.f32.mrb[0].mxu0
        %v2646 = vadd.f32 %v821, %v2645
        %v2647 = vpop.f32.mrb[0].mxu0
        %v2648 = vpop.f32.mrb[0].mxu0
        %2649 = vdwg.mxu0
        %v2650 = vtanh.pop %v2644
        %v2651 = vxor.u32 %v2646, 2147483648
        %v2652 = vmul.f32 %v2651, 1.442695
        %v2653 = vpow.pop %v2652
        %v2654 = vadd.f32 %v2653, 1.0
        %v2655 = vrcp.pop %v2654
        %v2656 = vmul.f32 1.0, %v2655
        %v2657 = vmul.f32 %v2650, %v2656
        %v2658 = vsub.f32 1.0, %v2656
        %v2659 = vmul.f32 %v2541, %v2658
        %v2660 = vadd.f32 %v2657, %v2659
        %v2662 = vcombine.high %v2660, %v2660
        %v2664 = vunpack.c.l.s4 1966171168
        %v2665 = vunpack.c.0.s8 %v2664
        %v2666 = vlaneseq
        %v2667 = vshrl.u32 %v2666, 7
        %v2668 = vsub.s32 %v2665, %v2667
        %v2669 = vrot.slane %v2660, %v2668
        %v2671 = vunpack.c.l.s4 1966171168
        %v2672 = vunpack.c.0.s8 %v2671
        %v2673 = vlaneseq
        %v2674 = vshrl.u32 %v2673, 7
        %v2675 = vsub.s32 %v2672, %v2674
        %v2676 = vrot.slane %v2662, %v2675
        %v2677 = vcombine.high %v2669, %v2669
        %v2678 = vcombine.high %v2676, %v2676
        %v2680 = vunpack.c.l.s4 1966171168
        %v2681 = vunpack.c.0.s8 %v2680
        %v2682 = vlaneseq
        %v2683 = vshrl.u32 %v2682, 7
        %v2684 = vsub.s32 %v2681, %v2683
        %v2685 = vrot.slane %v2669, %v2684
        %v2687 = vunpack.c.l.s4 1966171168
        %v2688 = vunpack.c.0.s8 %v2687
        %v2689 = vlaneseq
        %v2690 = vshrl.u32 %v2689, 7
        %v2691 = vsub.s32 %v2688, %v2690
        %v2692 = vrot.slane %v2676, %v2691
        %v2694 = vunpack.c.l.s4 1966171168
        %v2695 = vunpack.c.0.s8 %v2694
        %v2696 = vlaneseq
        %v2697 = vshrl.u32 %v2696, 7
        %v2698 = vsub.s32 %v2695, %v2697
        %v2699 = vrot.slane %v2677, %v2698
        %v2701 = vunpack.c.l.s4 1966171168
        %v2702 = vunpack.c.0.s8 %v2701
        %v2703 = vlaneseq
        %v2704 = vshrl.u32 %v2703, 7
        %v2705 = vsub.s32 %v2702, %v2704
        %v2706 = vrot.slane %v2678, %v2705
        %v2707 = vcombine.high %v2685, %v2685
        %v2708 = vcombine.high %v2692, %v2692
        %v2709 = vcombine.high %v2699, %v2699
        %v2710 = vcombine.high %v2706, %v2706
        %2719 = vst [vmem:[%s323 + $0xf] sm:$0x1] %v2685
        %2720 = vst [vmem:[%s323 + $0x1f] sm:$0x1] %v2699
        %2721 = vst [vmem:[%s323 + $0x2f] sm:$0x1] %v2707
        %2722 = vst [vmem:[%s323 + $0x3f] sm:$0x1] %v2709
        %2723 = vst [vmem:[%s323 + $0x4f] sm:$0x1] %v2692
        %2724 = vst [vmem:[%s323 + $0x5f] sm:$0x1] %v2706
        %2725 = vst [vmem:[%s323 + $0x6f] sm:$0x1] %v2708
        %2726 = vst [vmem:[%s323 + $0x7f] sm:$0x1] %v2710
        %2727 = vst [vmem:[#allocation2] sm:$0xff] %v2660
        %p2728 = scmp.eq.s32.totalorder %s29, 1
        // Predicated region
        $region53: #{recurrent_highway_text.1} parent=47 // pred_check
          %p2729 = pneg %p2728
        $region54: #{recurrent_highway_text.1} parent=47 // pred_check_branch
          %2731 = sbr.rel (%p2729) target = $region56
        $region55: #{recurrent_highway_text.1} parent=47 // pred_region
          %v2732 = vpack.c.bf16 %v2660, %v2660
          %v2733 = vld [vmem:[%s5] sm:$0xf]
          %v2734 = vld [vmem:[%s5 + $0x4] sm:$0xf]
          %v2735 = vld [vmem:[%s5 + $0x8] sm:$0xf]
          %v2736 = vld [vmem:[%s5 + $0xc] sm:$0xf]
          %v2737 = vld [vmem:[%s5 + $0x10] sm:$0xf]
          %v2738 = vld [vmem:[%s5 + $0x14] sm:$0xf]
          %v2739 = vld [vmem:[%s5 + $0x18] sm:$0xf]
          %v2740 = vld [vmem:[%s5 + $0x1c] sm:$0xf]
          %v2741 = vld [vmem:[%s5 + $0x20] sm:$0xf]
          %v2742 = vld [vmem:[%s5 + $0x24] sm:$0xf]
          %v2743 = vld [vmem:[%s5 + $0x28] sm:$0xf]
          %v2744 = vld [vmem:[%s5 + $0x2c] sm:$0xf]
          %v2745 = vld [vmem:[%s5 + $0x30] sm:$0xf]
          %v2746 = vld [vmem:[%s5 + $0x34] sm:$0xf]
          %v2747 = vld [vmem:[%s5 + $0x38] sm:$0xf]
          %v2748 = vld [vmem:[%s5 + $0x3c] sm:$0xf]
          %v2749 = vld [vmem:[%s6] sm:$0x1]
          %v2751 = vlaneseq
          %v2752 = vshrl.u32 %v2751, 7
          %v2753 = vsub.s32 0, %v2752
          %v2754 = vrot.slane %v2749, %v2753
          %v2772 = vunpack.c.l.b16 %v2733
          %v2773 = vunpack.c.l.b16 %v2734
          %v2774 = vunpack.c.l.b16 %v2735
          %v2775 = vunpack.c.l.b16 %v2736
          %v2776 = vunpack.c.l.b16 %v2737
          %v2777 = vunpack.c.l.b16 %v2738
          %v2778 = vunpack.c.l.b16 %v2739
          %v2779 = vunpack.c.l.b16 %v2740
          %v2780 = vunpack.c.l.b16 %v2741
          %v2781 = vunpack.c.l.b16 %v2742
          %v2782 = vunpack.c.l.b16 %v2743
          %v2783 = vunpack.c.l.b16 %v2744
          %v2784 = vunpack.c.l.b16 %v2745
          %v2785 = vunpack.c.l.b16 %v2746
          %v2786 = vunpack.c.l.b16 %v2747
          %v2787 = vunpack.c.l.b16 %v2748
          %v2788 = vpack.c.b16 %v2773, %v2772
          %v2789 = vpack.c.b16 %v2775, %v2774
          %v2790 = vpack.c.b16 %v2777, %v2776
          %v2791 = vpack.c.b16 %v2779, %v2778
          %v2792 = vpack.c.b16 %v2781, %v2780
          %v2793 = vpack.c.b16 %v2783, %v2782
          %v2794 = vpack.c.b16 %v2785, %v2784
          %v2795 = vpack.c.b16 %v2787, %v2786
          %2804 = vmatprep.subr.bf16.mxu0 0
          %2805 = vmatpush1.bf16.msra.mxu0 %v2788
          %2806 = vmatprep.subr.bf16.mxu0 0
          %2807 = vmatpush1.bf16.msra.mxu0 %v2789
          %2808 = vmatprep.subr.bf16.mxu0 0
          %2809 = vmatpush1.bf16.msra.mxu0 %v2790
          %2810 = vmatprep.subr.bf16.mxu0 0
          %2811 = vmatpush1.bf16.msra.mxu0 %v2791
          %2812 = vmatprep.subr.bf16.mxu0 0
          %2813 = vmatpush1.bf16.msra.mxu0 %v2792
          %2814 = vmatprep.subr.bf16.mxu0 0
          %2815 = vmatpush1.bf16.msra.mxu0 %v2793
          %2816 = vmatprep.subr.bf16.mxu0 0
          %2817 = vmatpush1.bf16.msra.mxu0 %v2794
          %2818 = vmatprep.subr.bf16.mxu0 0
          %2819 = vmatpush1.bf16.msra.mxu0 %v2795
          %2820 = vmatprep.subr.bf16.mxu0 0
          %2821 = vmatpush1.bf16.msra.mxu0 0
          %2822 = vmatprep.subr.bf16.mxu0 0
          %2823 = vmatpush1.bf16.msra.mxu0 0
          %2824 = vmatprep.subr.bf16.mxu0 0
          %2825 = vmatpush1.bf16.msra.mxu0 0
          %2826 = vmatprep.subr.bf16.mxu0 0
          %2827 = vmatpush1.bf16.msra.mxu0 0
          %2828 = vmatprep.subr.bf16.mxu0 0
          %2829 = vmatpush1.bf16.msra.mxu0 0
          %2830 = vmatprep.subr.bf16.mxu0 0
          %2831 = vmatpush1.bf16.msra.mxu0 0
          %2832 = vmatprep.subr.bf16.mxu0 0
          %2833 = vmatpush1.bf16.msra.mxu0 0
          %2834 = vmatprep.subr.bf16.mxu0 0
          %2835 = vmatpush1.bf16.msra.mxu0 0
          %2836 = vmatprep.mubr.bf16.mxu0 0
          %2837 = vmatmul.mubr.bf16.gmra.mrb[0].mxu0 %v2732
          %v2838 = vpop.f32.mrb[0].mxu0
          %v2839 = vadd.f32 %v2754, %v2838
          %v2840 = vpop.f32.mrb[0].mxu0
          %v2841 = vpop.f32.mrb[0].mxu0
          %v2842 = vpop.f32.mrb[0].mxu0
          %2843 = vdwg.mxu0
          %2844 = vst [vmem:[#allocation5] sm:$0xff] %v2839
        $region56: #{recurrent_highway_text.1} parent=47 // pred_fallthru
          _
        %s2845 = sand.u32 %s200, 1
        %s2846 = scalar_lea.sflag [#allocation4], %s2845
        %s2847 = sand.u32 %s200, 1
        %s2848 = smul.addr %s2847, 128
        %s2849 = scalar_lea.vmem [#allocation3], %s2848
        // Predicated region
        $region57: #{recurrent_highway_text.1} parent=47 // pred_check
          %p2850 = pneg %p210
        $region58: #{recurrent_highway_text.1} parent=47 // pred_check_branch
          %2852 = sbr.rel (%p2850) target = $region60
        $region59: #{recurrent_highway_text.1} parent=47 // pred_region
          %s2853 = smul.u32 8, %s28
          %s2855 = ssub.s32 2048, 2048
          %2856 = vsyncadd %s2846, %s2855
          %s2857 = smul.addr %s29, 2
          %s2858 = smul.addr %s2853, 4
          %s2859 = sadd.s32 %s2857, %s2858
          %s2860 = smul.addr %s2859, 128
          %s2861 = scalar_lea.hbm %s7, %s2860
          %s2862 = sshll.u32 %s2849, 4
          %s2863 = int_to_ptr.vmem [resolvable:$true] %s2862
          %2868 = dma.vmem_to_hbm [thread:$0]  %s2863, 2048, %s2861, %s2846, 256, 512, 16
        $region60: #{recurrent_highway_text.1} parent=47 // pred_fallthru
          _
        // Predicated region
        $region61: #{recurrent_highway_text.1} parent=47 // pred_check
          %p2869 = pneg %p236
        $region62: #{recurrent_highway_text.1} parent=47 // pred_check_branch
          %2871 = sbr.rel (%p2869) target = $region64
        $region63: #{recurrent_highway_text.1} parent=47 // pred_region
          %s2873 = ssub.s32 128, 128
          %2874 = vsyncadd [#allocation6], %s2873
          %s2875 = smul.addr %s28, 128
          %s2876 = scalar_lea.hbm %s8, %s2875
          %s2878 = sshll.u32 [#allocation5], 4
          %s2879 = int_to_ptr.vmem [resolvable:$true] %s2878
          %2881 = dma.vmem_to_hbm [thread:$0]  %s2879, 128, %s2876, [#allocation6]
        $region64: #{recurrent_highway_text.1} parent=47 // pred_fallthru
          _
        // Predicated region
        $region65: #{recurrent_highway_text.1} parent=47 // pred_check
          %p2882 = pneg %p236
        $region66: #{recurrent_highway_text.1} parent=47 // pred_check_branch
          %2884 = sbr.rel (%p2882) target = $region68
        $region67: #{recurrent_highway_text.1} parent=47 // pred_region
          %2885 = dma.done [#allocation6], 128
        $region68: #{recurrent_highway_text.1} parent=47 // pred_fallthru
          _
      $region48: #{recurrent_highway_text.1} parent=5 // pred_fallthru
        _
      %p2886 = scmp.le.s32.totalorder 2, %s19
      // Predicated region
      $region69: #{recurrent_highway_text.1} parent=5 // pred_check
        %p2887 = pneg %p2886
      $region70: #{recurrent_highway_text.1} parent=5 // pred_check_branch
        %2889 = sbr.rel (%p2887) target = $region72
      $region71: #{recurrent_highway_text.1} parent=5 // pred_region
        %s2890 = ssub.s32 %s19, 2
        // Predicated region
        $region73: #{recurrent_highway_text.1} parent=71 // pred_check
          %p2891 = pneg %p216
        $region74: #{recurrent_highway_text.1} parent=71 // pred_check_branch
          %2893 = sbr.rel (%p2891) target = $region76
        $region75: #{recurrent_highway_text.1} parent=71 // pred_region
          %s2894 = sand.u32 %s201, 1
          %s2895 = scalar_lea.sflag [#allocation4], %s2894
          %s2896 = sand.u32 %s201, 1
          %s2897 = smul.addr %s2896, 128
          %s2898 = scalar_lea.vmem [#allocation3], %s2897
          %2899 = dma.done %s2895, 2048
        $region76: #{recurrent_highway_text.1} parent=71 // pred_fallthru
          _
      $region72: #{recurrent_highway_text.1} parent=5 // pred_fallthru
        _
    $region6: #{recurrent_highway_text.1} parent=1 // loop_footer
      %s23 = sadd.s32 1, %s19
    $region7: #{recurrent_highway_text.1} parent=1 // loop_footer_branch
      %18 = sbr.rel target = $region3
    $region8: #{recurrent_highway_text.1} parent=1 // loop_exit
      _
    %2900 = vsyncpa [#allocation4], 1
    %s2901 = scalar_lea.sflag [#allocation4], 1
    %2902 = vsyncpa %s2901, 1
    %2903 = vsyncpa [#allocation6], 1

</llo_original>
